<compile_context>
chip_gen: v6e
topology: v6e:2x2x1
jax: 0.10.0
libtpu: 0.0.40
codegen_flags: <defaults>
</compile_context>

<pallas_src>
import jax
import jax.numpy as jnp
import numpy as np
from jax.experimental import pallas as pl
from jax.experimental.pallas import tpu as pltpu

LEAKY_SLOPE = 0.01  # PyTorch nn.LeakyReLU default
BN_EPS = 1e-5


def _leaky(x):
    return jnp.where(x > 0, x, LEAKY_SLOPE * x)


# -----------------------------------------------------------------------------
# Fused Pallas kernel: fc0 branch, LSTM recurrence + head, final MLP, with
# manual (overlapped) DMA of the late-use weights.
# -----------------------------------------------------------------------------
def fclstm_kernel(
    x_ref,                                 # (B, seq_len, F+1) f32   [VMEM]
    fc0_w_ref, fc0_b_ref,                  # (F+1, E) folded+padded, (1, E)
    wih_ref, blstm_ref,                    # (F+1, 4H) bf16 (padded/reordered/prescaled), (1, 4H) f32
    whh_hbm,                               # (H, 4H) bf16            [HBM, manual DMA]
    lfc_w_hbm, lfc_b_ref,                  # (H, S) [HBM], (1, S)
    fc1a_hbm, fc1b_hbm, fc1_b_ref,         # (E, HD) [HBM], (S, HD) [HBM], (1, HD)
    fc2_w_ref, fc2_b_ref,                  # (1, HD), (1, 1)
    out_ref,                               # (B, 1)
    whh_buf, lfc_buf, fc1a_buf, fc1b_buf,  # VMEM scratch
    dma_sem,                               # DMA semaphores, shape (4,)
):
    B = x_ref.shape[0]
    T = x_ref.shape[1] - 1                 # LSTM sequence length = seq_len - 1
    H = whh_buf.shape[0]                   # lstm hidden

    # ---- kick off weight DMAs; hidden behind fc0 + the hoisted gates_x matmul ----
    cp_whh = pltpu.make_async_copy(whh_hbm, whh_buf, dma_sem.at[0]); cp_whh.start()
    cp_lfc = pltpu.make_async_copy(lfc_w_hbm, lfc_buf, dma_sem.at[1]); cp_lfc.start()
    cp_f1a = pltpu.make_async_copy(fc1a_hbm, fc1a_buf, dma_sem.at[2]); cp_f1a.start()
    cp_f1b = pltpu.make_async_copy(fc1b_hbm, fc1b_buf, dma_sem.at[3]); cp_f1b.start()

    xv = x_ref[...]                        # tiny: (B, seq_len, F+1)

    # ---- fc0 branch: column drop (x[:, -1, :-2]) folded into zero weight rows ----
    z0 = _leaky(
        jnp.dot(xv[:, T, :], fc0_w_ref[...], preferred_element_type=jnp.float32)
        + fc0_b_ref[...]
    )                                      # (B, E)

    # ---- seq input, t-major (T*B, F+1); feature drop folded into wih zero row ----
    seq2d = jnp.concatenate([xv[:, t, :] for t in range(T)], axis=0)

    # ---- hoisted input projection: one matmul off the serial critical path ----
    gates_x = (
        jnp.dot(seq2d.astype(jnp.bfloat16), wih_ref[...],
                preferred_element_type=jnp.float32)
        + blstm_ref[...]
    )                                      # (T*B, 4H), columns [i|f|o|g], i/f/o * 0.5

    # ---- LSTM recurrence, fully unrolled; h/c carried as values (vregs) ----
    cp_whh.wait()
    h = jnp.zeros((B, H), jnp.float32)
    c = jnp.zeros((B, H), jnp.float32)
    for t in range(T):
        gates = gates_x[t * B:(t + 1) * B, :] + jnp.dot(
            h.astype(jnp.bfloat16), whh_buf[...],
            preferred_element_type=jnp.float32)
        tg = jnp.tanh(gates)                       # single EUP pass over (B, 4H)
        sg = 0.5 * tg[:, 0:3 * H] + 0.5            # sigmoid via tanh identity (VPU)
        i_g = sg[:, 0:H]
        f_g = sg[:, H:2 * H]
        o_g = sg[:, 2 * H:3 * H]
        g_g = tg[:, 3 * H:4 * H]
        c = f_g * c + i_g * g_g
        h = o_g * jnp.tanh(c)

    # ---- LSTM_FEAT head: Linear(H -> S) + BN(eval, folded) + LeakyReLU ----
    cp_lfc.wait()
    seq_feat = _leaky(
        jnp.dot(h, lfc_buf[...], preferred_element_type=jnp.float32)
        + lfc_b_ref[...]
    )                                      # (B, S)

    # ---- final head: concat(z0, seq_feat) @ W1 == z0 @ W1a + seq_feat @ W1b ----
    cp_f1a.wait()
    cp_f1b.wait()
    z1 = _leaky(
        jnp.dot(z0, fc1a_buf[...], preferred_element_type=jnp.float32)
        + jnp.dot(seq_feat, fc1b_buf[...], preferred_element_type=jnp.float32)
        + fc1_b_ref[...]
    )                                      # (B, HD)

    # ---- Linear(HD -> 1) + Sigmoid as VPU mul + lane reduction (skip N=1 MXU) ----
    z2 = jnp.sum(z1 * fc2_w_ref[...], axis=-1, keepdims=True) + fc2_b_ref[...]
    out_ref[...] = jax.nn.sigmoid(z2)


# -----------------------------------------------------------------------------
# One-time parameter prep: fold eval-BN, fold column-drops into zero weight
# rows, reorder + prescale LSTM gate columns, cast recurrent weights to bf16.
# -----------------------------------------------------------------------------
def prepare_params(p, feature_num, lstm_hidden):
    F, H = feature_num, lstm_hidden
    fp = {}

    # fc0: fold BN; append 2 zero rows for the dropped x columns (F-1, F).
    fc0_w = p["fc0_w"] * p["fc0_sc"]
    fp["fc0_w"] = jnp.concatenate(
        [fc0_w, jnp.zeros((2, fc0_w.shape[1]), fc0_w.dtype)], axis=0)      # (F+1, E)
    fp["fc0_b"] = p["fc0_b"] * p["fc0_sc"] + p["fc0_sh"]

    # LSTM: pad W_ih to (F+1, 4H) — zero row at index F-1 (dropped x column),
    # original last-feature row moves to row F (x column F). Then reorder gate
    # columns [i|f|g|o] -> [i|f|o|g] and prescale i/f/o by 0.5 (tanh-identity
    # sigmoid). Recurrent matrices cast to bf16 (f32 accumulation on MXU).
    def reorder(w):
        return jnp.concatenate([w[:, :2 * H], w[:, 3 * H:4 * H], w[:, 2 * H:3 * H]], axis=1)

    def prescale_ifo(w):
        return jnp.concatenate([0.5 * w[:, :3 * H], w[:, 3 * H:]], axis=1)

    wih = p["wih"]
    wih_pad = jnp.concatenate(
        [wih[:F - 1], jnp.zeros((1, 4 * H), wih.dtype), wih[F - 1:]], axis=0)  # (F+1, 4H)
    fp["wih"] = prescale_ifo(reorder(wih_pad)).astype(jnp.bfloat16)
    fp["whh"] = prescale_ifo(reorder(p["whh"])).astype(jnp.bfloat16)
    fp["blstm"] = prescale_ifo(reorder(p["blstm"]))

    # LSTM_FEAT head + final MLP: fold eval-BN; fc2 weight as a (1, HD) row.
    fp["lfc_w"] = p["lfc_w"] * p["lfc_sc"]
    fp["lfc_b"] = p["lfc_b"] * p["lfc_sc"] + p["lfc_sh"]
    fp["fc1a_w"] = p["fc1a_w"] * p["fc1_sc"]
    fp["fc1b_w"] = p["fc1b_w"] * p["fc1_sc"]
    fp["fc1_b"] = p["fc1_b"] * p["fc1_sc"] + p["fc1_sh"]
    fp["fc2_w"] = p["fc2_w"].T
    fp["fc2_b"] = p["fc2_b"]
    return fp


# -----------------------------------------------------------------------------
# JAX wrapper: single grid-less pallas_call, no pre-kernel slicing/transposes.
# -----------------------------------------------------------------------------
def fclstm_forward(x, fp):
    B, seq_len, Fp1 = x.shape
    T = seq_len - 1
    H = fp["whh"].shape[0]
    S = fp["lfc_w"].shape[1]
    E = fp["fc1a_w"].shape[0]
    HD = fp["fc1a_w"].shape[1]

    inputs = (
        x,
        fp["fc0_w"], fp["fc0_b"],
        fp["wih"], fp["blstm"],
        fp["whh"],
        fp["lfc_w"], fp["lfc_b"],
        fp["fc1a_w"], fp["fc1b_w"], fp["fc1_b"],
        fp["fc2_w"], fp["fc2_b"],
    )
    vmem = pl.BlockSpec(memory_space=pltpu.MemorySpace.VMEM)
    hbm = pl.BlockSpec(memory_space=pl.ANY)      # manual, overlapped DMA in-kernel
    in_specs = [
        vmem,                 # x
        vmem, vmem,           # fc0_w, fc0_b
        vmem, vmem,           # wih, blstm
        hbm,                  # whh
        hbm, vmem,            # lfc_w, lfc_b
        hbm, hbm, vmem,       # fc1a_w, fc1b_w, fc1_b
        vmem, vmem,           # fc2_w, fc2_b
    ]

    flops = 2 * (
        T * B * Fp1 * 4 * H        # hoisted input projection
        + T * B * H * 4 * H        # recurrence
        + B * Fp1 * E              # fc0
        + B * H * S                # LSTM head
        + B * (E + S) * HD         # fc1
        + B * HD                   # fc2
    )
    transcendentals = T * B * 5 * H + B
    bytes_accessed = sum(int(np.prod(a.shape)) * a.dtype.itemsize for a in inputs) + B * 4

    return pl.pallas_call(
        fclstm_kernel,
        out_shape=jax.ShapeDtypeStruct((B, 1), jnp.float32),
        in_specs=in_specs,
        out_specs=vmem,
        scratch_shapes=[
            pltpu.VMEM((H, 4 * H), jnp.bfloat16),   # whh buffer
            pltpu.VMEM((H, S), jnp.float32),        # lfc_w buffer
            pltpu.VMEM((E, HD), jnp.float32),       # fc1a_w buffer
            pltpu.VMEM((S, HD), jnp.float32),       # fc1b_w buffer
            pltpu.SemaphoreType.DMA((4,)),
        ],
        cost_estimate=pl.CostEstimate(
            flops=flops, transcendentals=transcendentals,
            bytes_accessed=bytes_accessed),
    )(*inputs)


# -----------------------------------------------------------------------------
# Deterministic parameter initialization (raw BN stats; folded only for kernel).
# -----------------------------------------------------------------------------
def _fold_bn(gamma, beta, mean, var):
    sc = gamma / jnp.sqrt(var + BN_EPS)
    sh = beta - mean * sc
    return sc, sh


def init_params(key, feature_num, lstm_hidden, seq_feature_num,
                info_enhance_size, hidden_size):
    F, H, S, E, HD = feature_num, lstm_hidden, seq_feature_num, info_enhance_size, hidden_size
    ks = jax.random.split(key, 32)
    ki = iter(ks)

    def w(shape, scale=0.1):
        return scale * jax.random.normal(next(ki), shape, jnp.float32)

    def bn(n):
        gamma = 1.0 + 0.1 * jax.random.normal(next(ki), (1, n), jnp.float32)
        beta = 0.05 * jax.random.normal(next(ki), (1, n), jnp.float32)
        mean = 0.05 * jax.random.normal(next(ki), (1, n), jnp.float32)
        var = 1.0 + 0.1 * jnp.abs(jax.random.normal(next(ki), (1, n), jnp.float32))
        return _fold_bn(gamma, beta, mean, var)

    p = {}
    p["fc0_w"], p["fc0_b"] = w((F - 1, E)), w((1, E))
    p["fc0_sc"], p["fc0_sh"] = bn(E)
    p["wih"], p["whh"], p["blstm"] = w((F, 4 * H)), w((H, 4 * H)), w((1, 4 * H))
    p["lfc_w"], p["lfc_b"] = w((H, S)), w((1, S))
    p["lfc_sc"], p["lfc_sh"] = bn(S)
    p["fc1a_w"], p["fc1b_w"], p["fc1_b"] = w((E, HD)), w((S, HD)), w((1, HD))
    p["fc1_sc"], p["fc1_sh"] = bn(HD)
    p["fc2_w"], p["fc2_b"] = w((HD, 1)), w((1, 1))
    return p


# -----------------------------------------------------------------------------
# Pure-JAX reference (f32 everywhere, unfolded BN, PyTorch gate order i,f,g,o).
# -----------------------------------------------------------------------------
def reference_forward(x, p, lstm_hidden):
    H = lstm_hidden
    pre = x[:, -1, :-2]
    z0 = _leaky((pre @ p["fc0_w"] + p["fc0_b"]) * p["fc0_sc"] + p["fc0_sh"])

    seq = jnp.concatenate([x[:, :-1, :-2], x[:, :-1, -1:]], axis=2)
    B, T, _ = seq.shape
    h = jnp.zeros((B, H), jnp.float32)
    c = jnp.zeros((B, H), jnp.float32)
    for t in range(T):
        gates = seq[:, t] @ p["wih"] + h @ p["whh"] + p["blstm"]
        i_g = jax.nn.sigmoid(gates[:, 0:H])
        f_g = jax.nn.sigmoid(gates[:, H:2 * H])
        g_g = jnp.tanh(gates[:, 2 * H:3 * H])
        o_g = jax.nn.sigmoid(gates[:, 3 * H:4 * H])
        c = f_g * c + i_g * g_g
        h = o_g * jnp.tanh(c)

    seq_feat = _leaky((h @ p["lfc_w"] + p["lfc_b"]) * p["lfc_sc"] + p["lfc_sh"])
    z1 = z0 @ p["fc1a_w"] + seq_feat @ p["fc1b_w"] + p["fc1_b"]
    z1 = _leaky(z1 * p["fc1_sc"] + p["fc1_sh"])
    z2 = z1 @ p["fc2_w"] + p["fc2_b"]
    return jax.nn.sigmoid(z2)


if __name__ == "__main__":
    # x is (B, seq_len, feature_num + 1); small shapes consistent with the module.
    B, seq_len, feature_num = 8, 6, 8
    lstm_hidden = 256        # LSTM_FEAT hidden (512 in module defaults; small here)
    seq_feature_num = 128
    info_enhance_size = 256  # 512 default; small here
    hidden_size = 128

    key = jax.random.PRNGKey(0)
    kx, kp = jax.random.split(key)
    x = jax.random.normal(kx, (B, seq_len, feature_num + 1), jnp.float32)
    params = init_params(kp, feature_num, lstm_hidden, seq_feature_num,
                         info_enhance_size, hidden_size)
    # One-time: fold BN, fold column-drops into zero rows, reorder/prescale
    # gate columns, bf16 recurrent weights.
    fused_params = prepare_params(params, feature_num, lstm_hidden)

    out = fclstm_forward(x, fused_params)
    out = jax.block_until_ready(out)

    ref = reference_forward(x, params, lstm_hidden)
    assert out.shape == (B, 1)
    # bf16 recurrent weights / per-step bf16 h cast -> loosened tolerance
    # (validated: gate reorder, tanh-identity sigmoid and zero-row padding are
    # algebraically exact transforms applied at prepare time).
    np.testing.assert_allclose(np.asarray(out), np.asarray(ref), rtol=2e-2, atol=2e-2)
    print("KERNEL_OK")
</pallas_src>

<mosaic_0001>
module attributes {stable_mosaic.version = 11 : i64} {
  func.func @fclstm_kernel(%arg0: memref<8x6x9xf32, #tpu.memory_space<vmem>>, %arg1: memref<9x256xf32, #tpu.memory_space<vmem>>, %arg2: memref<1x256xf32, #tpu.memory_space<vmem>>, %arg3: memref<9x1024xbf16, #tpu.memory_space<vmem>>, %arg4: memref<1x1024xf32, #tpu.memory_space<vmem>>, %arg5: memref<256x1024xbf16, #tpu.memory_space<any>>, %arg6: memref<256x128xf32, #tpu.memory_space<any>>, %arg7: memref<1x128xf32, #tpu.memory_space<vmem>>, %arg8: memref<256x128xf32, #tpu.memory_space<any>>, %arg9: memref<128x128xf32, #tpu.memory_space<any>>, %arg10: memref<1x128xf32, #tpu.memory_space<vmem>>, %arg11: memref<1x128xf32, #tpu.memory_space<vmem>>, %arg12: memref<1x1xf32, #tpu.memory_space<vmem>>, %arg13: memref<8x1xf32, #tpu.memory_space<vmem>>, %arg14: memref<256x1024xbf16, #tpu.memory_space<vmem>>, %arg15: memref<256x128xf32, #tpu.memory_space<vmem>>, %arg16: memref<256x128xf32, #tpu.memory_space<vmem>>, %arg17: memref<128x128xf32, #tpu.memory_space<vmem>>, %arg18: memref<4x!tpu.dma_semaphore, #tpu.memory_space<semaphore_mem>>) attributes {dimension_semantics = [], scalar_prefetch = 0 : i64, scratch_operands = 5 : i64, tpu.core_type = #tpu.core_type<tc>} {
    %c0_i32 = arith.constant 0 : i32
    %0 = tpu.memref_slice %arg18[%c0_i32] : memref<4x!tpu.dma_semaphore, #tpu.memory_space<semaphore_mem>> -> memref<1x!tpu.dma_semaphore, #tpu.memory_space<semaphore_mem>>
    %1 = tpu.memref_squeeze %0 : memref<1x!tpu.dma_semaphore, #tpu.memory_space<semaphore_mem>> -> memref<!tpu.dma_semaphore, #tpu.memory_space<semaphore_mem>>
    tpu.enqueue_dma source(%arg5 : memref<256x1024xbf16, #tpu.memory_space<any>>) target(%arg14 : memref<256x1024xbf16, #tpu.memory_space<vmem>>) target_semaphore(%1 : memref<!tpu.dma_semaphore, #tpu.memory_space<semaphore_mem>>)
    %c1_i32 = arith.constant 1 : i32
    %2 = tpu.memref_slice %arg18[%c1_i32] : memref<4x!tpu.dma_semaphore, #tpu.memory_space<semaphore_mem>> -> memref<1x!tpu.dma_semaphore, #tpu.memory_space<semaphore_mem>>
    %3 = tpu.memref_squeeze %2 : memref<1x!tpu.dma_semaphore, #tpu.memory_space<semaphore_mem>> -> memref<!tpu.dma_semaphore, #tpu.memory_space<semaphore_mem>>
    tpu.enqueue_dma source(%arg6 : memref<256x128xf32, #tpu.memory_space<any>>) target(%arg15 : memref<256x128xf32, #tpu.memory_space<vmem>>) target_semaphore(%3 : memref<!tpu.dma_semaphore, #tpu.memory_space<semaphore_mem>>)
    %c2_i32 = arith.constant 2 : i32
    %4 = tpu.memref_slice %arg18[%c2_i32] : memref<4x!tpu.dma_semaphore, #tpu.memory_space<semaphore_mem>> -> memref<1x!tpu.dma_semaphore, #tpu.memory_space<semaphore_mem>>
    %5 = tpu.memref_squeeze %4 : memref<1x!tpu.dma_semaphore, #tpu.memory_space<semaphore_mem>> -> memref<!tpu.dma_semaphore, #tpu.memory_space<semaphore_mem>>
    tpu.enqueue_dma source(%arg8 : memref<256x128xf32, #tpu.memory_space<any>>) target(%arg16 : memref<256x128xf32, #tpu.memory_space<vmem>>) target_semaphore(%5 : memref<!tpu.dma_semaphore, #tpu.memory_space<semaphore_mem>>)
    %c3_i32 = arith.constant 3 : i32
    %6 = tpu.memref_slice %arg18[%c3_i32] : memref<4x!tpu.dma_semaphore, #tpu.memory_space<semaphore_mem>> -> memref<1x!tpu.dma_semaphore, #tpu.memory_space<semaphore_mem>>
    %7 = tpu.memref_squeeze %6 : memref<1x!tpu.dma_semaphore, #tpu.memory_space<semaphore_mem>> -> memref<!tpu.dma_semaphore, #tpu.memory_space<semaphore_mem>>
    tpu.enqueue_dma source(%arg9 : memref<128x128xf32, #tpu.memory_space<any>>) target(%arg17 : memref<128x128xf32, #tpu.memory_space<vmem>>) target_semaphore(%7 : memref<!tpu.dma_semaphore, #tpu.memory_space<semaphore_mem>>)
    %c0 = arith.constant 0 : index
    %c0_0 = arith.constant 0 : index
    %c0_1 = arith.constant 0 : index
    %8 = vector.load %arg0[%c0, %c0_0, %c0_1] : memref<8x6x9xf32, #tpu.memory_space<vmem>>, vector<8x6x9xf32>
    %9 = vector.extract_strided_slice %8 {offsets = [0, 5, 0], sizes = [8, 1, 9], strides = [1, 1, 1]} : vector<8x6x9xf32> to vector<8x1x9xf32>
    %10 = vector.shape_cast %9 : vector<8x1x9xf32> to vector<8x9xf32>
    %c0_2 = arith.constant 0 : index
    %c0_3 = arith.constant 0 : index
    %11 = vector.load %arg1[%c0_2, %c0_3] : memref<9x256xf32, #tpu.memory_space<vmem>>, vector<9x256xf32>
    %cst = arith.constant dense<0.000000e+00> : vector<8x256xf32>
    %12 = tpu.matmul %10, %11, %cst {dimension_numbers = #tpu.dot_dimension_numbers<[1], [0], [0], [1], [0, 0, 1, 1], [], []>} : vector<8x9xf32>, vector<9x256xf32>, vector<8x256xf32> -> vector<8x256xf32>
    %c0_4 = arith.constant 0 : index
    %c0_5 = arith.constant 0 : index
    %13 = vector.load %arg2[%c0_4, %c0_5] : memref<1x256xf32, #tpu.memory_space<vmem>>, vector<1x256xf32>
    %14 = vector.broadcast %13 : vector<1x256xf32> to vector<8x256xf32>
    %15 = arith.addf %12, %14 : vector<8x256xf32>
    %cst_6 = arith.constant 0.000000e+00 : f32
    %16 = vector.broadcast %cst_6 : f32 to vector<8x256xf32>
    %17 = arith.cmpf ogt, %15, %16 : vector<8x256xf32>
    %cst_7 = arith.constant 0.00999999977 : f32
    %18 = vector.broadcast %cst_7 : f32 to vector<8x256xf32>
    %19 = arith.mulf %18, %15 : vector<8x256xf32>
    %20 = arith.select %17, %15, %19 : vector<8x256xi1>, vector<8x256xf32>
    %21 = vector.extract_strided_slice %8 {offsets = [0, 0, 0], sizes = [8, 1, 9], strides = [1, 1, 1]} : vector<8x6x9xf32> to vector<8x1x9xf32>
    %22 = vector.shape_cast %21 : vector<8x1x9xf32> to vector<8x9xf32>
    %23 = vector.extract_strided_slice %8 {offsets = [0, 1, 0], sizes = [8, 1, 9], strides = [1, 1, 1]} : vector<8x6x9xf32> to vector<8x1x9xf32>
    %24 = vector.shape_cast %23 : vector<8x1x9xf32> to vector<8x9xf32>
    %25 = vector.extract_strided_slice %8 {offsets = [0, 2, 0], sizes = [8, 1, 9], strides = [1, 1, 1]} : vector<8x6x9xf32> to vector<8x1x9xf32>
    %26 = vector.shape_cast %25 : vector<8x1x9xf32> to vector<8x9xf32>
    %27 = vector.extract_strided_slice %8 {offsets = [0, 3, 0], sizes = [8, 1, 9], strides = [1, 1, 1]} : vector<8x6x9xf32> to vector<8x1x9xf32>
    %28 = vector.shape_cast %27 : vector<8x1x9xf32> to vector<8x9xf32>
    %29 = vector.extract_strided_slice %8 {offsets = [0, 4, 0], sizes = [8, 1, 9], strides = [1, 1, 1]} : vector<8x6x9xf32> to vector<8x1x9xf32>
    %30 = vector.shape_cast %29 : vector<8x1x9xf32> to vector<8x9xf32>
    %31 = tpu.concatenate %22, %24, %26, %28, %30 in 0 : vector<8x9xf32>, vector<8x9xf32>, vector<8x9xf32>, vector<8x9xf32>, vector<8x9xf32> -> vector<40x9xf32>
    %32 = arith.truncf %31 : vector<40x9xf32> to vector<40x9xbf16>
    %c0_8 = arith.constant 0 : index
    %c0_9 = arith.constant 0 : index
    %33 = vector.load %arg3[%c0_8, %c0_9] : memref<9x1024xbf16, #tpu.memory_space<vmem>>, vector<9x1024xbf16>
    %cst_10 = arith.constant dense<0.000000e+00> : vector<40x1024xf32>
    %34 = tpu.matmul %32, %33, %cst_10 {dimension_numbers = #tpu.dot_dimension_numbers<[1], [0], [0], [1], [0, 0, 1, 1], [], []>} : vector<40x9xbf16>, vector<9x1024xbf16>, vector<40x1024xf32> -> vector<40x1024xf32>
    %c0_11 = arith.constant 0 : index
    %c0_12 = arith.constant 0 : index
    %35 = vector.load %arg4[%c0_11, %c0_12] : memref<1x1024xf32, #tpu.memory_space<vmem>>, vector<1x1024xf32>
    %36 = vector.broadcast %35 : vector<1x1024xf32> to vector<40x1024xf32>
    %37 = arith.addf %34, %36 : vector<40x1024xf32>
    %c0_i32_13 = arith.constant 0 : i32
    %38 = tpu.memref_slice %arg18[%c0_i32_13] : memref<4x!tpu.dma_semaphore, #tpu.memory_space<semaphore_mem>> -> memref<1x!tpu.dma_semaphore, #tpu.memory_space<semaphore_mem>>
    %39 = tpu.memref_squeeze %38 : memref<1x!tpu.dma_semaphore, #tpu.memory_space<semaphore_mem>> -> memref<!tpu.dma_semaphore, #tpu.memory_space<semaphore_mem>>
    tpu.wait_dma2 semaphore(%39 : memref<!tpu.dma_semaphore, #tpu.memory_space<semaphore_mem>>) src(%arg5 : memref<256x1024xbf16, #tpu.memory_space<any>>) dst(%arg14 : memref<256x1024xbf16, #tpu.memory_space<vmem>>)
    %cst_14 = arith.constant 0.000000e+00 : f32
    %40 = vector.broadcast %cst_14 : f32 to vector<8x256xf32>
    %cst_15 = arith.constant 0.000000e+00 : f32
    %41 = vector.broadcast %cst_15 : f32 to vector<8x256xf32>
    %42 = vector.extract_strided_slice %37 {offsets = [0, 0], sizes = [8, 1024], strides = [1, 1]} : vector<40x1024xf32> to vector<8x1024xf32>
    %43 = arith.truncf %40 : vector<8x256xf32> to vector<8x256xbf16>
    %c0_16 = arith.constant 0 : index
    %c0_17 = arith.constant 0 : index
    %44 = vector.load %arg14[%c0_16, %c0_17] : memref<256x1024xbf16, #tpu.memory_space<vmem>>, vector<256x1024xbf16>
    %cst_18 = arith.constant dense<0.000000e+00> : vector<8x1024xf32>
    %45 = tpu.matmul %43, %44, %cst_18 {dimension_numbers = #tpu.dot_dimension_numbers<[1], [0], [0], [1], [0, 0, 1, 1], [], []>} : vector<8x256xbf16>, vector<256x1024xbf16>, vector<8x1024xf32> -> vector<8x1024xf32>
    %46 = arith.addf %42, %45 : vector<8x1024xf32>
    %47 = math.tanh %46 : vector<8x1024xf32>
    %48 = vector.extract_strided_slice %47 {offsets = [0, 0], sizes = [8, 768], strides = [1, 1]} : vector<8x1024xf32> to vector<8x768xf32>
    %cst_19 = arith.constant 5.000000e-01 : f32
    %49 = vector.broadcast %cst_19 : f32 to vector<8x768xf32>
    %50 = arith.mulf %49, %48 : vector<8x768xf32>
    %cst_20 = arith.constant 5.000000e-01 : f32
    %51 = vector.broadcast %cst_20 : f32 to vector<8x768xf32>
    %52 = arith.addf %50, %51 : vector<8x768xf32>
    %53 = vector.extract_strided_slice %52 {offsets = [0, 0], sizes = [8, 256], strides = [1, 1]} : vector<8x768xf32> to vector<8x256xf32>
    %54 = vector.extract_strided_slice %52 {offsets = [0, 256], sizes = [8, 256], strides = [1, 1]} : vector<8x768xf32> to vector<8x256xf32>
    %55 = vector.extract_strided_slice %52 {offsets = [0, 512], sizes = [8, 256], strides = [1, 1]} : vector<8x768xf32> to vector<8x256xf32>
    %56 = vector.extract_strided_slice %47 {offsets = [0, 768], sizes = [8, 256], strides = [1, 1]} : vector<8x1024xf32> to vector<8x256xf32>
    %57 = arith.mulf %54, %41 : vector<8x256xf32>
    %58 = arith.mulf %53, %56 : vector<8x256xf32>
    %59 = arith.addf %57, %58 : vector<8x256xf32>
    %60 = math.tanh %59 : vector<8x256xf32>
    %61 = arith.mulf %55, %60 : vector<8x256xf32>
    %62 = vector.extract_strided_slice %37 {offsets = [8, 0], sizes = [8, 1024], strides = [1, 1]} : vector<40x1024xf32> to vector<8x1024xf32>
    %63 = arith.truncf %61 : vector<8x256xf32> to vector<8x256xbf16>
    %c0_21 = arith.constant 0 : index
    %c0_22 = arith.constant 0 : index
    %64 = vector.load %arg14[%c0_21, %c0_22] : memref<256x1024xbf16, #tpu.memory_space<vmem>>, vector<256x1024xbf16>
    %cst_23 = arith.constant dense<0.000000e+00> : vector<8x1024xf32>
    %65 = tpu.matmul %63, %64, %cst_23 {dimension_numbers = #tpu.dot_dimension_numbers<[1], [0], [0], [1], [0, 0, 1, 1], [], []>} : vector<8x256xbf16>, vector<256x1024xbf16>, vector<8x1024xf32> -> vector<8x1024xf32>
    %66 = arith.addf %62, %65 : vector<8x1024xf32>
    %67 = math.tanh %66 : vector<8x1024xf32>
    %68 = vector.extract_strided_slice %67 {offsets = [0, 0], sizes = [8, 768], strides = [1, 1]} : vector<8x1024xf32> to vector<8x768xf32>
    %cst_24 = arith.constant 5.000000e-01 : f32
    %69 = vector.broadcast %cst_24 : f32 to vector<8x768xf32>
    %70 = arith.mulf %69, %68 : vector<8x768xf32>
    %cst_25 = arith.constant 5.000000e-01 : f32
    %71 = vector.broadcast %cst_25 : f32 to vector<8x768xf32>
    %72 = arith.addf %70, %71 : vector<8x768xf32>
    %73 = vector.extract_strided_slice %72 {offsets = [0, 0], sizes = [8, 256], strides = [1, 1]} : vector<8x768xf32> to vector<8x256xf32>
    %74 = vector.extract_strided_slice %72 {offsets = [0, 256], sizes = [8, 256], strides = [1, 1]} : vector<8x768xf32> to vector<8x256xf32>
    %75 = vector.extract_strided_slice %72 {offsets = [0, 512], sizes = [8, 256], strides = [1, 1]} : vector<8x768xf32> to vector<8x256xf32>
    %76 = vector.extract_strided_slice %67 {offsets = [0, 768], sizes = [8, 256], strides = [1, 1]} : vector<8x1024xf32> to vector<8x256xf32>
    %77 = arith.mulf %74, %59 : vector<8x256xf32>
    %78 = arith.mulf %73, %76 : vector<8x256xf32>
    %79 = arith.addf %77, %78 : vector<8x256xf32>
    %80 = math.tanh %79 : vector<8x256xf32>
    %81 = arith.mulf %75, %80 : vector<8x256xf32>
    %82 = vector.extract_strided_slice %37 {offsets = [16, 0], sizes = [8, 1024], strides = [1, 1]} : vector<40x1024xf32> to vector<8x1024xf32>
    %83 = arith.truncf %81 : vector<8x256xf32> to vector<8x256xbf16>
    %c0_26 = arith.constant 0 : index
    %c0_27 = arith.constant 0 : index
    %84 = vector.load %arg14[%c0_26, %c0_27] : memref<256x1024xbf16, #tpu.memory_space<vmem>>, vector<256x1024xbf16>
    %cst_28 = arith.constant dense<0.000000e+00> : vector<8x1024xf32>
    %85 = tpu.matmul %83, %84, %cst_28 {dimension_numbers = #tpu.dot_dimension_numbers<[1], [0], [0], [1], [0, 0, 1, 1], [], []>} : vector<8x256xbf16>, vector<256x1024xbf16>, vector<8x1024xf32> -> vector<8x1024xf32>
    %86 = arith.addf %82, %85 : vector<8x1024xf32>
    %87 = math.tanh %86 : vector<8x1024xf32>
    %88 = vector.extract_strided_slice %87 {offsets = [0, 0], sizes = [8, 768], strides = [1, 1]} : vector<8x1024xf32> to vector<8x768xf32>
    %cst_29 = arith.constant 5.000000e-01 : f32
    %89 = vector.broadcast %cst_29 : f32 to vector<8x768xf32>
    %90 = arith.mulf %89, %88 : vector<8x768xf32>
    %cst_30 = arith.constant 5.000000e-01 : f32
    %91 = vector.broadcast %cst_30 : f32 to vector<8x768xf32>
    %92 = arith.addf %90, %91 : vector<8x768xf32>
    %93 = vector.extract_strided_slice %92 {offsets = [0, 0], sizes = [8, 256], strides = [1, 1]} : vector<8x768xf32> to vector<8x256xf32>
    %94 = vector.extract_strided_slice %92 {offsets = [0, 256], sizes = [8, 256], strides = [1, 1]} : vector<8x768xf32> to vector<8x256xf32>
    %95 = vector.extract_strided_slice %92 {offsets = [0, 512], sizes = [8, 256], strides = [1, 1]} : vector<8x768xf32> to vector<8x256xf32>
    %96 = vector.extract_strided_slice %87 {offsets = [0, 768], sizes = [8, 256], strides = [1, 1]} : vector<8x1024xf32> to vector<8x256xf32>
    %97 = arith.mulf %94, %79 : vector<8x256xf32>
    %98 = arith.mulf %93, %96 : vector<8x256xf32>
    %99 = arith.addf %97, %98 : vector<8x256xf32>
    %100 = math.tanh %99 : vector<8x256xf32>
    %101 = arith.mulf %95, %100 : vector<8x256xf32>
    %102 = vector.extract_strided_slice %37 {offsets = [24, 0], sizes = [8, 1024], strides = [1, 1]} : vector<40x1024xf32> to vector<8x1024xf32>
    %103 = arith.truncf %101 : vector<8x256xf32> to vector<8x256xbf16>
    %c0_31 = arith.constant 0 : index
    %c0_32 = arith.constant 0 : index
    %104 = vector.load %arg14[%c0_31, %c0_32] : memref<256x1024xbf16, #tpu.memory_space<vmem>>, vector<256x1024xbf16>
    %cst_33 = arith.constant dense<0.000000e+00> : vector<8x1024xf32>
    %105 = tpu.matmul %103, %104, %cst_33 {dimension_numbers = #tpu.dot_dimension_numbers<[1], [0], [0], [1], [0, 0, 1, 1], [], []>} : vector<8x256xbf16>, vector<256x1024xbf16>, vector<8x1024xf32> -> vector<8x1024xf32>
    %106 = arith.addf %102, %105 : vector<8x1024xf32>
    %107 = math.tanh %106 : vector<8x1024xf32>
    %108 = vector.extract_strided_slice %107 {offsets = [0, 0], sizes = [8, 768], strides = [1, 1]} : vector<8x1024xf32> to vector<8x768xf32>
    %cst_34 = arith.constant 5.000000e-01 : f32
    %109 = vector.broadcast %cst_34 : f32 to vector<8x768xf32>
    %110 = arith.mulf %109, %108 : vector<8x768xf32>
    %cst_35 = arith.constant 5.000000e-01 : f32
    %111 = vector.broadcast %cst_35 : f32 to vector<8x768xf32>
    %112 = arith.addf %110, %111 : vector<8x768xf32>
    %113 = vector.extract_strided_slice %112 {offsets = [0, 0], sizes = [8, 256], strides = [1, 1]} : vector<8x768xf32> to vector<8x256xf32>
    %114 = vector.extract_strided_slice %112 {offsets = [0, 256], sizes = [8, 256], strides = [1, 1]} : vector<8x768xf32> to vector<8x256xf32>
    %115 = vector.extract_strided_slice %112 {offsets = [0, 512], sizes = [8, 256], strides = [1, 1]} : vector<8x768xf32> to vector<8x256xf32>
    %116 = vector.extract_strided_slice %107 {offsets = [0, 768], sizes = [8, 256], strides = [1, 1]} : vector<8x1024xf32> to vector<8x256xf32>
    %117 = arith.mulf %114, %99 : vector<8x256xf32>
    %118 = arith.mulf %113, %116 : vector<8x256xf32>
    %119 = arith.addf %117, %118 : vector<8x256xf32>
    %120 = math.tanh %119 : vector<8x256xf32>
    %121 = arith.mulf %115, %120 : vector<8x256xf32>
    %122 = vector.extract_strided_slice %37 {offsets = [32, 0], sizes = [8, 1024], strides = [1, 1]} : vector<40x1024xf32> to vector<8x1024xf32>
    %123 = arith.truncf %121 : vector<8x256xf32> to vector<8x256xbf16>
    %c0_36 = arith.constant 0 : index
    %c0_37 = arith.constant 0 : index
    %124 = vector.load %arg14[%c0_36, %c0_37] : memref<256x1024xbf16, #tpu.memory_space<vmem>>, vector<256x1024xbf16>
    %cst_38 = arith.constant dense<0.000000e+00> : vector<8x1024xf32>
    %125 = tpu.matmul %123, %124, %cst_38 {dimension_numbers = #tpu.dot_dimension_numbers<[1], [0], [0], [1], [0, 0, 1, 1], [], []>} : vector<8x256xbf16>, vector<256x1024xbf16>, vector<8x1024xf32> -> vector<8x1024xf32>
    %126 = arith.addf %122, %125 : vector<8x1024xf32>
    %127 = math.tanh %126 : vector<8x1024xf32>
    %128 = vector.extract_strided_slice %127 {offsets = [0, 0], sizes = [8, 768], strides = [1, 1]} : vector<8x1024xf32> to vector<8x768xf32>
    %cst_39 = arith.constant 5.000000e-01 : f32
    %129 = vector.broadcast %cst_39 : f32 to vector<8x768xf32>
    %130 = arith.mulf %129, %128 : vector<8x768xf32>
    %cst_40 = arith.constant 5.000000e-01 : f32
    %131 = vector.broadcast %cst_40 : f32 to vector<8x768xf32>
    %132 = arith.addf %130, %131 : vector<8x768xf32>
    %133 = vector.extract_strided_slice %132 {offsets = [0, 0], sizes = [8, 256], strides = [1, 1]} : vector<8x768xf32> to vector<8x256xf32>
    %134 = vector.extract_strided_slice %132 {offsets = [0, 256], sizes = [8, 256], strides = [1, 1]} : vector<8x768xf32> to vector<8x256xf32>
    %135 = vector.extract_strided_slice %132 {offsets = [0, 512], sizes = [8, 256], strides = [1, 1]} : vector<8x768xf32> to vector<8x256xf32>
    %136 = vector.extract_strided_slice %127 {offsets = [0, 768], sizes = [8, 256], strides = [1, 1]} : vector<8x1024xf32> to vector<8x256xf32>
    %137 = arith.mulf %134, %119 : vector<8x256xf32>
    %138 = arith.mulf %133, %136 : vector<8x256xf32>
    %139 = arith.addf %137, %138 : vector<8x256xf32>
    %140 = math.tanh %139 : vector<8x256xf32>
    %141 = arith.mulf %135, %140 : vector<8x256xf32>
    %c1_i32_41 = arith.constant 1 : i32
    %142 = tpu.memref_slice %arg18[%c1_i32_41] : memref<4x!tpu.dma_semaphore, #tpu.memory_space<semaphore_mem>> -> memref<1x!tpu.dma_semaphore, #tpu.memory_space<semaphore_mem>>
    %143 = tpu.memref_squeeze %142 : memref<1x!tpu.dma_semaphore, #tpu.memory_space<semaphore_mem>> -> memref<!tpu.dma_semaphore, #tpu.memory_space<semaphore_mem>>
    tpu.wait_dma2 semaphore(%143 : memref<!tpu.dma_semaphore, #tpu.memory_space<semaphore_mem>>) src(%arg6 : memref<256x128xf32, #tpu.memory_space<any>>) dst(%arg15 : memref<256x128xf32, #tpu.memory_space<vmem>>)
    %c0_42 = arith.constant 0 : index
    %c0_43 = arith.constant 0 : index
    %144 = vector.load %arg15[%c0_42, %c0_43] : memref<256x128xf32, #tpu.memory_space<vmem>>, vector<256x128xf32>
    %cst_44 = arith.constant dense<0.000000e+00> : vector<8x128xf32>
    %145 = tpu.matmul %141, %144, %cst_44 {dimension_numbers = #tpu.dot_dimension_numbers<[1], [0], [0], [1], [0, 0, 1, 1], [], []>} : vector<8x256xf32>, vector<256x128xf32>, vector<8x128xf32> -> vector<8x128xf32>
    %c0_45 = arith.constant 0 : index
    %c0_46 = arith.constant 0 : index
    %146 = vector.load %arg7[%c0_45, %c0_46] : memref<1x128xf32, #tpu.memory_space<vmem>>, vector<1x128xf32>
    %147 = vector.broadcast %146 : vector<1x128xf32> to vector<8x128xf32>
    %148 = arith.addf %145, %147 : vector<8x128xf32>
    %cst_47 = arith.constant 0.000000e+00 : f32
    %149 = vector.broadcast %cst_47 : f32 to vector<8x128xf32>
    %150 = arith.cmpf ogt, %148, %149 : vector<8x128xf32>
    %cst_48 = arith.constant 0.00999999977 : f32
    %151 = vector.broadcast %cst_48 : f32 to vector<8x128xf32>
    %152 = arith.mulf %151, %148 : vector<8x128xf32>
    %153 = arith.select %150, %148, %152 : vector<8x128xi1>, vector<8x128xf32>
    %c2_i32_49 = arith.constant 2 : i32
    %154 = tpu.memref_slice %arg18[%c2_i32_49] : memref<4x!tpu.dma_semaphore, #tpu.memory_space<semaphore_mem>> -> memref<1x!tpu.dma_semaphore, #tpu.memory_space<semaphore_mem>>
    %155 = tpu.memref_squeeze %154 : memref<1x!tpu.dma_semaphore, #tpu.memory_space<semaphore_mem>> -> memref<!tpu.dma_semaphore, #tpu.memory_space<semaphore_mem>>
    tpu.wait_dma2 semaphore(%155 : memref<!tpu.dma_semaphore, #tpu.memory_space<semaphore_mem>>) src(%arg8 : memref<256x128xf32, #tpu.memory_space<any>>) dst(%arg16 : memref<256x128xf32, #tpu.memory_space<vmem>>)
    %c3_i32_50 = arith.constant 3 : i32
    %156 = tpu.memref_slice %arg18[%c3_i32_50] : memref<4x!tpu.dma_semaphore, #tpu.memory_space<semaphore_mem>> -> memref<1x!tpu.dma_semaphore, #tpu.memory_space<semaphore_mem>>
    %157 = tpu.memref_squeeze %156 : memref<1x!tpu.dma_semaphore, #tpu.memory_space<semaphore_mem>> -> memref<!tpu.dma_semaphore, #tpu.memory_space<semaphore_mem>>
    tpu.wait_dma2 semaphore(%157 : memref<!tpu.dma_semaphore, #tpu.memory_space<semaphore_mem>>) src(%arg9 : memref<128x128xf32, #tpu.memory_space<any>>) dst(%arg17 : memref<128x128xf32, #tpu.memory_space<vmem>>)
    %c0_51 = arith.constant 0 : index
    %c0_52 = arith.constant 0 : index
    %158 = vector.load %arg16[%c0_51, %c0_52] : memref<256x128xf32, #tpu.memory_space<vmem>>, vector<256x128xf32>
    %cst_53 = arith.constant dense<0.000000e+00> : vector<8x128xf32>
    %159 = tpu.matmul %20, %158, %cst_53 {dimension_numbers = #tpu.dot_dimension_numbers<[1], [0], [0], [1], [0, 0, 1, 1], [], []>} : vector<8x256xf32>, vector<256x128xf32>, vector<8x128xf32> -> vector<8x128xf32>
    %c0_54 = arith.constant 0 : index
    %c0_55 = arith.constant 0 : index
    %160 = vector.load %arg17[%c0_54, %c0_55] : memref<128x128xf32, #tpu.memory_space<vmem>>, vector<128x128xf32>
    %cst_56 = arith.constant dense<0.000000e+00> : vector<8x128xf32>
    %161 = tpu.matmul %153, %160, %cst_56 {dimension_numbers = #tpu.dot_dimension_numbers<[1], [0], [0], [1], [0, 0, 1, 1], [], []>} : vector<8x128xf32>, vector<128x128xf32>, vector<8x128xf32> -> vector<8x128xf32>
    %162 = arith.addf %159, %161 : vector<8x128xf32>
    %c0_57 = arith.constant 0 : index
    %c0_58 = arith.constant 0 : index
    %163 = vector.load %arg10[%c0_57, %c0_58] : memref<1x128xf32, #tpu.memory_space<vmem>>, vector<1x128xf32>
    %164 = vector.broadcast %163 : vector<1x128xf32> to vector<8x128xf32>
    %165 = arith.addf %162, %164 : vector<8x128xf32>
    %cst_59 = arith.constant 0.000000e+00 : f32
    %166 = vector.broadcast %cst_59 : f32 to vector<8x128xf32>
    %167 = arith.cmpf ogt, %165, %166 : vector<8x128xf32>
    %cst_60 = arith.constant 0.00999999977 : f32
    %168 = vector.broadcast %cst_60 : f32 to vector<8x128xf32>
    %169 = arith.mulf %168, %165 : vector<8x128xf32>
    %170 = arith.select %167, %165, %169 : vector<8x128xi1>, vector<8x128xf32>
    %c0_61 = arith.constant 0 : index
    %c0_62 = arith.constant 0 : index
    %171 = vector.load %arg11[%c0_61, %c0_62] : memref<1x128xf32, #tpu.memory_space<vmem>>, vector<1x128xf32>
    %172 = vector.broadcast %171 : vector<1x128xf32> to vector<8x128xf32>
    %173 = arith.mulf %170, %172 : vector<8x128xf32>
    %cst_63 = arith.constant dense<0.000000e+00> : vector<8xf32>
    %174 = vector.multi_reduction <add>, %173, %cst_63 [1] : vector<8x128xf32> to vector<8xf32>
    %175 = vector.shape_cast %174 : vector<8xf32> to vector<8x1xf32>
    %c0_64 = arith.constant 0 : index
    %c0_65 = arith.constant 0 : index
    %176 = vector.load %arg12[%c0_64, %c0_65] : memref<1x1xf32, #tpu.memory_space<vmem>>, vector<1x1xf32>
    %177 = vector.broadcast %176 : vector<1x1xf32> to vector<8x1xf32>
    %178 = arith.addf %175, %177 : vector<8x1xf32>
    %179 = arith.negf %178 : vector<8x1xf32>
    %180 = math.exp %179 : vector<8x1xf32>
    %cst_66 = arith.constant 1.000000e+00 : f32
    %181 = vector.broadcast %cst_66 : f32 to vector<8x1xf32>
    %182 = arith.addf %181, %180 : vector<8x1xf32>
    %183 = arith.divf %181, %182 : vector<8x1xf32>
    %c0_67 = arith.constant 0 : index
    %c0_68 = arith.constant 0 : index
    %184 = vector.load %arg13[%c0_67, %c0_68] : memref<8x1xf32, #tpu.memory_space<vmem>>, vector<8x1xf32>
    tpu.vector_store %arg13[%c0_67, %c0_68], %183 {strides = array<i32>} : memref<8x1xf32, #tpu.memory_space<vmem>>, vector<8x1xf32>,
    return
  }
}

</mosaic_0001>

<llo_original>
// kernel: tpu_custom_call.1
$region0: #{tpu_custom_call.1}
  #allocation0 [shape = 'u32[]', space=smem, size = 0x4, offset = 0x4, fixed_abs, tag = 'smem constant byte address 0x4 - core index']
  #allocation1 [shape = 'u32[144,128]{1,0:T(1,128)}', space=vmem, size = 0x12000, scoped, tag = 'internal scratch']
  #allocation2 [shape = 'bf16[256,1024]{1,0:T(8,128)(2,1)}', space=vmem, size = 0x80000, scoped, tag = 'scratch operand']
  #allocation3 [shape = 'f32[256,128]{1,0:T(8,128)}', space=vmem, size = 0x20000, scoped, tag = 'scratch operand']
  #allocation4 [shape = 'f32[256,128]{1,0:T(8,128)}', space=vmem, size = 0x20000, scoped, tag = 'scratch operand']
  #allocation5 [shape = 'f32[128,128]{1,0:T(8,128)}', space=vmem, size = 0x10000, scoped, tag = 'scratch operand']
  #allocation6 [shape = 's32[4]{0}', space=sflag, size = 0x10, scoped, tag = 'scratch operand']
  #allocation7 [shape = 'f32[1,1]{1,0:T(1,128)S(1)}', space=vmem, size = 0x200, scoped, tag = 'scoped memory for tpu_custom_call.1']
  #allocation15 [shape = 's32[]', space=sflag, size = 0x4, offset = 0, fixed_abs, tag = 'sflag constant byte address 0x0 - dummy sync flag']
  #allocation16 [shape = 's32[]', space=sflag, size = 0x4, offset = 0, fixed_abs, tag = 'sflag constant byte address 0x0 - dummy sync flag']
  #allocation17 [shape = 'u32[]', space=smem, size = 0x4, offset = 0x44, fixed_abs, tag = 'smem constant byte address 0x44 - assertion arg 0']
  #allocation18 [shape = 'u32[]', space=smem, size = 0x4, offset = 0x48, fixed_abs, tag = 'smem constant byte address 0x48 - assertion arg 1']
  #allocation19 [shape = 's32[]', space=sflag, size = 0x4, offset = 0, fixed_abs, tag = 'sflag constant byte address 0x0 - dummy sync flag']
  #allocation20 [shape = 's32[]', space=sflag, size = 0x4, offset = 0, fixed_abs, tag = 'sflag constant byte address 0x0 - dummy sync flag']
  #allocation21 [shape = 's32[]', space=sflag, size = 0x4, offset = 0, fixed_abs, tag = 'sflag constant byte address 0x0 - dummy sync flag']
  #allocation22 [shape = 's32[]', space=sflag, size = 0x4, offset = 0, fixed_abs, tag = 'sflag constant byte address 0x0 - dummy sync flag']
  #allocation23 [shape = 's32[]', space=sflag, size = 0x4, offset = 0, fixed_abs, tag = 'sflag constant byte address 0x0 - dummy sync flag']
  %s0 = inlined_call_operand.vmem [shape: f32[8,6,9], index: 0, kind: input, shape index: {}]
  %s1 = inlined_call_operand.hbm [shape: f32[9,256], index: 1, kind: input, shape index: {}]
  %s2 = inlined_call_operand.vmem [shape: f32[1,256], index: 2, kind: input, shape index: {}]
  %s3 = inlined_call_operand.hbm [shape: bf16[9,1024], index: 3, kind: input, shape index: {}]
  %s4 = inlined_call_operand.hbm [shape: f32[1,1024], index: 4, kind: input, shape index: {}]
  %s5 = inlined_call_operand.hbm [shape: bf16[256,1024], index: 5, kind: input, shape index: {}]
  %s6 = inlined_call_operand.hbm [shape: f32[256,128], index: 6, kind: input, shape index: {}]
  %s7 = inlined_call_operand.hbm [shape: f32[1,128], index: 7, kind: input, shape index: {}]
  %s8 = inlined_call_operand.hbm [shape: f32[256,128], index: 8, kind: input, shape index: {}]
  %s9 = inlined_call_operand.vmem [shape: f32[128,128], index: 9, kind: input, shape index: {}]
  %s10 = inlined_call_operand.vmem [shape: f32[1,128], index: 10, kind: input, shape index: {}]
  %s11 = inlined_call_operand.vmem [shape: f32[1,128], index: 11, kind: input, shape index: {}]
  %s12 = inlined_call_operand.<no memory space> [shape: f32[1,1], index: 12, kind: input, shape index: {}]
  %s13 = inlined_call_operand.vmem [shape: f32[8,1], index: 13, kind: output, shape index: {}]
  %s14 = sld [smem:[#allocation0]]
  $region108: #{tpu_custom_call.1} parent=0
    _
  %s16 = ssub.s32 1, %s14
  %s17 = scalar_select 0, %s16, %s14
  %v18 = vstv %s12
  %19 = vst [vmem:[#allocation7] sm:$0x1] %v18
  $region1: #{tpu_custom_call.1} parent=0
    #allocation8 [shape = 'u8[16384]{0}', space=vmem, size = 0x4000, scoped, tag = 'input window, operand 1, single buffered']
    #allocation9 [shape = 's32[1]{0}', space=sflag, size = 0x4, scoped, tag = 'scoped memory for tpu_custom_call.1']
    #allocation10 [shape = 'u8[32768]{0}', space=vmem, size = 0x8000, scoped, tag = 'input window, operand 3, single buffered']
    #allocation11 [shape = 's32[1]{0}', space=sflag, size = 0x4, scoped, tag = 'scoped memory for tpu_custom_call.1']
    #allocation12 [shape = 'u8[4096]{0}', space=vmem, size = 0x1000, scoped, tag = 'input window, operand 4, single buffered']
    #allocation13 [shape = 'u8[512]{0}', space=vmem, size = 0x400, scoped, tag = 'input window, operand 7, single buffered']
    #allocation14 [shape = 's32[1]{0}', space=sflag, size = 0x4, scoped, tag = 'scoped memory for tpu_custom_call.1']
    %20 = vsyncpa [#allocation9], 0
    %21 = vsyncpa [#allocation11], 0
    %22 = vsyncpa [#allocation14], 0
    // Predicated region
    $region2: #{tpu_custom_call.1} parent=1 // pred_check
      _
    $region3: #{tpu_custom_call.1} parent=1 // pred_check_branch
      %24 = sbr.rel (0) target = $region5
    $region4: #{tpu_custom_call.1} parent=1 // pred_region
      _
    $region5: #{tpu_custom_call.1} parent=1 // pred_fallthru
      _
    // Predicated region
    $region6: #{tpu_custom_call.1} parent=1 // pred_check
      _
    $region7: #{tpu_custom_call.1} parent=1 // pred_check_branch
      %26 = sbr.rel (0) target = $region9
    $region8: #{tpu_custom_call.1} parent=1 // pred_region
      %s28 = ssub.s32 512, 512
      %29 = vsyncadd [#allocation9], %s28
      %s30 = sshll.u32 [#allocation8], 4
      %s31 = int_to_ptr.vmem [resolvable:$true] %s30
      %36 = dma.hbm_to_vmem [thread:$0]  %s1, 512, %s31, [#allocation9], 256, 256, 16
    $region9: #{tpu_custom_call.1} parent=1 // pred_fallthru
      _
    // Predicated region
    $region10: #{tpu_custom_call.1} parent=1 // pred_check
      _
    $region11: #{tpu_custom_call.1} parent=1 // pred_check_branch
      %38 = sbr.rel (0) target = $region13
    $region12: #{tpu_custom_call.1} parent=1 // pred_region
      _
    $region13: #{tpu_custom_call.1} parent=1 // pred_fallthru
      _
    // Predicated region
    $region14: #{tpu_custom_call.1} parent=1 // pred_check
      _
    $region15: #{tpu_custom_call.1} parent=1 // pred_check_branch
      %40 = sbr.rel (0) target = $region17
    $region16: #{tpu_custom_call.1} parent=1 // pred_region
      %s42 = ssub.s32 1024, 1024
      %43 = vsyncadd [#allocation11], %s42
      %s44 = sshll.u32 [#allocation10], 4
      %s45 = int_to_ptr.vmem [resolvable:$true] %s44
      %50 = dma.hbm_to_vmem [thread:$0]  %s3, 1024, %s45, [#allocation11], 512, 512, 32
    $region17: #{tpu_custom_call.1} parent=1 // pred_fallthru
      _
    // Predicated region
    $region18: #{tpu_custom_call.1} parent=1 // pred_check
      _
    $region19: #{tpu_custom_call.1} parent=1 // pred_check_branch
      %52 = sbr.rel (0) target = $region21
    $region20: #{tpu_custom_call.1} parent=1 // pred_region
      %s54 = ssub.s32 128, 128
      %55 = vsyncadd [#allocation11], %s54
      %s57 = sshll.u32 [#allocation12], 4
      %s58 = int_to_ptr.vmem [resolvable:$true] %s57
      %60 = dma.hbm_to_vmem [thread:$0]  %s4, 128, %s58, [#allocation11]
    $region21: #{tpu_custom_call.1} parent=1 // pred_fallthru
      _
    // Predicated region
    $region22: #{tpu_custom_call.1} parent=1 // pred_check
      _
    $region23: #{tpu_custom_call.1} parent=1 // pred_check_branch
      %62 = sbr.rel (0) target = $region25
    $region24: #{tpu_custom_call.1} parent=1 // pred_region
      %s64 = ssub.s32 16, 16
      %65 = vsyncadd [#allocation14], %s64
      %s67 = sshll.u32 [#allocation13], 4
      %s68 = int_to_ptr.vmem [resolvable:$true] %s67
      %70 = dma.hbm_to_vmem [thread:$0]  %s7, 16, %s68, [#allocation14]
    $region25: #{tpu_custom_call.1} parent=1 // pred_fallthru
      _
    // Predicated region
    $region26: #{tpu_custom_call.1} parent=1 // pred_check
      _
    $region27: #{tpu_custom_call.1} parent=1 // pred_check_branch
      %72 = sbr.rel (0) target = $region29
    $region28: #{tpu_custom_call.1} parent=1 // pred_region
      _
    $region29: #{tpu_custom_call.1} parent=1 // pred_fallthru
      _
    // Predicated region
    $region30: #{tpu_custom_call.1} parent=1 // pred_check
      _
    $region31: #{tpu_custom_call.1} parent=1 // pred_check_branch
      %74 = sbr.rel (0) target = $region33
    $region32: #{tpu_custom_call.1} parent=1 // pred_region
      _
    $region33: #{tpu_custom_call.1} parent=1 // pred_fallthru
      _
    // Predicated region
    $region34: #{tpu_custom_call.1} parent=1 // pred_check
      _
    $region35: #{tpu_custom_call.1} parent=1 // pred_check_branch
      %76 = sbr.rel (0) target = $region37
    $region36: #{tpu_custom_call.1} parent=1 // pred_region
      _
    $region37: #{tpu_custom_call.1} parent=1 // pred_fallthru
      _
    // Predicated region
    $region38: #{tpu_custom_call.1} parent=1 // pred_check
      _
    $region39: #{tpu_custom_call.1} parent=1 // pred_check_branch
      %78 = sbr.rel (0) target = $region41
    $region40: #{tpu_custom_call.1} parent=1 // pred_region
      %79 = dma.done [#allocation9], 512
    $region41: #{tpu_custom_call.1} parent=1 // pred_fallthru
      _
    // Predicated region
    $region42: #{tpu_custom_call.1} parent=1 // pred_check
      _
    $region43: #{tpu_custom_call.1} parent=1 // pred_check_branch
      %81 = sbr.rel (0) target = $region45
    $region44: #{tpu_custom_call.1} parent=1 // pred_region
      %82 = dma.done [#allocation11], 1024
    $region45: #{tpu_custom_call.1} parent=1 // pred_fallthru
      _
    // Predicated region
    $region46: #{tpu_custom_call.1} parent=1 // pred_check
      _
    $region47: #{tpu_custom_call.1} parent=1 // pred_check_branch
      %84 = sbr.rel (0) target = $region49
    $region48: #{tpu_custom_call.1} parent=1 // pred_region
      %85 = dma.done [#allocation11], 128
    $region49: #{tpu_custom_call.1} parent=1 // pred_fallthru
      _
    // Predicated region
    $region50: #{tpu_custom_call.1} parent=1 // pred_check
      _
    $region51: #{tpu_custom_call.1} parent=1 // pred_check_branch
      %87 = sbr.rel (0) target = $region53
    $region52: #{tpu_custom_call.1} parent=1 // pred_region
      %88 = dma.done [#allocation14], 16
    $region53: #{tpu_custom_call.1} parent=1 // pred_fallthru
      _
    // Predicated region
    $region54: #{tpu_custom_call.1} parent=1 // pred_check
      _
    $region55: #{tpu_custom_call.1} parent=1 // pred_check_branch
      %91 = sbr.rel target = $region57
    $region56: #{tpu_custom_call.1} parent=1 // pred_region
      %92 = sst [smem:[#allocation17]] [#allocation16]
      %93 = sst [smem:[#allocation18]] [#allocation15]
    $region57: #{tpu_custom_call.1} parent=1 // pred_fallthru
      _
    %95 = shalt.err (0)
    %s97 = sshll.u32 [#allocation2], 4
    %s98 = int_to_ptr.vmem [resolvable:$true] %s97
    %100 = dma.hbm_to_vmem [thread:$0]  %s5, 16384, %s98, [#allocation6]
    %s101 = scalar_lea.sflag [#allocation6], 1
    // Predicated region
    $region58: #{tpu_custom_call.1} parent=1 // pred_check
      _
    $region59: #{tpu_custom_call.1} parent=1 // pred_check_branch
      %103 = sbr.rel target = $region61
    $region60: #{tpu_custom_call.1} parent=1 // pred_region
      %104 = sst [smem:[#allocation17]] [#allocation20]
      %105 = sst [smem:[#allocation18]] [#allocation19]
    $region61: #{tpu_custom_call.1} parent=1 // pred_fallthru
      _
    %107 = shalt.err (0)
    %s109 = sshll.u32 [#allocation3], 4
    %s110 = int_to_ptr.vmem [resolvable:$true] %s109
    %112 = dma.hbm_to_vmem [thread:$0]  %s6, 4096, %s110, %s101
    %s113 = scalar_lea.sflag [#allocation6], 2
    // Predicated region
    $region62: #{tpu_custom_call.1} parent=1 // pred_check
      _
    $region63: #{tpu_custom_call.1} parent=1 // pred_check_branch
      %115 = sbr.rel target = $region65
    $region64: #{tpu_custom_call.1} parent=1 // pred_region
      %116 = sst [smem:[#allocation17]] [#allocation22]
      %117 = sst [smem:[#allocation18]] [#allocation21]
    $region65: #{tpu_custom_call.1} parent=1 // pred_fallthru
      _
    %119 = shalt.err (0)
    %s121 = sshll.u32 [#allocation4], 4
    %s122 = int_to_ptr.vmem [resolvable:$true] %s121
    %124 = dma.hbm_to_vmem [thread:$0]  %s8, 4096, %s122, %s113
    %s125 = scalar_lea.sflag [#allocation6], 3
    %p127 = scmp.lt.u32.totalorder 128, 8
    %p128 = pneg %p127
    // Predicated region
    $region66: #{tpu_custom_call.1} parent=1 // pred_check
      _
    $region67: #{tpu_custom_call.1} parent=1 // pred_check_branch
      %130 = sbr.rel (%p127) target = $region69
    $region68: #{tpu_custom_call.1} parent=1 // pred_region
      %s146 = sand.u32 128, 7
      %p147 = scmp.eq.s32.totalorder %s146, 0
      // Predicated region
      $region81: #{tpu_custom_call.1} parent=68 // pred_check
        %p148 = pneg %p147
      $region82: #{tpu_custom_call.1} parent=68 // pred_check_branch
        %150 = sbr.rel (%p148) target = $region84
      $region83: #{tpu_custom_call.1} parent=68 // pred_region
        loop: start=0, step=1, limit=1
        $region85: #{tpu_custom_call.1} parent=83 // loop_pre_header
          _
        $region86: #{tpu_custom_call.1} parent=83 // loop_header
          %s152 = sphi 0, %s156
          %p153 = scmp.ge.s32.totalorder %s152, 1
          %s157 = sphi %s9, %s9
          %s158 = sphi [#allocation5], [#allocation5]
        $region87: #{tpu_custom_call.1} parent=83 // loop_header_branch
          %155 = sbr.rel (%p153) target = $region91
        $region88: #{tpu_custom_call.1} parent=83 // loop_body
          %v159 = vld [vmem:[%s157] sm:$0xff]
          %160 = vst [vmem:[%s158] sm:$0xff] %v159
          %v161 = vld [vmem:[%s157 + $0x8] sm:$0xff]
          %162 = vst [vmem:[%s158 + $0x8] sm:$0xff] %v161
          %v163 = vld [vmem:[%s157 + $0x10] sm:$0xff]
          %164 = vst [vmem:[%s158 + $0x10] sm:$0xff] %v163
          %v165 = vld [vmem:[%s157 + $0x18] sm:$0xff]
          %166 = vst [vmem:[%s158 + $0x18] sm:$0xff] %v165
          %v167 = vld [vmem:[%s157 + $0x20] sm:$0xff]
          %168 = vst [vmem:[%s158 + $0x20] sm:$0xff] %v167
          %v169 = vld [vmem:[%s157 + $0x28] sm:$0xff]
          %170 = vst [vmem:[%s158 + $0x28] sm:$0xff] %v169
          %v171 = vld [vmem:[%s157 + $0x30] sm:$0xff]
          %172 = vst [vmem:[%s158 + $0x30] sm:$0xff] %v171
          %v173 = vld [vmem:[%s157 + $0x38] sm:$0xff]
          %174 = vst [vmem:[%s158 + $0x38] sm:$0xff] %v173
          %v175 = vld [vmem:[%s157 + $0x40] sm:$0xff]
          %176 = vst [vmem:[%s158 + $0x40] sm:$0xff] %v175
          %v177 = vld [vmem:[%s157 + $0x48] sm:$0xff]
          %178 = vst [vmem:[%s158 + $0x48] sm:$0xff] %v177
          %v179 = vld [vmem:[%s157 + $0x50] sm:$0xff]
          %180 = vst [vmem:[%s158 + $0x50] sm:$0xff] %v179
          %v181 = vld [vmem:[%s157 + $0x58] sm:$0xff]
          %182 = vst [vmem:[%s158 + $0x58] sm:$0xff] %v181
          %v183 = vld [vmem:[%s157 + $0x60] sm:$0xff]
          %184 = vst [vmem:[%s158 + $0x60] sm:$0xff] %v183
          %v185 = vld [vmem:[%s157 + $0x68] sm:$0xff]
          %186 = vst [vmem:[%s158 + $0x68] sm:$0xff] %v185
          %v187 = vld [vmem:[%s157 + $0x70] sm:$0xff]
          %188 = vst [vmem:[%s158 + $0x70] sm:$0xff] %v187
          %v189 = vld [vmem:[%s157 + $0x78] sm:$0xff]
          %190 = vst [vmem:[%s158 + $0x78] sm:$0xff] %v189
        $region89: #{tpu_custom_call.1} parent=83 // loop_footer
          %s156 = sadd.s32 1, %s152
        $region90: #{tpu_custom_call.1} parent=83 // loop_footer_branch
          %151 = sbr.rel target = $region86
        $region91: #{tpu_custom_call.1} parent=83 // loop_exit
          _
      $region84: #{tpu_custom_call.1} parent=68 // pred_fallthru
        _
      %p191 = pneg %p147
      // Predicated region
      $region92: #{tpu_custom_call.1} parent=68 // pred_check
        _
      $region93: #{tpu_custom_call.1} parent=68 // pred_check_branch
        %193 = sbr.rel (%p147) target = $region95
      $region94: #{tpu_custom_call.1} parent=68 // pred_region
        %s194 = sand.u32 128, 7
      $region95: #{tpu_custom_call.1} parent=68 // pred_fallthru
        _
    $region69: #{tpu_custom_call.1} parent=1 // pred_fallthru
      _
    // Predicated region
    $region70: #{tpu_custom_call.1} parent=1 // pred_check
      %p131 = pneg %p127
    $region71: #{tpu_custom_call.1} parent=1 // pred_check_branch
      %133 = sbr.rel (%p131) target = $region73
    $region72: #{tpu_custom_call.1} parent=1 // pred_region
      %s134 = sshll.u32 1, 128
      %s135 = ssub.s32 %s134, 1
      loop: start=0, step=1, limit=1
      $region74: #{tpu_custom_call.1} parent=72 // loop_pre_header
        _
      $region75: #{tpu_custom_call.1} parent=72 // loop_header
        %s137 = sphi 0, %s141
        %p138 = scmp.ge.s32.totalorder %s137, 1
        %s142 = sphi %s9, %s9
        %s143 = sphi [#allocation5], [#allocation5]
      $region76: #{tpu_custom_call.1} parent=72 // loop_header_branch
        %140 = sbr.rel (%p138) target = $region80
      $region77: #{tpu_custom_call.1} parent=72 // loop_body
        %v144 = vld [vmem:[%s142] sm:%s135]
        %145 = vst [vmem:[%s143] sm:%s135] %v144
      $region78: #{tpu_custom_call.1} parent=72 // loop_footer
        %s141 = sadd.s32 1, %s137
      $region79: #{tpu_custom_call.1} parent=72 // loop_footer_branch
        %136 = sbr.rel target = $region75
      $region80: #{tpu_custom_call.1} parent=72 // loop_exit
        _
    $region73: #{tpu_custom_call.1} parent=1 // pred_fallthru
      _
    // Predicated region
    $region96: #{tpu_custom_call.1} parent=1 // pred_check
      _
    $region97: #{tpu_custom_call.1} parent=1 // pred_check_branch
      %197 = sbr.rel (0) target = $region99
    $region98: #{tpu_custom_call.1} parent=1 // pred_region
      %198 = vsyncadd %s125, 2048
    $region99: #{tpu_custom_call.1} parent=1 // pred_fallthru
      _
    %v199 = vld [vmem:[%s0] sm:$0x3f]
    %v200 = vld [vmem:[%s0 + $0x8] sm:$0x3f]
    %v201 = vld [vmem:[%s0 + $0x10] sm:$0x3f]
    %v202 = vld [vmem:[%s0 + $0x18] sm:$0x3f]
    %v203 = vld [vmem:[%s0 + $0x20] sm:$0x3f]
    %v204 = vld [vmem:[%s0 + $0x28] sm:$0x3f]
    %v205 = vld [vmem:[%s0 + $0x30] sm:$0x3f]
    %v206 = vld [vmem:[%s0 + $0x38] sm:$0x3f]
    %v207 = vld [vmem:[#allocation8] sm:$0xff]
    %v208 = vld [vmem:[#allocation8 + $0x8] sm:$0xff]
    %v209 = vld [vmem:[#allocation8 + $0x10] sm:$0x1]
    %v210 = vld [vmem:[#allocation8 + $0x18] sm:$0x1]
    %v211 = vld [vmem:[%s2] sm:$0x3]
    %v213 = vlaneseq
    %v214 = vshrl.u32 %v213, 7
    %v215 = vsub.s32 0, %v214
    %v216 = vrot.slane %v211, %v215
    %v217 = vlaneseq
    %v218 = vshrl.u32 %v217, 7
    %v219 = vsub.s32 1, %v218
    %v220 = vrot.slane %v211, %v219
    %v231 = vrot.slane %v199, 5
    %v232 = vrot.slane %v200, 4
    %vm233 = vcmask 1041409
    %v234 = vsel %vm233, %v232, %v231
    %v235 = vrot.slane %v201, 3
    %vm236 = vcmask 1042434
    %v237 = vsel %vm236, %v235, %v234
    %v238 = vrot.slane %v202, 2
    %vm239 = vcmask 1043459
    %v240 = vsel %vm239, %v238, %v237
    %v241 = vrot.slane %v203, 1
    %vm242 = vcmask 1044484
    %v243 = vsel %vm242, %v241, %v240
    %vm244 = vcmask 1045509
    %v245 = vsel %vm244, %v204, %v243
    %v246 = vrot.slane %v205, 7
    %vm247 = vcmask 1046534
    %v248 = vsel %vm247, %v246, %v245
    %v249 = vrot.slane %v206, 6
    %vm250 = vcmask 1047559
    %v251 = vsel %vm250, %v249, %v248
    %vm252 = vcmask 72704
    %v253 = vsel %vm252, %v251, 0
    %vm255 = vcmask 1040384
    %v257 = vsel %vm255, %v209, 0
    %v260 = vsel %vm255, %v210, 0
    %262 = vmatprep.subr.mxu0 0.0
    %263 = vmatpush1.msra.mxu0 0.0
    %264 = vmatprep.subr.mxu0 0.0
    %265 = vmatpush1.msra.mxu0 0.0
    %266 = vmatprep.subr.mxu0 0.0
    %267 = vmatpush1.msra.mxu0 0.0
    %268 = vmatprep.subr.mxu0 0.0
    %269 = vmatpush1.msra.mxu0 0.0
    %270 = vmatprep.subr.mxu0 0.0
    %271 = vmatpush1.msra.mxu0 0.0
    %272 = vmatprep.subr.mxu0 0.0
    %273 = vmatpush1.msra.mxu0 0.0
    %274 = vmatprep.subr.mxu0 0.0
    %275 = vmatpush1.msra.mxu0 0.0
    %276 = vmatprep.subr.mxu0 0.0
    %277 = vmatpush1.msra.mxu0 0.0
    %278 = vmatprep.subr.mxu0 0.0
    %279 = vmatpush1.msra.mxu0 0.0
    %280 = vmatprep.subr.mxu0 0.0
    %281 = vmatpush1.msra.mxu0 0.0
    %282 = vmatprep.subr.mxu0 0.0
    %283 = vmatpush1.msra.mxu0 0.0
    %284 = vmatprep.subr.mxu0 0.0
    %285 = vmatpush1.msra.mxu0 0.0
    %286 = vmatprep.subr.mxu0 0.0
    %287 = vmatpush1.msra.mxu0 0.0
    %288 = vmatprep.subr.mxu0 0.0
    %289 = vmatpush1.msra.mxu0 0.0
    %290 = vmatprep.subr.mxu0 %v260
    %291 = vmatpush1.msra.mxu0 %v257
    %292 = vmatprep.subr.mxu0 %v208
    %293 = vmatpush1.msra.mxu0 %v207
    %294 = vmatprep.subr.mxu0 0.0
    %295 = vmatpush2.msra.mxu0 0.0
    %296 = vmatprep.subr.mxu0 0.0
    %297 = vmatpush2.msra.mxu0 0.0
    %298 = vmatprep.subr.mxu0 0.0
    %299 = vmatpush2.msra.mxu0 0.0
    %300 = vmatprep.subr.mxu0 0.0
    %301 = vmatpush2.msra.mxu0 0.0
    %302 = vmatprep.subr.mxu0 0.0
    %303 = vmatpush2.msra.mxu0 0.0
    %304 = vmatprep.subr.mxu0 0.0
    %305 = vmatpush2.msra.mxu0 0.0
    %306 = vmatprep.subr.mxu0 0.0
    %307 = vmatpush2.msra.mxu0 0.0
    %308 = vmatprep.subr.mxu0 0.0
    %309 = vmatpush2.msra.mxu0 0.0
    %310 = vmatprep.subr.mxu0 0.0
    %311 = vmatpush2.msra.mxu0 0.0
    %312 = vmatprep.subr.mxu0 0.0
    %313 = vmatpush2.msra.mxu0 0.0
    %314 = vmatprep.subr.mxu0 0.0
    %315 = vmatpush2.msra.mxu0 0.0
    %316 = vmatprep.subr.mxu0 0.0
    %317 = vmatpush2.msra.mxu0 0.0
    %318 = vmatprep.subr.mxu0 0.0
    %319 = vmatpush2.msra.mxu0 0.0
    %320 = vmatprep.subr.mxu0 0.0
    %321 = vmatpush2.msra.mxu0 0.0
    %322 = vmatprep.subr.mxu0 0.0
    %323 = vmatpush2.msra.mxu0 0.0
    %324 = vmatprep.subr.mxu0 0.0
    %325 = vmatpush2.msra.mxu0 0.0
    %326 = vmatprep.mubr.f32.mxu0 0.0
    %327 = vmatmul.mubr.f32.gmra.mxu0 %v253
    %v328 = vpop.f32.mrf.mxu0
    %v329 = vadd.f32 %v216, %v328
    %v330 = vpop.f32.mrf.mxu0
    %v331 = vadd.f32 %v220, %v330
    %332 = vdwg.mxu0
    %vm333 = vcmp.gt.f32.partialorder %v329, 0.0
    %vm334 = vcmp.gt.f32.partialorder %v331, 0.0
    %v335 = vmul.f32 %v329, 0.01
    %v336 = vmul.f32 %v331, 0.01
    %v337 = vsel %vm333, %v329, %v335
    %v338 = vsel %vm334, %v331, %v336
    %v339 = vrot.slane %v200, 7
    %v340 = vsel %vm233, %v339, %v199
    %v341 = vrot.slane %v201, 6
    %v342 = vsel %vm236, %v341, %v340
    %v343 = vrot.slane %v202, 5
    %v344 = vsel %vm239, %v343, %v342
    %v345 = vrot.slane %v203, 4
    %v346 = vsel %vm242, %v345, %v344
    %v347 = vrot.slane %v204, 3
    %v348 = vsel %vm244, %v347, %v346
    %v349 = vrot.slane %v205, 2
    %v350 = vsel %vm247, %v349, %v348
    %v351 = vrot.slane %v206, 1
    %v352 = vsel %vm250, %v351, %v350
    %v354 = vrot.slane %v199, 1
    %v355 = vsel %vm233, %v200, %v354
    %v356 = vrot.slane %v201, 7
    %v357 = vsel %vm236, %v356, %v355
    %v358 = vrot.slane %v202, 6
    %v359 = vsel %vm239, %v358, %v357
    %v360 = vrot.slane %v203, 5
    %v361 = vsel %vm242, %v360, %v359
    %v362 = vrot.slane %v204, 4
    %v363 = vsel %vm244, %v362, %v361
    %v364 = vrot.slane %v205, 3
    %v365 = vsel %vm247, %v364, %v363
    %v366 = vrot.slane %v206, 2
    %v367 = vsel %vm250, %v366, %v365
    %v369 = vrot.slane %v199, 2
    %v370 = vrot.slane %v200, 1
    %v371 = vsel %vm233, %v370, %v369
    %v372 = vsel %vm236, %v201, %v371
    %v373 = vrot.slane %v202, 7
    %v374 = vsel %vm239, %v373, %v372
    %v375 = vrot.slane %v203, 6
    %v376 = vsel %vm242, %v375, %v374
    %v377 = vrot.slane %v204, 5
    %v378 = vsel %vm244, %v377, %v376
    %v379 = vrot.slane %v205, 4
    %v380 = vsel %vm247, %v379, %v378
    %v381 = vrot.slane %v206, 3
    %v382 = vsel %vm250, %v381, %v380
    %v384 = vrot.slane %v199, 3
    %v385 = vrot.slane %v200, 2
    %v386 = vsel %vm233, %v385, %v384
    %v387 = vrot.slane %v201, 1
    %v388 = vsel %vm236, %v387, %v386
    %v389 = vsel %vm239, %v202, %v388
    %v390 = vrot.slane %v203, 7
    %v391 = vsel %vm242, %v390, %v389
    %v392 = vrot.slane %v204, 6
    %v393 = vsel %vm244, %v392, %v391
    %v394 = vrot.slane %v205, 5
    %v395 = vsel %vm247, %v394, %v393
    %v396 = vrot.slane %v206, 4
    %v397 = vsel %vm250, %v396, %v395
    %v399 = vrot.slane %v199, 4
    %v400 = vrot.slane %v200, 3
    %v401 = vsel %vm233, %v400, %v399
    %v402 = vrot.slane %v201, 2
    %v403 = vsel %vm236, %v402, %v401
    %v404 = vrot.slane %v202, 1
    %v405 = vsel %vm239, %v404, %v403
    %v406 = vsel %vm242, %v203, %v405
    %v407 = vrot.slane %v204, 7
    %v408 = vsel %vm244, %v407, %v406
    %v409 = vrot.slane %v205, 6
    %v410 = vsel %vm247, %v409, %v408
    %v411 = vrot.slane %v206, 5
    %v412 = vsel %vm250, %v411, %v410
    %v414 = vpack.c.bf16 %v367, %v352
    %v415 = vpack.c.bf16 %v397, %v382
    %v416 = vpack.c.bf16 %v412, %v412
    %v417 = vld [vmem:[#allocation10] sm:$0xff]
    %v418 = vld [vmem:[#allocation10 + $0x8] sm:$0xff]
    %v419 = vld [vmem:[#allocation10 + $0x10] sm:$0xff]
    %v420 = vld [vmem:[#allocation10 + $0x18] sm:$0xff]
    %v421 = vld [vmem:[#allocation10 + $0x20] sm:$0x11]
    %v422 = vld [vmem:[#allocation10 + $0x28] sm:$0x11]
    %v423 = vld [vmem:[#allocation10 + $0x30] sm:$0x11]
    %v424 = vld [vmem:[#allocation10 + $0x38] sm:$0x11]
    %v425 = vld [vmem:[#allocation12] sm:$0xff]
    %v427 = vlaneseq
    %v428 = vshrl.u32 %v427, 7
    %v429 = vsub.s32 0, %v428
    %v430 = vrot.slane %v425, %v429
    %v431 = vlaneseq
    %v432 = vshrl.u32 %v431, 7
    %v433 = vsub.s32 1, %v432
    %v434 = vrot.slane %v425, %v433
    %v435 = vlaneseq
    %v436 = vshrl.u32 %v435, 7
    %v437 = vsub.s32 2, %v436
    %v438 = vrot.slane %v425, %v437
    %v439 = vlaneseq
    %v440 = vshrl.u32 %v439, 7
    %v441 = vsub.s32 3, %v440
    %v442 = vrot.slane %v425, %v441
    %v443 = vlaneseq
    %v444 = vshrl.u32 %v443, 7
    %v445 = vsub.s32 4, %v444
    %v446 = vrot.slane %v425, %v445
    %v447 = vlaneseq
    %v448 = vshrl.u32 %v447, 7
    %v449 = vsub.s32 5, %v448
    %v450 = vrot.slane %v425, %v449
    %v451 = vlaneseq
    %v452 = vshrl.u32 %v451, 7
    %v453 = vsub.s32 6, %v452
    %v454 = vrot.slane %v425, %v453
    %v455 = vlaneseq
    %v456 = vshrl.u32 %v455, 7
    %v457 = vsub.s32 7, %v456
    %v458 = vrot.slane %v425, %v457
    %v475 = vunpack.c.l.b16 %v417
    %v476 = vunpack.c.h.b16 %v417
    %v477 = vunpack.c.l.b16 %v418
    %v478 = vunpack.c.h.b16 %v418
    %v479 = vunpack.c.l.b16 %v419
    %v480 = vunpack.c.h.b16 %v419
    %v481 = vunpack.c.l.b16 %v420
    %v482 = vunpack.c.h.b16 %v420
    %v483 = vunpack.c.l.b16 %v421
    %v484 = vunpack.c.h.b16 %v421
    %v485 = vunpack.c.l.b16 %v422
    %v486 = vunpack.c.h.b16 %v422
    %v487 = vunpack.c.l.b16 %v423
    %v488 = vunpack.c.h.b16 %v423
    %v489 = vunpack.c.l.b16 %v424
    %v490 = vunpack.c.h.b16 %v424
    %v491 = vpack.c.b16 %v483, %v475
    %v492 = vpack.c.b16 %v484, %v476
    %v493 = vpack.c.b16 %v485, %v477
    %v494 = vpack.c.b16 %v486, %v478
    %v495 = vpack.c.b16 %v487, %v479
    %v496 = vpack.c.b16 %v488, %v480
    %v497 = vpack.c.b16 %v489, %v481
    %v498 = vpack.c.b16 %v490, %v482
    %v500 = vsel %vm252, %v414, 0
    %v503 = vsel %vm252, %v415, 0
    %v506 = vsel %vm252, %v416, 0
    %vm508 = vcmask 1043456
    %vm509 = vcmask 1044480
    %v510 = vsel %vm508, 4294967295, 65535
    %v511 = vsel %vm509, %v510, 0
    %v513 = vand.u32 %v491, %v511
    %v516 = vand.u32 %v492, %v511
    %v519 = vand.u32 %v493, %v511
    %v522 = vand.u32 %v494, %v511
    %v525 = vand.u32 %v495, %v511
    %v528 = vand.u32 %v496, %v511
    %v531 = vand.u32 %v497, %v511
    %v534 = vand.u32 %v498, %v511
    %536 = vmatprep.subr.bf16.mxu0 0
    %537 = vmatpush1.bf16.msra.mxu0 0
    %538 = vmatprep.subr.bf16.mxu0 0
    %539 = vmatpush1.bf16.msra.mxu0 0
    %540 = vmatprep.subr.bf16.mxu0 0
    %541 = vmatpush1.bf16.msra.mxu0 0
    %542 = vmatprep.subr.bf16.mxu0 0
    %543 = vmatpush1.bf16.msra.mxu0 0
    %544 = vmatprep.subr.bf16.mxu0 0
    %545 = vmatpush1.bf16.msra.mxu0 0
    %546 = vmatprep.subr.bf16.mxu0 0
    %547 = vmatpush1.bf16.msra.mxu0 0
    %548 = vmatprep.subr.bf16.mxu0 0
    %549 = vmatpush1.bf16.msra.mxu0 0
    %550 = vmatprep.subr.bf16.mxu0 %v516
    %551 = vmatpush1.bf16.msra.mxu0 %v513
    %552 = vmatprep.subr.bf16.mxu0 0
    %553 = vmatpush2.bf16.msra.mxu0 0
    %554 = vmatprep.subr.bf16.mxu0 0
    %555 = vmatpush2.bf16.msra.mxu0 0
    %556 = vmatprep.subr.bf16.mxu0 0
    %557 = vmatpush2.bf16.msra.mxu0 0
    %558 = vmatprep.subr.bf16.mxu0 0
    %559 = vmatpush2.bf16.msra.mxu0 0
    %560 = vmatprep.subr.bf16.mxu0 0
    %561 = vmatpush2.bf16.msra.mxu0 0
    %562 = vmatprep.subr.bf16.mxu0 0
    %563 = vmatpush2.bf16.msra.mxu0 0
    %564 = vmatprep.subr.bf16.mxu0 0
    %565 = vmatpush2.bf16.msra.mxu0 0
    %566 = vmatprep.subr.bf16.mxu0 0
    %567 = vmatpush2.bf16.msra.mxu0 0
    %568 = vmatprep.mubr.bf16.mxu0 0
    %569 = vmatmul.mubr.bf16.gmra.mxu0 %v500
    %v570 = vpop.f32.mrf.mxu0
    %v571 = vadd.f32 %v430, %v570
    %v572 = vpop.f32.mrf.mxu0
    %v573 = vadd.f32 %v434, %v572
    %v574 = vpop.f32.mrf.mxu0
    %v575 = vadd.f32 %v430, %v574
    %v576 = vpop.f32.mrf.mxu0
    %v577 = vadd.f32 %v434, %v576
    %578 = vmatprep.mubr.bf16.mxu0 0
    %579 = vmatmul.mubr.bf16.gmra.mxu0 %v503
    %v580 = vpop.f32.mrf.mxu0
    %v581 = vadd.f32 %v430, %v580
    %v582 = vpop.f32.mrf.mxu0
    %v583 = vadd.f32 %v434, %v582
    %v584 = vpop.f32.mrf.mxu0
    %v585 = vadd.f32 %v430, %v584
    %v586 = vpop.f32.mrf.mxu0
    %v587 = vadd.f32 %v434, %v586
    %588 = vmatprep.mubr.bf16.mxu0 0
    %589 = vmatmul.mubr.bf16.gmra.mxu0 %v506
    %v590 = vpop.f32.mrf.mxu0
    %v591 = vadd.f32 %v430, %v590
    %v592 = vpop.f32.mrf.mxu0
    %v593 = vadd.f32 %v434, %v592
    %v594 = vpop.f32.mrf.mxu0
    %v595 = vpop.f32.mrf.mxu0
    %596 = vdwg.mxu0
    %597 = vmatprep.subr.bf16.mxu0 0
    %598 = vmatpush1.bf16.msra.mxu0 0
    %599 = vmatprep.subr.bf16.mxu0 0
    %600 = vmatpush1.bf16.msra.mxu0 0
    %601 = vmatprep.subr.bf16.mxu0 0
    %602 = vmatpush1.bf16.msra.mxu0 0
    %603 = vmatprep.subr.bf16.mxu0 0
    %604 = vmatpush1.bf16.msra.mxu0 0
    %605 = vmatprep.subr.bf16.mxu0 0
    %606 = vmatpush1.bf16.msra.mxu0 0
    %607 = vmatprep.subr.bf16.mxu0 0
    %608 = vmatpush1.bf16.msra.mxu0 0
    %609 = vmatprep.subr.bf16.mxu0 0
    %610 = vmatpush1.bf16.msra.mxu0 0
    %611 = vmatprep.subr.bf16.mxu0 %v522
    %612 = vmatpush1.bf16.msra.mxu0 %v519
    %613 = vmatprep.subr.bf16.mxu0 0
    %614 = vmatpush2.bf16.msra.mxu0 0
    %615 = vmatprep.subr.bf16.mxu0 0
    %616 = vmatpush2.bf16.msra.mxu0 0
    %617 = vmatprep.subr.bf16.mxu0 0
    %618 = vmatpush2.bf16.msra.mxu0 0
    %619 = vmatprep.subr.bf16.mxu0 0
    %620 = vmatpush2.bf16.msra.mxu0 0
    %621 = vmatprep.subr.bf16.mxu0 0
    %622 = vmatpush2.bf16.msra.mxu0 0
    %623 = vmatprep.subr.bf16.mxu0 0
    %624 = vmatpush2.bf16.msra.mxu0 0
    %625 = vmatprep.subr.bf16.mxu0 0
    %626 = vmatpush2.bf16.msra.mxu0 0
    %627 = vmatprep.subr.bf16.mxu0 0
    %628 = vmatpush2.bf16.msra.mxu0 0
    %629 = vmatprep.mubr.bf16.mxu0 0
    %630 = vmatmul.mubr.bf16.gmra.mxu0 %v500
    %v631 = vpop.f32.mrf.mxu0
    %v632 = vadd.f32 %v438, %v631
    %v633 = vpop.f32.mrf.mxu0
    %v634 = vadd.f32 %v442, %v633
    %v635 = vpop.f32.mrf.mxu0
    %v636 = vadd.f32 %v438, %v635
    %v637 = vpop.f32.mrf.mxu0
    %v638 = vadd.f32 %v442, %v637
    %639 = vmatprep.mubr.bf16.mxu0 0
    %640 = vmatmul.mubr.bf16.gmra.mxu0 %v503
    %v641 = vpop.f32.mrf.mxu0
    %v642 = vadd.f32 %v438, %v641
    %v643 = vpop.f32.mrf.mxu0
    %v644 = vadd.f32 %v442, %v643
    %v645 = vpop.f32.mrf.mxu0
    %v646 = vadd.f32 %v438, %v645
    %v647 = vpop.f32.mrf.mxu0
    %v648 = vadd.f32 %v442, %v647
    %649 = vmatprep.mubr.bf16.mxu0 0
    %650 = vmatmul.mubr.bf16.gmra.mxu0 %v506
    %v651 = vpop.f32.mrf.mxu0
    %v652 = vadd.f32 %v438, %v651
    %v653 = vpop.f32.mrf.mxu0
    %v654 = vadd.f32 %v442, %v653
    %v655 = vpop.f32.mrf.mxu0
    %v656 = vpop.f32.mrf.mxu0
    %657 = vdwg.mxu0
    %658 = vmatprep.subr.bf16.mxu0 0
    %659 = vmatpush1.bf16.msra.mxu0 0
    %660 = vmatprep.subr.bf16.mxu0 0
    %661 = vmatpush1.bf16.msra.mxu0 0
    %662 = vmatprep.subr.bf16.mxu0 0
    %663 = vmatpush1.bf16.msra.mxu0 0
    %664 = vmatprep.subr.bf16.mxu0 0
    %665 = vmatpush1.bf16.msra.mxu0 0
    %666 = vmatprep.subr.bf16.mxu0 0
    %667 = vmatpush1.bf16.msra.mxu0 0
    %668 = vmatprep.subr.bf16.mxu0 0
    %669 = vmatpush1.bf16.msra.mxu0 0
    %670 = vmatprep.subr.bf16.mxu0 0
    %671 = vmatpush1.bf16.msra.mxu0 0
    %672 = vmatprep.subr.bf16.mxu0 %v528
    %673 = vmatpush1.bf16.msra.mxu0 %v525
    %674 = vmatprep.subr.bf16.mxu0 0
    %675 = vmatpush2.bf16.msra.mxu0 0
    %676 = vmatprep.subr.bf16.mxu0 0
    %677 = vmatpush2.bf16.msra.mxu0 0
    %678 = vmatprep.subr.bf16.mxu0 0
    %679 = vmatpush2.bf16.msra.mxu0 0
    %680 = vmatprep.subr.bf16.mxu0 0
    %681 = vmatpush2.bf16.msra.mxu0 0
    %682 = vmatprep.subr.bf16.mxu0 0
    %683 = vmatpush2.bf16.msra.mxu0 0
    %684 = vmatprep.subr.bf16.mxu0 0
    %685 = vmatpush2.bf16.msra.mxu0 0
    %686 = vmatprep.subr.bf16.mxu0 0
    %687 = vmatpush2.bf16.msra.mxu0 0
    %688 = vmatprep.subr.bf16.mxu0 0
    %689 = vmatpush2.bf16.msra.mxu0 0
    %690 = vmatprep.mubr.bf16.mxu0 0
    %691 = vmatmul.mubr.bf16.gmra.mxu0 %v500
    %v692 = vpop.f32.mrf.mxu0
    %v693 = vadd.f32 %v446, %v692
    %v694 = vpop.f32.mrf.mxu0
    %v695 = vadd.f32 %v450, %v694
    %v696 = vpop.f32.mrf.mxu0
    %v697 = vadd.f32 %v446, %v696
    %v698 = vpop.f32.mrf.mxu0
    %v699 = vadd.f32 %v450, %v698
    %700 = vmatprep.mubr.bf16.mxu0 0
    %701 = vmatmul.mubr.bf16.gmra.mxu0 %v503
    %v702 = vpop.f32.mrf.mxu0
    %v703 = vadd.f32 %v446, %v702
    %v704 = vpop.f32.mrf.mxu0
    %v705 = vadd.f32 %v450, %v704
    %v706 = vpop.f32.mrf.mxu0
    %v707 = vadd.f32 %v446, %v706
    %v708 = vpop.f32.mrf.mxu0
    %v709 = vadd.f32 %v450, %v708
    %710 = vmatprep.mubr.bf16.mxu0 0
    %711 = vmatmul.mubr.bf16.gmra.mxu0 %v506
    %v712 = vpop.f32.mrf.mxu0
    %v713 = vadd.f32 %v446, %v712
    %v714 = vpop.f32.mrf.mxu0
    %v715 = vadd.f32 %v450, %v714
    %v716 = vpop.f32.mrf.mxu0
    %v717 = vpop.f32.mrf.mxu0
    %718 = vdwg.mxu0
    %719 = vmatprep.subr.bf16.mxu0 0
    %720 = vmatpush1.bf16.msra.mxu0 0
    %721 = vmatprep.subr.bf16.mxu0 0
    %722 = vmatpush1.bf16.msra.mxu0 0
    %723 = vmatprep.subr.bf16.mxu0 0
    %724 = vmatpush1.bf16.msra.mxu0 0
    %725 = vmatprep.subr.bf16.mxu0 0
    %726 = vmatpush1.bf16.msra.mxu0 0
    %727 = vmatprep.subr.bf16.mxu0 0
    %728 = vmatpush1.bf16.msra.mxu0 0
    %729 = vmatprep.subr.bf16.mxu0 0
    %730 = vmatpush1.bf16.msra.mxu0 0
    %731 = vmatprep.subr.bf16.mxu0 0
    %732 = vmatpush1.bf16.msra.mxu0 0
    %733 = vmatprep.subr.bf16.mxu0 %v534
    %734 = vmatpush1.bf16.msra.mxu0 %v531
    %735 = vmatprep.subr.bf16.mxu0 0
    %736 = vmatpush2.bf16.msra.mxu0 0
    %737 = vmatprep.subr.bf16.mxu0 0
    %738 = vmatpush2.bf16.msra.mxu0 0
    %739 = vmatprep.subr.bf16.mxu0 0
    %740 = vmatpush2.bf16.msra.mxu0 0
    %741 = vmatprep.subr.bf16.mxu0 0
    %742 = vmatpush2.bf16.msra.mxu0 0
    %743 = vmatprep.subr.bf16.mxu0 0
    %744 = vmatpush2.bf16.msra.mxu0 0
    %745 = vmatprep.subr.bf16.mxu0 0
    %746 = vmatpush2.bf16.msra.mxu0 0
    %747 = vmatprep.subr.bf16.mxu0 0
    %748 = vmatpush2.bf16.msra.mxu0 0
    %749 = vmatprep.subr.bf16.mxu0 0
    %750 = vmatpush2.bf16.msra.mxu0 0
    %751 = vmatprep.mubr.bf16.mxu0 0
    %752 = vmatmul.mubr.bf16.gmra.mxu0 %v500
    %v753 = vpop.f32.mrf.mxu0
    %v754 = vadd.f32 %v454, %v753
    %v755 = vpop.f32.mrf.mxu0
    %v756 = vadd.f32 %v458, %v755
    %v757 = vpop.f32.mrf.mxu0
    %v758 = vadd.f32 %v454, %v757
    %v759 = vpop.f32.mrf.mxu0
    %v760 = vadd.f32 %v458, %v759
    %761 = vmatprep.mubr.bf16.mxu0 0
    %762 = vmatmul.mubr.bf16.gmra.mxu0 %v503
    %v763 = vpop.f32.mrf.mxu0
    %v764 = vadd.f32 %v454, %v763
    %v765 = vpop.f32.mrf.mxu0
    %v766 = vadd.f32 %v458, %v765
    %v767 = vpop.f32.mrf.mxu0
    %v768 = vadd.f32 %v454, %v767
    %v769 = vpop.f32.mrf.mxu0
    %v770 = vadd.f32 %v458, %v769
    %771 = vmatprep.mubr.bf16.mxu0 0
    %772 = vmatmul.mubr.bf16.gmra.mxu0 %v506
    %v773 = vpop.f32.mrf.mxu0
    %v774 = vadd.f32 %v454, %v773
    %v775 = vpop.f32.mrf.mxu0
    %v776 = vadd.f32 %v458, %v775
    %v777 = vpop.f32.mrf.mxu0
    %v778 = vpop.f32.mrf.mxu0
    %779 = vdwg.mxu0
    %s780 = smul.u32 4, 32
    %s781 = smul.u32 %s780, 8
    %s782 = sshll.u32 %s781, 4
    %783 = dma.done [#allocation6], %s782
    %v784 = vld [vmem:[#allocation2] sm:$0xff]
    %v785 = vld [vmem:[#allocation2 + $0x8] sm:$0xff]
    %v786 = vld [vmem:[#allocation2 + $0x10] sm:$0xff]
    %v787 = vld [vmem:[#allocation2 + $0x18] sm:$0xff]
    %v788 = vld [vmem:[#allocation2 + $0x20] sm:$0xff]
    %v789 = vld [vmem:[#allocation2 + $0x28] sm:$0xff]
    %v790 = vld [vmem:[#allocation2 + $0x30] sm:$0xff]
    %v791 = vld [vmem:[#allocation2 + $0x38] sm:$0xff]
    %v792 = vld [vmem:[#allocation2 + $0x40] sm:$0xff]
    %v793 = vld [vmem:[#allocation2 + $0x48] sm:$0xff]
    %v794 = vld [vmem:[#allocation2 + $0x50] sm:$0xff]
    %v795 = vld [vmem:[#allocation2 + $0x58] sm:$0xff]
    %v796 = vld [vmem:[#allocation2 + $0x60] sm:$0xff]
    %v797 = vld [vmem:[#allocation2 + $0x68] sm:$0xff]
    %v798 = vld [vmem:[#allocation2 + $0x70] sm:$0xff]
    %v799 = vld [vmem:[#allocation2 + $0x78] sm:$0xff]
    %v800 = vld [vmem:[#allocation2 + $0x80] sm:$0xff]
    %v801 = vld [vmem:[#allocation2 + $0x88] sm:$0xff]
    %v802 = vld [vmem:[#allocation2 + $0x90] sm:$0xff]
    %v803 = vld [vmem:[#allocation2 + $0x98] sm:$0xff]
    %v804 = vld [vmem:[#allocation2 + $0xa0] sm:$0xff]
    %v805 = vld [vmem:[#allocation2 + $0xa8] sm:$0xff]
    %v806 = vld [vmem:[#allocation2 + $0xb0] sm:$0xff]
    %v807 = vld [vmem:[#allocation2 + $0xb8] sm:$0xff]
    %v808 = vld [vmem:[#allocation2 + $0xc0] sm:$0xff]
    %v809 = vld [vmem:[#allocation2 + $0xc8] sm:$0xff]
    %v810 = vld [vmem:[#allocation2 + $0xd0] sm:$0xff]
    %v811 = vld [vmem:[#allocation2 + $0xd8] sm:$0xff]
    %v812 = vld [vmem:[#allocation2 + $0xe0] sm:$0xff]
    %v813 = vld [vmem:[#allocation2 + $0xe8] sm:$0xff]
    %v814 = vld [vmem:[#allocation2 + $0xf0] sm:$0xff]
    %v815 = vld [vmem:[#allocation2 + $0xf8] sm:$0xff]
    %v816 = vld [vmem:[#allocation2 + $0x100] sm:$0xff]
    %v817 = vld [vmem:[#allocation2 + $0x108] sm:$0xff]
    %v818 = vld [vmem:[#allocation2 + $0x110] sm:$0xff]
    %v819 = vld [vmem:[#allocation2 + $0x118] sm:$0xff]
    %v820 = vld [vmem:[#allocation2 + $0x120] sm:$0xff]
    %v821 = vld [vmem:[#allocation2 + $0x128] sm:$0xff]
    %v822 = vld [vmem:[#allocation2 + $0x130] sm:$0xff]
    %v823 = vld [vmem:[#allocation2 + $0x138] sm:$0xff]
    %v824 = vld [vmem:[#allocation2 + $0x140] sm:$0xff]
    %v825 = vld [vmem:[#allocation2 + $0x148] sm:$0xff]
    %v826 = vld [vmem:[#allocation2 + $0x150] sm:$0xff]
    %v827 = vld [vmem:[#allocation2 + $0x158] sm:$0xff]
    %v828 = vld [vmem:[#allocation2 + $0x160] sm:$0xff]
    %v829 = vld [vmem:[#allocation2 + $0x168] sm:$0xff]
    %v830 = vld [vmem:[#allocation2 + $0x170] sm:$0xff]
    %v831 = vld [vmem:[#allocation2 + $0x178] sm:$0xff]
    %v832 = vld [vmem:[#allocation2 + $0x180] sm:$0xff]
    %v833 = vld [vmem:[#allocation2 + $0x188] sm:$0xff]
    %v834 = vld [vmem:[#allocation2 + $0x190] sm:$0xff]
    %v835 = vld [vmem:[#allocation2 + $0x198] sm:$0xff]
    %v836 = vld [vmem:[#allocation2 + $0x1a0] sm:$0xff]
    %v837 = vld [vmem:[#allocation2 + $0x1a8] sm:$0xff]
    %v838 = vld [vmem:[#allocation2 + $0x1b0] sm:$0xff]
    %v839 = vld [vmem:[#allocation2 + $0x1b8] sm:$0xff]
    %v840 = vld [vmem:[#allocation2 + $0x1c0] sm:$0xff]
    %v841 = vld [vmem:[#allocation2 + $0x1c8] sm:$0xff]
    %v842 = vld [vmem:[#allocation2 + $0x1d0] sm:$0xff]
    %v843 = vld [vmem:[#allocation2 + $0x1d8] sm:$0xff]
    %v844 = vld [vmem:[#allocation2 + $0x1e0] sm:$0xff]
    %v845 = vld [vmem:[#allocation2 + $0x1e8] sm:$0xff]
    %v846 = vld [vmem:[#allocation2 + $0x1f0] sm:$0xff]
    %v847 = vld [vmem:[#allocation2 + $0x1f8] sm:$0xff]
    %v848 = vld [vmem:[#allocation2 + $0x200] sm:$0xff]
    %v849 = vld [vmem:[#allocation2 + $0x208] sm:$0xff]
    %v850 = vld [vmem:[#allocation2 + $0x210] sm:$0xff]
    %v851 = vld [vmem:[#allocation2 + $0x218] sm:$0xff]
    %v852 = vld [vmem:[#allocation2 + $0x220] sm:$0xff]
    %v853 = vld [vmem:[#allocation2 + $0x228] sm:$0xff]
    %v854 = vld [vmem:[#allocation2 + $0x230] sm:$0xff]
    %v855 = vld [vmem:[#allocation2 + $0x238] sm:$0xff]
    %v856 = vld [vmem:[#allocation2 + $0x240] sm:$0xff]
    %v857 = vld [vmem:[#allocation2 + $0x248] sm:$0xff]
    %v858 = vld [vmem:[#allocation2 + $0x250] sm:$0xff]
    %v859 = vld [vmem:[#allocation2 + $0x258] sm:$0xff]
    %v860 = vld [vmem:[#allocation2 + $0x260] sm:$0xff]
    %v861 = vld [vmem:[#allocation2 + $0x268] sm:$0xff]
    %v862 = vld [vmem:[#allocation2 + $0x270] sm:$0xff]
    %v863 = vld [vmem:[#allocation2 + $0x278] sm:$0xff]
    %v864 = vld [vmem:[#allocation2 + $0x280] sm:$0xff]
    %v865 = vld [vmem:[#allocation2 + $0x288] sm:$0xff]
    %v866 = vld [vmem:[#allocation2 + $0x290] sm:$0xff]
    %v867 = vld [vmem:[#allocation2 + $0x298] sm:$0xff]
    %v868 = vld [vmem:[#allocation2 + $0x2a0] sm:$0xff]
    %v869 = vld [vmem:[#allocation2 + $0x2a8] sm:$0xff]
    %v870 = vld [vmem:[#allocation2 + $0x2b0] sm:$0xff]
    %v871 = vld [vmem:[#allocation2 + $0x2b8] sm:$0xff]
    %v872 = vld [vmem:[#allocation2 + $0x2c0] sm:$0xff]
    %v873 = vld [vmem:[#allocation2 + $0x2c8] sm:$0xff]
    %v874 = vld [vmem:[#allocation2 + $0x2d0] sm:$0xff]
    %v875 = vld [vmem:[#allocation2 + $0x2d8] sm:$0xff]
    %v876 = vld [vmem:[#allocation2 + $0x2e0] sm:$0xff]
    %v877 = vld [vmem:[#allocation2 + $0x2e8] sm:$0xff]
    %v878 = vld [vmem:[#allocation2 + $0x2f0] sm:$0xff]
    %v879 = vld [vmem:[#allocation2 + $0x2f8] sm:$0xff]
    %v880 = vld [vmem:[#allocation2 + $0x300] sm:$0xff]
    %v881 = vld [vmem:[#allocation2 + $0x308] sm:$0xff]
    %v882 = vld [vmem:[#allocation2 + $0x310] sm:$0xff]
    %v883 = vld [vmem:[#allocation2 + $0x318] sm:$0xff]
    %v884 = vld [vmem:[#allocation2 + $0x320] sm:$0xff]
    %v885 = vld [vmem:[#allocation2 + $0x328] sm:$0xff]
    %v886 = vld [vmem:[#allocation2 + $0x330] sm:$0xff]
    %v887 = vld [vmem:[#allocation2 + $0x338] sm:$0xff]
    %v888 = vld [vmem:[#allocation2 + $0x340] sm:$0xff]
    %v889 = vld [vmem:[#allocation2 + $0x348] sm:$0xff]
    %v890 = vld [vmem:[#allocation2 + $0x350] sm:$0xff]
    %v891 = vld [vmem:[#allocation2 + $0x358] sm:$0xff]
    %v892 = vld [vmem:[#allocation2 + $0x360] sm:$0xff]
    %v893 = vld [vmem:[#allocation2 + $0x368] sm:$0xff]
    %v894 = vld [vmem:[#allocation2 + $0x370] sm:$0xff]
    %v895 = vld [vmem:[#allocation2 + $0x378] sm:$0xff]
    %v896 = vld [vmem:[#allocation2 + $0x380] sm:$0xff]
    %v897 = vld [vmem:[#allocation2 + $0x388] sm:$0xff]
    %v898 = vld [vmem:[#allocation2 + $0x390] sm:$0xff]
    %v899 = vld [vmem:[#allocation2 + $0x398] sm:$0xff]
    %v900 = vld [vmem:[#allocation2 + $0x3a0] sm:$0xff]
    %v901 = vld [vmem:[#allocation2 + $0x3a8] sm:$0xff]
    %v902 = vld [vmem:[#allocation2 + $0x3b0] sm:$0xff]
    %v903 = vld [vmem:[#allocation2 + $0x3b8] sm:$0xff]
    %v904 = vld [vmem:[#allocation2 + $0x3c0] sm:$0xff]
    %v905 = vld [vmem:[#allocation2 + $0x3c8] sm:$0xff]
    %v906 = vld [vmem:[#allocation2 + $0x3d0] sm:$0xff]
    %v907 = vld [vmem:[#allocation2 + $0x3d8] sm:$0xff]
    %v908 = vld [vmem:[#allocation2 + $0x3e0] sm:$0xff]
    %v909 = vld [vmem:[#allocation2 + $0x3e8] sm:$0xff]
    %v910 = vld [vmem:[#allocation2 + $0x3f0] sm:$0xff]
    %v911 = vld [vmem:[#allocation2 + $0x3f8] sm:$0xff]
    %v1040 = vunpack.c.l.b16 %v784
    %v1041 = vunpack.c.h.b16 %v784
    %v1042 = vunpack.c.l.b16 %v785
    %v1043 = vunpack.c.h.b16 %v785
    %v1044 = vunpack.c.l.b16 %v786
    %v1045 = vunpack.c.h.b16 %v786
    %v1046 = vunpack.c.l.b16 %v787
    %v1047 = vunpack.c.h.b16 %v787
    %v1048 = vunpack.c.l.b16 %v788
    %v1049 = vunpack.c.h.b16 %v788
    %v1050 = vunpack.c.l.b16 %v789
    %v1051 = vunpack.c.h.b16 %v789
    %v1052 = vunpack.c.l.b16 %v790
    %v1053 = vunpack.c.h.b16 %v790
    %v1054 = vunpack.c.l.b16 %v791
    %v1055 = vunpack.c.h.b16 %v791
    %v1056 = vunpack.c.l.b16 %v792
    %v1057 = vunpack.c.h.b16 %v792
    %v1058 = vunpack.c.l.b16 %v793
    %v1059 = vunpack.c.h.b16 %v793
    %v1060 = vunpack.c.l.b16 %v794
    %v1061 = vunpack.c.h.b16 %v794
    %v1062 = vunpack.c.l.b16 %v795
    %v1063 = vunpack.c.h.b16 %v795
    %v1064 = vunpack.c.l.b16 %v796
    %v1065 = vunpack.c.h.b16 %v796
    %v1066 = vunpack.c.l.b16 %v797
    %v1067 = vunpack.c.h.b16 %v797
    %v1068 = vunpack.c.l.b16 %v798
    %v1069 = vunpack.c.h.b16 %v798
    %v1070 = vunpack.c.l.b16 %v799
    %v1071 = vunpack.c.h.b16 %v799
    %v1072 = vunpack.c.l.b16 %v800
    %v1073 = vunpack.c.h.b16 %v800
    %v1074 = vunpack.c.l.b16 %v801
    %v1075 = vunpack.c.h.b16 %v801
    %v1076 = vunpack.c.l.b16 %v802
    %v1077 = vunpack.c.h.b16 %v802
    %v1078 = vunpack.c.l.b16 %v803
    %v1079 = vunpack.c.h.b16 %v803
    %v1080 = vunpack.c.l.b16 %v804
    %v1081 = vunpack.c.h.b16 %v804
    %v1082 = vunpack.c.l.b16 %v805
    %v1083 = vunpack.c.h.b16 %v805
    %v1084 = vunpack.c.l.b16 %v806
    %v1085 = vunpack.c.h.b16 %v806
    %v1086 = vunpack.c.l.b16 %v807
    %v1087 = vunpack.c.h.b16 %v807
    %v1088 = vunpack.c.l.b16 %v808
    %v1089 = vunpack.c.h.b16 %v808
    %v1090 = vunpack.c.l.b16 %v809
    %v1091 = vunpack.c.h.b16 %v809
    %v1092 = vunpack.c.l.b16 %v810
    %v1093 = vunpack.c.h.b16 %v810
    %v1094 = vunpack.c.l.b16 %v811
    %v1095 = vunpack.c.h.b16 %v811
    %v1096 = vunpack.c.l.b16 %v812
    %v1097 = vunpack.c.h.b16 %v812
    %v1098 = vunpack.c.l.b16 %v813
    %v1099 = vunpack.c.h.b16 %v813
    %v1100 = vunpack.c.l.b16 %v814
    %v1101 = vunpack.c.h.b16 %v814
    %v1102 = vunpack.c.l.b16 %v815
    %v1103 = vunpack.c.h.b16 %v815
    %v1104 = vunpack.c.l.b16 %v816
    %v1105 = vunpack.c.h.b16 %v816
    %v1106 = vunpack.c.l.b16 %v817
    %v1107 = vunpack.c.h.b16 %v817
    %v1108 = vunpack.c.l.b16 %v818
    %v1109 = vunpack.c.h.b16 %v818
    %v1110 = vunpack.c.l.b16 %v819
    %v1111 = vunpack.c.h.b16 %v819
    %v1112 = vunpack.c.l.b16 %v820
    %v1113 = vunpack.c.h.b16 %v820
    %v1114 = vunpack.c.l.b16 %v821
    %v1115 = vunpack.c.h.b16 %v821
    %v1116 = vunpack.c.l.b16 %v822
    %v1117 = vunpack.c.h.b16 %v822
    %v1118 = vunpack.c.l.b16 %v823
    %v1119 = vunpack.c.h.b16 %v823
    %v1120 = vunpack.c.l.b16 %v824
    %v1121 = vunpack.c.h.b16 %v824
    %v1122 = vunpack.c.l.b16 %v825
    %v1123 = vunpack.c.h.b16 %v825
    %v1124 = vunpack.c.l.b16 %v826
    %v1125 = vunpack.c.h.b16 %v826
    %v1126 = vunpack.c.l.b16 %v827
    %v1127 = vunpack.c.h.b16 %v827
    %v1128 = vunpack.c.l.b16 %v828
    %v1129 = vunpack.c.h.b16 %v828
    %v1130 = vunpack.c.l.b16 %v829
    %v1131 = vunpack.c.h.b16 %v829
    %v1132 = vunpack.c.l.b16 %v830
    %v1133 = vunpack.c.h.b16 %v830
    %v1134 = vunpack.c.l.b16 %v831
    %v1135 = vunpack.c.h.b16 %v831
    %v1136 = vunpack.c.l.b16 %v832
    %v1137 = vunpack.c.h.b16 %v832
    %v1138 = vunpack.c.l.b16 %v833
    %v1139 = vunpack.c.h.b16 %v833
    %v1140 = vunpack.c.l.b16 %v834
    %v1141 = vunpack.c.h.b16 %v834
    %v1142 = vunpack.c.l.b16 %v835
    %v1143 = vunpack.c.h.b16 %v835
    %v1144 = vunpack.c.l.b16 %v836
    %v1145 = vunpack.c.h.b16 %v836
    %v1146 = vunpack.c.l.b16 %v837
    %v1147 = vunpack.c.h.b16 %v837
    %v1148 = vunpack.c.l.b16 %v838
    %v1149 = vunpack.c.h.b16 %v838
    %v1150 = vunpack.c.l.b16 %v839
    %v1151 = vunpack.c.h.b16 %v839
    %v1152 = vunpack.c.l.b16 %v840
    %v1153 = vunpack.c.h.b16 %v840
    %v1154 = vunpack.c.l.b16 %v841
    %v1155 = vunpack.c.h.b16 %v841
    %v1156 = vunpack.c.l.b16 %v842
    %v1157 = vunpack.c.h.b16 %v842
    %v1158 = vunpack.c.l.b16 %v843
    %v1159 = vunpack.c.h.b16 %v843
    %v1160 = vunpack.c.l.b16 %v844
    %v1161 = vunpack.c.h.b16 %v844
    %v1162 = vunpack.c.l.b16 %v845
    %v1163 = vunpack.c.h.b16 %v845
    %v1164 = vunpack.c.l.b16 %v846
    %v1165 = vunpack.c.h.b16 %v846
    %v1166 = vunpack.c.l.b16 %v847
    %v1167 = vunpack.c.h.b16 %v847
    %v1168 = vunpack.c.l.b16 %v848
    %v1169 = vunpack.c.h.b16 %v848
    %v1170 = vunpack.c.l.b16 %v849
    %v1171 = vunpack.c.h.b16 %v849
    %v1172 = vunpack.c.l.b16 %v850
    %v1173 = vunpack.c.h.b16 %v850
    %v1174 = vunpack.c.l.b16 %v851
    %v1175 = vunpack.c.h.b16 %v851
    %v1176 = vunpack.c.l.b16 %v852
    %v1177 = vunpack.c.h.b16 %v852
    %v1178 = vunpack.c.l.b16 %v853
    %v1179 = vunpack.c.h.b16 %v853
    %v1180 = vunpack.c.l.b16 %v854
    %v1181 = vunpack.c.h.b16 %v854
    %v1182 = vunpack.c.l.b16 %v855
    %v1183 = vunpack.c.h.b16 %v855
    %v1184 = vunpack.c.l.b16 %v856
    %v1185 = vunpack.c.h.b16 %v856
    %v1186 = vunpack.c.l.b16 %v857
    %v1187 = vunpack.c.h.b16 %v857
    %v1188 = vunpack.c.l.b16 %v858
    %v1189 = vunpack.c.h.b16 %v858
    %v1190 = vunpack.c.l.b16 %v859
    %v1191 = vunpack.c.h.b16 %v859
    %v1192 = vunpack.c.l.b16 %v860
    %v1193 = vunpack.c.h.b16 %v860
    %v1194 = vunpack.c.l.b16 %v861
    %v1195 = vunpack.c.h.b16 %v861
    %v1196 = vunpack.c.l.b16 %v862
    %v1197 = vunpack.c.h.b16 %v862
    %v1198 = vunpack.c.l.b16 %v863
    %v1199 = vunpack.c.h.b16 %v863
    %v1200 = vunpack.c.l.b16 %v864
    %v1201 = vunpack.c.h.b16 %v864
    %v1202 = vunpack.c.l.b16 %v865
    %v1203 = vunpack.c.h.b16 %v865
    %v1204 = vunpack.c.l.b16 %v866
    %v1205 = vunpack.c.h.b16 %v866
    %v1206 = vunpack.c.l.b16 %v867
    %v1207 = vunpack.c.h.b16 %v867
    %v1208 = vunpack.c.l.b16 %v868
    %v1209 = vunpack.c.h.b16 %v868
    %v1210 = vunpack.c.l.b16 %v869
    %v1211 = vunpack.c.h.b16 %v869
    %v1212 = vunpack.c.l.b16 %v870
    %v1213 = vunpack.c.h.b16 %v870
    %v1214 = vunpack.c.l.b16 %v871
    %v1215 = vunpack.c.h.b16 %v871
    %v1216 = vunpack.c.l.b16 %v872
    %v1217 = vunpack.c.h.b16 %v872
    %v1218 = vunpack.c.l.b16 %v873
    %v1219 = vunpack.c.h.b16 %v873
    %v1220 = vunpack.c.l.b16 %v874
    %v1221 = vunpack.c.h.b16 %v874
    %v1222 = vunpack.c.l.b16 %v875
    %v1223 = vunpack.c.h.b16 %v875
    %v1224 = vunpack.c.l.b16 %v876
    %v1225 = vunpack.c.h.b16 %v876
    %v1226 = vunpack.c.l.b16 %v877
    %v1227 = vunpack.c.h.b16 %v877
    %v1228 = vunpack.c.l.b16 %v878
    %v1229 = vunpack.c.h.b16 %v878
    %v1230 = vunpack.c.l.b16 %v879
    %v1231 = vunpack.c.h.b16 %v879
    %v1232 = vunpack.c.l.b16 %v880
    %v1233 = vunpack.c.h.b16 %v880
    %v1234 = vunpack.c.l.b16 %v881
    %v1235 = vunpack.c.h.b16 %v881
    %v1236 = vunpack.c.l.b16 %v882
    %v1237 = vunpack.c.h.b16 %v882
    %v1238 = vunpack.c.l.b16 %v883
    %v1239 = vunpack.c.h.b16 %v883
    %v1240 = vunpack.c.l.b16 %v884
    %v1241 = vunpack.c.h.b16 %v884
    %v1242 = vunpack.c.l.b16 %v885
    %v1243 = vunpack.c.h.b16 %v885
    %v1244 = vunpack.c.l.b16 %v886
    %v1245 = vunpack.c.h.b16 %v886
    %v1246 = vunpack.c.l.b16 %v887
    %v1247 = vunpack.c.h.b16 %v887
    %v1248 = vunpack.c.l.b16 %v888
    %v1249 = vunpack.c.h.b16 %v888
    %v1250 = vunpack.c.l.b16 %v889
    %v1251 = vunpack.c.h.b16 %v889
    %v1252 = vunpack.c.l.b16 %v890
    %v1253 = vunpack.c.h.b16 %v890
    %v1254 = vunpack.c.l.b16 %v891
    %v1255 = vunpack.c.h.b16 %v891
    %v1256 = vunpack.c.l.b16 %v892
    %v1257 = vunpack.c.h.b16 %v892
    %v1258 = vunpack.c.l.b16 %v893
    %v1259 = vunpack.c.h.b16 %v893
    %v1260 = vunpack.c.l.b16 %v894
    %v1261 = vunpack.c.h.b16 %v894
    %v1262 = vunpack.c.l.b16 %v895
    %v1263 = vunpack.c.h.b16 %v895
    %v1264 = vunpack.c.l.b16 %v896
    %v1265 = vunpack.c.h.b16 %v896
    %v1266 = vunpack.c.l.b16 %v897
    %v1267 = vunpack.c.h.b16 %v897
    %v1268 = vunpack.c.l.b16 %v898
    %v1269 = vunpack.c.h.b16 %v898
    %v1270 = vunpack.c.l.b16 %v899
    %v1271 = vunpack.c.h.b16 %v899
    %v1272 = vunpack.c.l.b16 %v900
    %v1273 = vunpack.c.h.b16 %v900
    %v1274 = vunpack.c.l.b16 %v901
    %v1275 = vunpack.c.h.b16 %v901
    %v1276 = vunpack.c.l.b16 %v902
    %v1277 = vunpack.c.h.b16 %v902
    %v1278 = vunpack.c.l.b16 %v903
    %v1279 = vunpack.c.h.b16 %v903
    %v1280 = vunpack.c.l.b16 %v904
    %v1281 = vunpack.c.h.b16 %v904
    %v1282 = vunpack.c.l.b16 %v905
    %v1283 = vunpack.c.h.b16 %v905
    %v1284 = vunpack.c.l.b16 %v906
    %v1285 = vunpack.c.h.b16 %v906
    %v1286 = vunpack.c.l.b16 %v907
    %v1287 = vunpack.c.h.b16 %v907
    %v1288 = vunpack.c.l.b16 %v908
    %v1289 = vunpack.c.h.b16 %v908
    %v1290 = vunpack.c.l.b16 %v909
    %v1291 = vunpack.c.h.b16 %v909
    %v1292 = vunpack.c.l.b16 %v910
    %v1293 = vunpack.c.h.b16 %v910
    %v1294 = vunpack.c.l.b16 %v911
    %v1295 = vunpack.c.h.b16 %v911
    %v1296 = vpack.c.b16 %v1048, %v1040
    %v1297 = vpack.c.b16 %v1049, %v1041
    %v1298 = vpack.c.b16 %v1050, %v1042
    %v1299 = vpack.c.b16 %v1051, %v1043
    %v1300 = vpack.c.b16 %v1052, %v1044
    %v1301 = vpack.c.b16 %v1053, %v1045
    %v1302 = vpack.c.b16 %v1054, %v1046
    %v1303 = vpack.c.b16 %v1055, %v1047
    %v1304 = vpack.c.b16 %v1064, %v1056
    %v1305 = vpack.c.b16 %v1065, %v1057
    %v1306 = vpack.c.b16 %v1066, %v1058
    %v1307 = vpack.c.b16 %v1067, %v1059
    %v1308 = vpack.c.b16 %v1068, %v1060
    %v1309 = vpack.c.b16 %v1069, %v1061
    %v1310 = vpack.c.b16 %v1070, %v1062
    %v1311 = vpack.c.b16 %v1071, %v1063
    %v1312 = vpack.c.b16 %v1080, %v1072
    %v1313 = vpack.c.b16 %v1081, %v1073
    %v1314 = vpack.c.b16 %v1082, %v1074
    %v1315 = vpack.c.b16 %v1083, %v1075
    %v1316 = vpack.c.b16 %v1084, %v1076
    %v1317 = vpack.c.b16 %v1085, %v1077
    %v1318 = vpack.c.b16 %v1086, %v1078
    %v1319 = vpack.c.b16 %v1087, %v1079
    %v1320 = vpack.c.b16 %v1096, %v1088
    %v1321 = vpack.c.b16 %v1097, %v1089
    %v1322 = vpack.c.b16 %v1098, %v1090
    %v1323 = vpack.c.b16 %v1099, %v1091
    %v1324 = vpack.c.b16 %v1100, %v1092
    %v1325 = vpack.c.b16 %v1101, %v1093
    %v1326 = vpack.c.b16 %v1102, %v1094
    %v1327 = vpack.c.b16 %v1103, %v1095
    %v1328 = vpack.c.b16 %v1112, %v1104
    %v1329 = vpack.c.b16 %v1113, %v1105
    %v1330 = vpack.c.b16 %v1114, %v1106
    %v1331 = vpack.c.b16 %v1115, %v1107
    %v1332 = vpack.c.b16 %v1116, %v1108
    %v1333 = vpack.c.b16 %v1117, %v1109
    %v1334 = vpack.c.b16 %v1118, %v1110
    %v1335 = vpack.c.b16 %v1119, %v1111
    %v1336 = vpack.c.b16 %v1128, %v1120
    %v1337 = vpack.c.b16 %v1129, %v1121
    %v1338 = vpack.c.b16 %v1130, %v1122
    %v1339 = vpack.c.b16 %v1131, %v1123
    %v1340 = vpack.c.b16 %v1132, %v1124
    %v1341 = vpack.c.b16 %v1133, %v1125
    %v1342 = vpack.c.b16 %v1134, %v1126
    %v1343 = vpack.c.b16 %v1135, %v1127
    %v1344 = vpack.c.b16 %v1144, %v1136
    %v1345 = vpack.c.b16 %v1145, %v1137
    %v1346 = vpack.c.b16 %v1146, %v1138
    %v1347 = vpack.c.b16 %v1147, %v1139
    %v1348 = vpack.c.b16 %v1148, %v1140
    %v1349 = vpack.c.b16 %v1149, %v1141
    %v1350 = vpack.c.b16 %v1150, %v1142
    %v1351 = vpack.c.b16 %v1151, %v1143
    %v1352 = vpack.c.b16 %v1160, %v1152
    %v1353 = vpack.c.b16 %v1161, %v1153
    %v1354 = vpack.c.b16 %v1162, %v1154
    %v1355 = vpack.c.b16 %v1163, %v1155
    %v1356 = vpack.c.b16 %v1164, %v1156
    %v1357 = vpack.c.b16 %v1165, %v1157
    %v1358 = vpack.c.b16 %v1166, %v1158
    %v1359 = vpack.c.b16 %v1167, %v1159
    %v1360 = vpack.c.b16 %v1176, %v1168
    %v1361 = vpack.c.b16 %v1177, %v1169
    %v1362 = vpack.c.b16 %v1178, %v1170
    %v1363 = vpack.c.b16 %v1179, %v1171
    %v1364 = vpack.c.b16 %v1180, %v1172
    %v1365 = vpack.c.b16 %v1181, %v1173
    %v1366 = vpack.c.b16 %v1182, %v1174
    %v1367 = vpack.c.b16 %v1183, %v1175
    %v1368 = vpack.c.b16 %v1192, %v1184
    %v1369 = vpack.c.b16 %v1193, %v1185
    %v1370 = vpack.c.b16 %v1194, %v1186
    %v1371 = vpack.c.b16 %v1195, %v1187
    %v1372 = vpack.c.b16 %v1196, %v1188
    %v1373 = vpack.c.b16 %v1197, %v1189
    %v1374 = vpack.c.b16 %v1198, %v1190
    %v1375 = vpack.c.b16 %v1199, %v1191
    %v1376 = vpack.c.b16 %v1208, %v1200
    %v1377 = vpack.c.b16 %v1209, %v1201
    %v1378 = vpack.c.b16 %v1210, %v1202
    %v1379 = vpack.c.b16 %v1211, %v1203
    %v1380 = vpack.c.b16 %v1212, %v1204
    %v1381 = vpack.c.b16 %v1213, %v1205
    %v1382 = vpack.c.b16 %v1214, %v1206
    %v1383 = vpack.c.b16 %v1215, %v1207
    %v1384 = vpack.c.b16 %v1224, %v1216
    %v1385 = vpack.c.b16 %v1225, %v1217
    %v1386 = vpack.c.b16 %v1226, %v1218
    %v1387 = vpack.c.b16 %v1227, %v1219
    %v1388 = vpack.c.b16 %v1228, %v1220
    %v1389 = vpack.c.b16 %v1229, %v1221
    %v1390 = vpack.c.b16 %v1230, %v1222
    %v1391 = vpack.c.b16 %v1231, %v1223
    %v1392 = vpack.c.b16 %v1240, %v1232
    %v1393 = vpack.c.b16 %v1241, %v1233
    %v1394 = vpack.c.b16 %v1242, %v1234
    %v1395 = vpack.c.b16 %v1243, %v1235
    %v1396 = vpack.c.b16 %v1244, %v1236
    %v1397 = vpack.c.b16 %v1245, %v1237
    %v1398 = vpack.c.b16 %v1246, %v1238
    %v1399 = vpack.c.b16 %v1247, %v1239
    %v1400 = vpack.c.b16 %v1256, %v1248
    %v1401 = vpack.c.b16 %v1257, %v1249
    %v1402 = vpack.c.b16 %v1258, %v1250
    %v1403 = vpack.c.b16 %v1259, %v1251
    %v1404 = vpack.c.b16 %v1260, %v1252
    %v1405 = vpack.c.b16 %v1261, %v1253
    %v1406 = vpack.c.b16 %v1262, %v1254
    %v1407 = vpack.c.b16 %v1263, %v1255
    %v1408 = vpack.c.b16 %v1272, %v1264
    %v1409 = vpack.c.b16 %v1273, %v1265
    %v1410 = vpack.c.b16 %v1274, %v1266
    %v1411 = vpack.c.b16 %v1275, %v1267
    %v1412 = vpack.c.b16 %v1276, %v1268
    %v1413 = vpack.c.b16 %v1277, %v1269
    %v1414 = vpack.c.b16 %v1278, %v1270
    %v1415 = vpack.c.b16 %v1279, %v1271
    %v1416 = vpack.c.b16 %v1288, %v1280
    %v1417 = vpack.c.b16 %v1289, %v1281
    %v1418 = vpack.c.b16 %v1290, %v1282
    %v1419 = vpack.c.b16 %v1291, %v1283
    %v1420 = vpack.c.b16 %v1292, %v1284
    %v1421 = vpack.c.b16 %v1293, %v1285
    %v1422 = vpack.c.b16 %v1294, %v1286
    %v1423 = vpack.c.b16 %v1295, %v1287
    %1552 = vmatprep.subr.bf16.mxu0 %v1353
    %1553 = vmatpush1.bf16.msra.mxu0 %v1352
    %1554 = vmatprep.subr.bf16.mxu0 %v1345
    %1555 = vmatpush1.bf16.msra.mxu0 %v1344
    %1556 = vmatprep.subr.bf16.mxu0 %v1337
    %1557 = vmatpush1.bf16.msra.mxu0 %v1336
    %1558 = vmatprep.subr.bf16.mxu0 %v1329
    %1559 = vmatpush1.bf16.msra.mxu0 %v1328
    %1560 = vmatprep.subr.bf16.mxu0 %v1321
    %1561 = vmatpush1.bf16.msra.mxu0 %v1320
    %1562 = vmatprep.subr.bf16.mxu0 %v1313
    %1563 = vmatpush1.bf16.msra.mxu0 %v1312
    %1564 = vmatprep.subr.bf16.mxu0 %v1305
    %1565 = vmatpush1.bf16.msra.mxu0 %v1304
    %1566 = vmatprep.subr.bf16.mxu0 %v1297
    %1567 = vmatpush1.bf16.msra.mxu0 %v1296
    %1568 = vmatprep.subr.bf16.mxu0 %v1417
    %1569 = vmatpush2.bf16.msra.mxu0 %v1416
    %1570 = vmatprep.subr.bf16.mxu0 %v1409
    %1571 = vmatpush2.bf16.msra.mxu0 %v1408
    %1572 = vmatprep.subr.bf16.mxu0 %v1401
    %1573 = vmatpush2.bf16.msra.mxu0 %v1400
    %1574 = vmatprep.subr.bf16.mxu0 %v1393
    %1575 = vmatpush2.bf16.msra.mxu0 %v1392
    %1576 = vmatprep.subr.bf16.mxu0 %v1385
    %1577 = vmatpush2.bf16.msra.mxu0 %v1384
    %1578 = vmatprep.subr.bf16.mxu0 %v1377
    %1579 = vmatpush2.bf16.msra.mxu0 %v1376
    %1580 = vmatprep.subr.bf16.mxu0 %v1369
    %1581 = vmatpush2.bf16.msra.mxu0 %v1368
    %1582 = vmatprep.subr.bf16.mxu0 %v1361
    %1583 = vmatpush2.bf16.msra.mxu0 %v1360
    %1584 = vmatprep.mubr.bf16.mxu0 0
    %1585 = vmatmul.mubr.bf16.gmra.mxu0 0
    %v1586 = vpop.f32.mrf.mxu0
    %v1587 = vadd.f32 0.0, %v1586
    %v1588 = vpop.f32.mrf.mxu0
    %v1589 = vadd.f32 0.0, %v1588
    %v1590 = vpop.f32.mrf.mxu0
    %v1591 = vpop.f32.mrf.mxu0
    %1592 = vdwg.mxu0
    %1593 = vmatprep.subr.bf16.mxu0 %v1355
    %1594 = vmatpush1.bf16.msra.mxu0 %v1354
    %1595 = vmatprep.subr.bf16.mxu0 %v1347
    %1596 = vmatpush1.bf16.msra.mxu0 %v1346
    %1597 = vmatprep.subr.bf16.mxu0 %v1339
    %1598 = vmatpush1.bf16.msra.mxu0 %v1338
    %1599 = vmatprep.subr.bf16.mxu0 %v1331
    %1600 = vmatpush1.bf16.msra.mxu0 %v1330
    %1601 = vmatprep.subr.bf16.mxu0 %v1323
    %1602 = vmatpush1.bf16.msra.mxu0 %v1322
    %1603 = vmatprep.subr.bf16.mxu0 %v1315
    %1604 = vmatpush1.bf16.msra.mxu0 %v1314
    %1605 = vmatprep.subr.bf16.mxu0 %v1307
    %1606 = vmatpush1.bf16.msra.mxu0 %v1306
    %1607 = vmatprep.subr.bf16.mxu0 %v1299
    %1608 = vmatpush1.bf16.msra.mxu0 %v1298
    %1609 = vmatprep.subr.bf16.mxu0 %v1419
    %1610 = vmatpush2.bf16.msra.mxu0 %v1418
    %1611 = vmatprep.subr.bf16.mxu0 %v1411
    %1612 = vmatpush2.bf16.msra.mxu0 %v1410
    %1613 = vmatprep.subr.bf16.mxu0 %v1403
    %1614 = vmatpush2.bf16.msra.mxu0 %v1402
    %1615 = vmatprep.subr.bf16.mxu0 %v1395
    %1616 = vmatpush2.bf16.msra.mxu0 %v1394
    %1617 = vmatprep.subr.bf16.mxu0 %v1387
    %1618 = vmatpush2.bf16.msra.mxu0 %v1386
    %1619 = vmatprep.subr.bf16.mxu0 %v1379
    %1620 = vmatpush2.bf16.msra.mxu0 %v1378
    %1621 = vmatprep.subr.bf16.mxu0 %v1371
    %1622 = vmatpush2.bf16.msra.mxu0 %v1370
    %1623 = vmatprep.subr.bf16.mxu0 %v1363
    %1624 = vmatpush2.bf16.msra.mxu0 %v1362
    %1625 = vmatprep.mubr.bf16.mxu0 0
    %1626 = vmatmul.mubr.bf16.gmra.mxu0 0
    %v1627 = vpop.f32.mrf.mxu0
    %v1628 = vadd.f32 0.0, %v1627
    %v1629 = vpop.f32.mrf.mxu0
    %v1630 = vadd.f32 0.0, %v1629
    %v1631 = vpop.f32.mrf.mxu0
    %v1632 = vpop.f32.mrf.mxu0
    %1633 = vdwg.mxu0
    %1634 = vmatprep.subr.bf16.mxu0 %v1357
    %1635 = vmatpush1.bf16.msra.mxu0 %v1356
    %1636 = vmatprep.subr.bf16.mxu0 %v1349
    %1637 = vmatpush1.bf16.msra.mxu0 %v1348
    %1638 = vmatprep.subr.bf16.mxu0 %v1341
    %1639 = vmatpush1.bf16.msra.mxu0 %v1340
    %1640 = vmatprep.subr.bf16.mxu0 %v1333
    %1641 = vmatpush1.bf16.msra.mxu0 %v1332
    %1642 = vmatprep.subr.bf16.mxu0 %v1325
    %1643 = vmatpush1.bf16.msra.mxu0 %v1324
    %1644 = vmatprep.subr.bf16.mxu0 %v1317
    %1645 = vmatpush1.bf16.msra.mxu0 %v1316
    %1646 = vmatprep.subr.bf16.mxu0 %v1309
    %1647 = vmatpush1.bf16.msra.mxu0 %v1308
    %1648 = vmatprep.subr.bf16.mxu0 %v1301
    %1649 = vmatpush1.bf16.msra.mxu0 %v1300
    %1650 = vmatprep.subr.bf16.mxu0 %v1421
    %1651 = vmatpush2.bf16.msra.mxu0 %v1420
    %1652 = vmatprep.subr.bf16.mxu0 %v1413
    %1653 = vmatpush2.bf16.msra.mxu0 %v1412
    %1654 = vmatprep.subr.bf16.mxu0 %v1405
    %1655 = vmatpush2.bf16.msra.mxu0 %v1404
    %1656 = vmatprep.subr.bf16.mxu0 %v1397
    %1657 = vmatpush2.bf16.msra.mxu0 %v1396
    %1658 = vmatprep.subr.bf16.mxu0 %v1389
    %1659 = vmatpush2.bf16.msra.mxu0 %v1388
    %1660 = vmatprep.subr.bf16.mxu0 %v1381
    %1661 = vmatpush2.bf16.msra.mxu0 %v1380
    %1662 = vmatprep.subr.bf16.mxu0 %v1373
    %1663 = vmatpush2.bf16.msra.mxu0 %v1372
    %1664 = vmatprep.subr.bf16.mxu0 %v1365
    %1665 = vmatpush2.bf16.msra.mxu0 %v1364
    %1666 = vmatprep.mubr.bf16.mxu0 0
    %1667 = vmatmul.mubr.bf16.gmra.mxu0 0
    %v1668 = vpop.f32.mrf.mxu0
    %v1669 = vadd.f32 0.0, %v1668
    %v1670 = vpop.f32.mrf.mxu0
    %v1671 = vadd.f32 0.0, %v1670
    %v1672 = vpop.f32.mrf.mxu0
    %v1673 = vpop.f32.mrf.mxu0
    %1674 = vdwg.mxu0
    %1675 = vmatprep.subr.bf16.mxu0 %v1359
    %1676 = vmatpush1.bf16.msra.mxu0 %v1358
    %1677 = vmatprep.subr.bf16.mxu0 %v1351
    %1678 = vmatpush1.bf16.msra.mxu0 %v1350
    %1679 = vmatprep.subr.bf16.mxu0 %v1343
    %1680 = vmatpush1.bf16.msra.mxu0 %v1342
    %1681 = vmatprep.subr.bf16.mxu0 %v1335
    %1682 = vmatpush1.bf16.msra.mxu0 %v1334
    %1683 = vmatprep.subr.bf16.mxu0 %v1327
    %1684 = vmatpush1.bf16.msra.mxu0 %v1326
    %1685 = vmatprep.subr.bf16.mxu0 %v1319
    %1686 = vmatpush1.bf16.msra.mxu0 %v1318
    %1687 = vmatprep.subr.bf16.mxu0 %v1311
    %1688 = vmatpush1.bf16.msra.mxu0 %v1310
    %1689 = vmatprep.subr.bf16.mxu0 %v1303
    %1690 = vmatpush1.bf16.msra.mxu0 %v1302
    %1691 = vmatprep.subr.bf16.mxu0 %v1423
    %1692 = vmatpush2.bf16.msra.mxu0 %v1422
    %1693 = vmatprep.subr.bf16.mxu0 %v1415
    %1694 = vmatpush2.bf16.msra.mxu0 %v1414
    %1695 = vmatprep.subr.bf16.mxu0 %v1407
    %1696 = vmatpush2.bf16.msra.mxu0 %v1406
    %1697 = vmatprep.subr.bf16.mxu0 %v1399
    %1698 = vmatpush2.bf16.msra.mxu0 %v1398
    %1699 = vmatprep.subr.bf16.mxu0 %v1391
    %1700 = vmatpush2.bf16.msra.mxu0 %v1390
    %1701 = vmatprep.subr.bf16.mxu0 %v1383
    %1702 = vmatpush2.bf16.msra.mxu0 %v1382
    %1703 = vmatprep.subr.bf16.mxu0 %v1375
    %1704 = vmatpush2.bf16.msra.mxu0 %v1374
    %1705 = vmatprep.subr.bf16.mxu0 %v1367
    %1706 = vmatpush2.bf16.msra.mxu0 %v1366
    %1707 = vmatprep.mubr.bf16.mxu0 0
    %1708 = vmatmul.mubr.bf16.gmra.mxu0 0
    %v1709 = vpop.f32.mrf.mxu0
    %v1710 = vadd.f32 0.0, %v1709
    %v1711 = vpop.f32.mrf.mxu0
    %v1712 = vadd.f32 0.0, %v1711
    %v1713 = vpop.f32.mrf.mxu0
    %v1714 = vpop.f32.mrf.mxu0
    %1715 = vdwg.mxu0
    %v1716 = vadd.f32 %v571, %v1587
    %v1717 = vadd.f32 %v573, %v1589
    %v1718 = vadd.f32 %v632, %v1628
    %v1719 = vadd.f32 %v634, %v1630
    %v1720 = vadd.f32 %v693, %v1669
    %v1721 = vadd.f32 %v695, %v1671
    %v1722 = vadd.f32 %v754, %v1710
    %v1723 = vadd.f32 %v756, %v1712
    %v1724 = vtanh.pop %v1716
    %v1725 = vtanh.pop %v1717
    %v1726 = vtanh.pop %v1718
    %v1727 = vtanh.pop %v1719
    %v1728 = vtanh.pop %v1720
    %v1729 = vtanh.pop %v1721
    %v1730 = vtanh.pop %v1722
    %v1731 = vtanh.pop %v1723
    %v1732 = vmul.f32 %v1724, 0.5
    %v1733 = vmul.f32 %v1725, 0.5
    %v1734 = vmul.f32 %v1726, 0.5
    %v1735 = vmul.f32 %v1727, 0.5
    %v1736 = vmul.f32 %v1728, 0.5
    %v1737 = vmul.f32 %v1729, 0.5
    %v1738 = vadd.f32 %v1732, 0.5
    %v1739 = vadd.f32 %v1733, 0.5
    %v1740 = vadd.f32 %v1734, 0.5
    %v1741 = vadd.f32 %v1735, 0.5
    %v1742 = vadd.f32 %v1736, 0.5
    %v1743 = vadd.f32 %v1737, 0.5
    %v1744 = vmul.f32 %v1740, 0.0
    %v1745 = vmul.f32 %v1741, 0.0
    %v1746 = vmul.f32 %v1738, %v1730
    %v1747 = vmul.f32 %v1739, %v1731
    %v1748 = vadd.f32 %v1744, %v1746
    %v1749 = vadd.f32 %v1745, %v1747
    %v1750 = vtanh.pop %v1748
    %v1751 = vtanh.pop %v1749
    %v1752 = vmul.f32 %v1742, %v1750
    %v1753 = vmul.f32 %v1743, %v1751
    %v1754 = vpack.c.bf16 %v1752, %v1752
    %v1755 = vpack.c.bf16 %v1753, %v1753
    %1756 = vmatprep.subr.bf16.mxu0 %v1353
    %1757 = vmatpush1.bf16.msra.mxu0 %v1352
    %1758 = vmatprep.subr.bf16.mxu0 %v1345
    %1759 = vmatpush1.bf16.msra.mxu0 %v1344
    %1760 = vmatprep.subr.bf16.mxu0 %v1337
    %1761 = vmatpush1.bf16.msra.mxu0 %v1336
    %1762 = vmatprep.subr.bf16.mxu0 %v1329
    %1763 = vmatpush1.bf16.msra.mxu0 %v1328
    %1764 = vmatprep.subr.bf16.mxu0 %v1321
    %1765 = vmatpush1.bf16.msra.mxu0 %v1320
    %1766 = vmatprep.subr.bf16.mxu0 %v1313
    %1767 = vmatpush1.bf16.msra.mxu0 %v1312
    %1768 = vmatprep.subr.bf16.mxu0 %v1305
    %1769 = vmatpush1.bf16.msra.mxu0 %v1304
    %1770 = vmatprep.subr.bf16.mxu0 %v1297
    %1771 = vmatpush1.bf16.msra.mxu0 %v1296
    %1772 = vmatprep.subr.bf16.mxu0 %v1417
    %1773 = vmatpush2.bf16.msra.mxu0 %v1416
    %1774 = vmatprep.subr.bf16.mxu0 %v1409
    %1775 = vmatpush2.bf16.msra.mxu0 %v1408
    %1776 = vmatprep.subr.bf16.mxu0 %v1401
    %1777 = vmatpush2.bf16.msra.mxu0 %v1400
    %1778 = vmatprep.subr.bf16.mxu0 %v1393
    %1779 = vmatpush2.bf16.msra.mxu0 %v1392
    %1780 = vmatprep.subr.bf16.mxu0 %v1385
    %1781 = vmatpush2.bf16.msra.mxu0 %v1384
    %1782 = vmatprep.subr.bf16.mxu0 %v1377
    %1783 = vmatpush2.bf16.msra.mxu0 %v1376
    %1784 = vmatprep.subr.bf16.mxu0 %v1369
    %1785 = vmatpush2.bf16.msra.mxu0 %v1368
    %1786 = vmatprep.subr.bf16.mxu0 %v1361
    %1787 = vmatpush2.bf16.msra.mxu0 %v1360
    %1788 = vmatprep.mubr.bf16.mxu0 %v1755
    %1789 = vmatmul.mubr.bf16.gmra.mxu0 %v1754
    %v1790 = vpop.f32.mrf.mxu0
    %v1791 = vadd.f32 0.0, %v1790
    %v1792 = vpop.f32.mrf.mxu0
    %v1793 = vadd.f32 0.0, %v1792
    %v1794 = vpop.f32.mrf.mxu0
    %v1795 = vpop.f32.mrf.mxu0
    %1796 = vdwg.mxu0
    %1797 = vmatprep.subr.bf16.mxu0 %v1355
    %1798 = vmatpush1.bf16.msra.mxu0 %v1354
    %1799 = vmatprep.subr.bf16.mxu0 %v1347
    %1800 = vmatpush1.bf16.msra.mxu0 %v1346
    %1801 = vmatprep.subr.bf16.mxu0 %v1339
    %1802 = vmatpush1.bf16.msra.mxu0 %v1338
    %1803 = vmatprep.subr.bf16.mxu0 %v1331
    %1804 = vmatpush1.bf16.msra.mxu0 %v1330
    %1805 = vmatprep.subr.bf16.mxu0 %v1323
    %1806 = vmatpush1.bf16.msra.mxu0 %v1322
    %1807 = vmatprep.subr.bf16.mxu0 %v1315
    %1808 = vmatpush1.bf16.msra.mxu0 %v1314
    %1809 = vmatprep.subr.bf16.mxu0 %v1307
    %1810 = vmatpush1.bf16.msra.mxu0 %v1306
    %1811 = vmatprep.subr.bf16.mxu0 %v1299
    %1812 = vmatpush1.bf16.msra.mxu0 %v1298
    %1813 = vmatprep.subr.bf16.mxu0 %v1419
    %1814 = vmatpush2.bf16.msra.mxu0 %v1418
    %1815 = vmatprep.subr.bf16.mxu0 %v1411
    %1816 = vmatpush2.bf16.msra.mxu0 %v1410
    %1817 = vmatprep.subr.bf16.mxu0 %v1403
    %1818 = vmatpush2.bf16.msra.mxu0 %v1402
    %1819 = vmatprep.subr.bf16.mxu0 %v1395
    %1820 = vmatpush2.bf16.msra.mxu0 %v1394
    %1821 = vmatprep.subr.bf16.mxu0 %v1387
    %1822 = vmatpush2.bf16.msra.mxu0 %v1386
    %1823 = vmatprep.subr.bf16.mxu0 %v1379
    %1824 = vmatpush2.bf16.msra.mxu0 %v1378
    %1825 = vmatprep.subr.bf16.mxu0 %v1371
    %1826 = vmatpush2.bf16.msra.mxu0 %v1370
    %1827 = vmatprep.subr.bf16.mxu0 %v1363
    %1828 = vmatpush2.bf16.msra.mxu0 %v1362
    %1829 = vmatprep.mubr.bf16.mxu0 %v1755
    %1830 = vmatmul.mubr.bf16.gmra.mxu0 %v1754
    %v1831 = vpop.f32.mrf.mxu0
    %v1832 = vadd.f32 0.0, %v1831
    %v1833 = vpop.f32.mrf.mxu0
    %v1834 = vadd.f32 0.0, %v1833
    %v1835 = vpop.f32.mrf.mxu0
    %v1836 = vpop.f32.mrf.mxu0
    %1837 = vdwg.mxu0
    %1838 = vmatprep.subr.bf16.mxu0 %v1357
    %1839 = vmatpush1.bf16.msra.mxu0 %v1356
    %1840 = vmatprep.subr.bf16.mxu0 %v1349
    %1841 = vmatpush1.bf16.msra.mxu0 %v1348
    %1842 = vmatprep.subr.bf16.mxu0 %v1341
    %1843 = vmatpush1.bf16.msra.mxu0 %v1340
    %1844 = vmatprep.subr.bf16.mxu0 %v1333
    %1845 = vmatpush1.bf16.msra.mxu0 %v1332
    %1846 = vmatprep.subr.bf16.mxu0 %v1325
    %1847 = vmatpush1.bf16.msra.mxu0 %v1324
    %1848 = vmatprep.subr.bf16.mxu0 %v1317
    %1849 = vmatpush1.bf16.msra.mxu0 %v1316
    %1850 = vmatprep.subr.bf16.mxu0 %v1309
    %1851 = vmatpush1.bf16.msra.mxu0 %v1308
    %1852 = vmatprep.subr.bf16.mxu0 %v1301
    %1853 = vmatpush1.bf16.msra.mxu0 %v1300
    %1854 = vmatprep.subr.bf16.mxu0 %v1421
    %1855 = vmatpush2.bf16.msra.mxu0 %v1420
    %1856 = vmatprep.subr.bf16.mxu0 %v1413
    %1857 = vmatpush2.bf16.msra.mxu0 %v1412
    %1858 = vmatprep.subr.bf16.mxu0 %v1405
    %1859 = vmatpush2.bf16.msra.mxu0 %v1404
    %1860 = vmatprep.subr.bf16.mxu0 %v1397
    %1861 = vmatpush2.bf16.msra.mxu0 %v1396
    %1862 = vmatprep.subr.bf16.mxu0 %v1389
    %1863 = vmatpush2.bf16.msra.mxu0 %v1388
    %1864 = vmatprep.subr.bf16.mxu0 %v1381
    %1865 = vmatpush2.bf16.msra.mxu0 %v1380
    %1866 = vmatprep.subr.bf16.mxu0 %v1373
    %1867 = vmatpush2.bf16.msra.mxu0 %v1372
    %1868 = vmatprep.subr.bf16.mxu0 %v1365
    %1869 = vmatpush2.bf16.msra.mxu0 %v1364
    %1870 = vmatprep.mubr.bf16.mxu0 %v1755
    %1871 = vmatmul.mubr.bf16.gmra.mxu0 %v1754
    %v1872 = vpop.f32.mrf.mxu0
    %v1873 = vadd.f32 0.0, %v1872
    %v1874 = vpop.f32.mrf.mxu0
    %v1875 = vadd.f32 0.0, %v1874
    %v1876 = vpop.f32.mrf.mxu0
    %v1877 = vpop.f32.mrf.mxu0
    %1878 = vdwg.mxu0
    %1879 = vmatprep.subr.bf16.mxu0 %v1359
    %1880 = vmatpush1.bf16.msra.mxu0 %v1358
    %1881 = vmatprep.subr.bf16.mxu0 %v1351
    %1882 = vmatpush1.bf16.msra.mxu0 %v1350
    %1883 = vmatprep.subr.bf16.mxu0 %v1343
    %1884 = vmatpush1.bf16.msra.mxu0 %v1342
    %1885 = vmatprep.subr.bf16.mxu0 %v1335
    %1886 = vmatpush1.bf16.msra.mxu0 %v1334
    %1887 = vmatprep.subr.bf16.mxu0 %v1327
    %1888 = vmatpush1.bf16.msra.mxu0 %v1326
    %1889 = vmatprep.subr.bf16.mxu0 %v1319
    %1890 = vmatpush1.bf16.msra.mxu0 %v1318
    %1891 = vmatprep.subr.bf16.mxu0 %v1311
    %1892 = vmatpush1.bf16.msra.mxu0 %v1310
    %1893 = vmatprep.subr.bf16.mxu0 %v1303
    %1894 = vmatpush1.bf16.msra.mxu0 %v1302
    %1895 = vmatprep.subr.bf16.mxu0 %v1423
    %1896 = vmatpush2.bf16.msra.mxu0 %v1422
    %1897 = vmatprep.subr.bf16.mxu0 %v1415
    %1898 = vmatpush2.bf16.msra.mxu0 %v1414
    %1899 = vmatprep.subr.bf16.mxu0 %v1407
    %1900 = vmatpush2.bf16.msra.mxu0 %v1406
    %1901 = vmatprep.subr.bf16.mxu0 %v1399
    %1902 = vmatpush2.bf16.msra.mxu0 %v1398
    %1903 = vmatprep.subr.bf16.mxu0 %v1391
    %1904 = vmatpush2.bf16.msra.mxu0 %v1390
    %1905 = vmatprep.subr.bf16.mxu0 %v1383
    %1906 = vmatpush2.bf16.msra.mxu0 %v1382
    %1907 = vmatprep.subr.bf16.mxu0 %v1375
    %1908 = vmatpush2.bf16.msra.mxu0 %v1374
    %1909 = vmatprep.subr.bf16.mxu0 %v1367
    %1910 = vmatpush2.bf16.msra.mxu0 %v1366
    %1911 = vmatprep.mubr.bf16.mxu0 %v1755
    %1912 = vmatmul.mubr.bf16.gmra.mxu0 %v1754
    %v1913 = vpop.f32.mrf.mxu0
    %v1914 = vadd.f32 0.0, %v1913
    %v1915 = vpop.f32.mrf.mxu0
    %v1916 = vadd.f32 0.0, %v1915
    %v1917 = vpop.f32.mrf.mxu0
    %v1918 = vpop.f32.mrf.mxu0
    %1919 = vdwg.mxu0
    %v1920 = vadd.f32 %v575, %v1791
    %v1921 = vadd.f32 %v577, %v1793
    %v1922 = vadd.f32 %v636, %v1832
    %v1923 = vadd.f32 %v638, %v1834
    %v1924 = vadd.f32 %v697, %v1873
    %v1925 = vadd.f32 %v699, %v1875
    %v1926 = vadd.f32 %v758, %v1914
    %v1927 = vadd.f32 %v760, %v1916
    %v1928 = vtanh.pop %v1920
    %v1929 = vtanh.pop %v1921
    %v1930 = vtanh.pop %v1922
    %v1931 = vtanh.pop %v1923
    %v1932 = vtanh.pop %v1924
    %v1933 = vtanh.pop %v1925
    %v1934 = vtanh.pop %v1926
    %v1935 = vtanh.pop %v1927
    %v1936 = vmul.f32 %v1928, 0.5
    %v1937 = vmul.f32 %v1929, 0.5
    %v1938 = vmul.f32 %v1930, 0.5
    %v1939 = vmul.f32 %v1931, 0.5
    %v1940 = vmul.f32 %v1932, 0.5
    %v1941 = vmul.f32 %v1933, 0.5
    %v1942 = vadd.f32 %v1936, 0.5
    %v1943 = vadd.f32 %v1937, 0.5
    %v1944 = vadd.f32 %v1938, 0.5
    %v1945 = vadd.f32 %v1939, 0.5
    %v1946 = vadd.f32 %v1940, 0.5
    %v1947 = vadd.f32 %v1941, 0.5
    %v1948 = vmul.f32 %v1944, %v1748
    %v1949 = vmul.f32 %v1945, %v1749
    %v1950 = vmul.f32 %v1942, %v1934
    %v1951 = vmul.f32 %v1943, %v1935
    %v1952 = vadd.f32 %v1948, %v1950
    %v1953 = vadd.f32 %v1949, %v1951
    %v1954 = vtanh.pop %v1952
    %v1955 = vtanh.pop %v1953
    %v1956 = vmul.f32 %v1946, %v1954
    %v1957 = vmul.f32 %v1947, %v1955
    %v1958 = vpack.c.bf16 %v1956, %v1956
    %v1959 = vpack.c.bf16 %v1957, %v1957
    %1960 = vmatprep.subr.bf16.mxu0 %v1353
    %1961 = vmatpush1.bf16.msra.mxu0 %v1352
    %1962 = vmatprep.subr.bf16.mxu0 %v1345
    %1963 = vmatpush1.bf16.msra.mxu0 %v1344
    %1964 = vmatprep.subr.bf16.mxu0 %v1337
    %1965 = vmatpush1.bf16.msra.mxu0 %v1336
    %1966 = vmatprep.subr.bf16.mxu0 %v1329
    %1967 = vmatpush1.bf16.msra.mxu0 %v1328
    %1968 = vmatprep.subr.bf16.mxu0 %v1321
    %1969 = vmatpush1.bf16.msra.mxu0 %v1320
    %1970 = vmatprep.subr.bf16.mxu0 %v1313
    %1971 = vmatpush1.bf16.msra.mxu0 %v1312
    %1972 = vmatprep.subr.bf16.mxu0 %v1305
    %1973 = vmatpush1.bf16.msra.mxu0 %v1304
    %1974 = vmatprep.subr.bf16.mxu0 %v1297
    %1975 = vmatpush1.bf16.msra.mxu0 %v1296
    %1976 = vmatprep.subr.bf16.mxu0 %v1417
    %1977 = vmatpush2.bf16.msra.mxu0 %v1416
    %1978 = vmatprep.subr.bf16.mxu0 %v1409
    %1979 = vmatpush2.bf16.msra.mxu0 %v1408
    %1980 = vmatprep.subr.bf16.mxu0 %v1401
    %1981 = vmatpush2.bf16.msra.mxu0 %v1400
    %1982 = vmatprep.subr.bf16.mxu0 %v1393
    %1983 = vmatpush2.bf16.msra.mxu0 %v1392
    %1984 = vmatprep.subr.bf16.mxu0 %v1385
    %1985 = vmatpush2.bf16.msra.mxu0 %v1384
    %1986 = vmatprep.subr.bf16.mxu0 %v1377
    %1987 = vmatpush2.bf16.msra.mxu0 %v1376
    %1988 = vmatprep.subr.bf16.mxu0 %v1369
    %1989 = vmatpush2.bf16.msra.mxu0 %v1368
    %1990 = vmatprep.subr.bf16.mxu0 %v1361
    %1991 = vmatpush2.bf16.msra.mxu0 %v1360
    %1992 = vmatprep.mubr.bf16.mxu0 %v1959
    %1993 = vmatmul.mubr.bf16.gmra.mxu0 %v1958
    %v1994 = vpop.f32.mrf.mxu0
    %v1995 = vadd.f32 0.0, %v1994
    %v1996 = vpop.f32.mrf.mxu0
    %v1997 = vadd.f32 0.0, %v1996
    %v1998 = vpop.f32.mrf.mxu0
    %v1999 = vpop.f32.mrf.mxu0
    %2000 = vdwg.mxu0
    %2001 = vmatprep.subr.bf16.mxu0 %v1355
    %2002 = vmatpush1.bf16.msra.mxu0 %v1354
    %2003 = vmatprep.subr.bf16.mxu0 %v1347
    %2004 = vmatpush1.bf16.msra.mxu0 %v1346
    %2005 = vmatprep.subr.bf16.mxu0 %v1339
    %2006 = vmatpush1.bf16.msra.mxu0 %v1338
    %2007 = vmatprep.subr.bf16.mxu0 %v1331
    %2008 = vmatpush1.bf16.msra.mxu0 %v1330
    %2009 = vmatprep.subr.bf16.mxu0 %v1323
    %2010 = vmatpush1.bf16.msra.mxu0 %v1322
    %2011 = vmatprep.subr.bf16.mxu0 %v1315
    %2012 = vmatpush1.bf16.msra.mxu0 %v1314
    %2013 = vmatprep.subr.bf16.mxu0 %v1307
    %2014 = vmatpush1.bf16.msra.mxu0 %v1306
    %2015 = vmatprep.subr.bf16.mxu0 %v1299
    %2016 = vmatpush1.bf16.msra.mxu0 %v1298
    %2017 = vmatprep.subr.bf16.mxu0 %v1419
    %2018 = vmatpush2.bf16.msra.mxu0 %v1418
    %2019 = vmatprep.subr.bf16.mxu0 %v1411
    %2020 = vmatpush2.bf16.msra.mxu0 %v1410
    %2021 = vmatprep.subr.bf16.mxu0 %v1403
    %2022 = vmatpush2.bf16.msra.mxu0 %v1402
    %2023 = vmatprep.subr.bf16.mxu0 %v1395
    %2024 = vmatpush2.bf16.msra.mxu0 %v1394
    %2025 = vmatprep.subr.bf16.mxu0 %v1387
    %2026 = vmatpush2.bf16.msra.mxu0 %v1386
    %2027 = vmatprep.subr.bf16.mxu0 %v1379
    %2028 = vmatpush2.bf16.msra.mxu0 %v1378
    %2029 = vmatprep.subr.bf16.mxu0 %v1371
    %2030 = vmatpush2.bf16.msra.mxu0 %v1370
    %2031 = vmatprep.subr.bf16.mxu0 %v1363
    %2032 = vmatpush2.bf16.msra.mxu0 %v1362
    %2033 = vmatprep.mubr.bf16.mxu0 %v1959
    %2034 = vmatmul.mubr.bf16.gmra.mxu0 %v1958
    %v2035 = vpop.f32.mrf.mxu0
    %v2036 = vadd.f32 0.0, %v2035
    %v2037 = vpop.f32.mrf.mxu0
    %v2038 = vadd.f32 0.0, %v2037
    %v2039 = vpop.f32.mrf.mxu0
    %v2040 = vpop.f32.mrf.mxu0
    %2041 = vdwg.mxu0
    %2042 = vmatprep.subr.bf16.mxu0 %v1357
    %2043 = vmatpush1.bf16.msra.mxu0 %v1356
    %2044 = vmatprep.subr.bf16.mxu0 %v1349
    %2045 = vmatpush1.bf16.msra.mxu0 %v1348
    %2046 = vmatprep.subr.bf16.mxu0 %v1341
    %2047 = vmatpush1.bf16.msra.mxu0 %v1340
    %2048 = vmatprep.subr.bf16.mxu0 %v1333
    %2049 = vmatpush1.bf16.msra.mxu0 %v1332
    %2050 = vmatprep.subr.bf16.mxu0 %v1325
    %2051 = vmatpush1.bf16.msra.mxu0 %v1324
    %2052 = vmatprep.subr.bf16.mxu0 %v1317
    %2053 = vmatpush1.bf16.msra.mxu0 %v1316
    %2054 = vmatprep.subr.bf16.mxu0 %v1309
    %2055 = vmatpush1.bf16.msra.mxu0 %v1308
    %2056 = vmatprep.subr.bf16.mxu0 %v1301
    %2057 = vmatpush1.bf16.msra.mxu0 %v1300
    %2058 = vmatprep.subr.bf16.mxu0 %v1421
    %2059 = vmatpush2.bf16.msra.mxu0 %v1420
    %2060 = vmatprep.subr.bf16.mxu0 %v1413
    %2061 = vmatpush2.bf16.msra.mxu0 %v1412
    %2062 = vmatprep.subr.bf16.mxu0 %v1405
    %2063 = vmatpush2.bf16.msra.mxu0 %v1404
    %2064 = vmatprep.subr.bf16.mxu0 %v1397
    %2065 = vmatpush2.bf16.msra.mxu0 %v1396
    %2066 = vmatprep.subr.bf16.mxu0 %v1389
    %2067 = vmatpush2.bf16.msra.mxu0 %v1388
    %2068 = vmatprep.subr.bf16.mxu0 %v1381
    %2069 = vmatpush2.bf16.msra.mxu0 %v1380
    %2070 = vmatprep.subr.bf16.mxu0 %v1373
    %2071 = vmatpush2.bf16.msra.mxu0 %v1372
    %2072 = vmatprep.subr.bf16.mxu0 %v1365
    %2073 = vmatpush2.bf16.msra.mxu0 %v1364
    %2074 = vmatprep.mubr.bf16.mxu0 %v1959
    %2075 = vmatmul.mubr.bf16.gmra.mxu0 %v1958
    %v2076 = vpop.f32.mrf.mxu0
    %v2077 = vadd.f32 0.0, %v2076
    %v2078 = vpop.f32.mrf.mxu0
    %v2079 = vadd.f32 0.0, %v2078
    %v2080 = vpop.f32.mrf.mxu0
    %v2081 = vpop.f32.mrf.mxu0
    %2082 = vdwg.mxu0
    %2083 = vmatprep.subr.bf16.mxu0 %v1359
    %2084 = vmatpush1.bf16.msra.mxu0 %v1358
    %2085 = vmatprep.subr.bf16.mxu0 %v1351
    %2086 = vmatpush1.bf16.msra.mxu0 %v1350
    %2087 = vmatprep.subr.bf16.mxu0 %v1343
    %2088 = vmatpush1.bf16.msra.mxu0 %v1342
    %2089 = vmatprep.subr.bf16.mxu0 %v1335
    %2090 = vmatpush1.bf16.msra.mxu0 %v1334
    %2091 = vmatprep.subr.bf16.mxu0 %v1327
    %2092 = vmatpush1.bf16.msra.mxu0 %v1326
    %2093 = vmatprep.subr.bf16.mxu0 %v1319
    %2094 = vmatpush1.bf16.msra.mxu0 %v1318
    %2095 = vmatprep.subr.bf16.mxu0 %v1311
    %2096 = vmatpush1.bf16.msra.mxu0 %v1310
    %2097 = vmatprep.subr.bf16.mxu0 %v1303
    %2098 = vmatpush1.bf16.msra.mxu0 %v1302
    %2099 = vmatprep.subr.bf16.mxu0 %v1423
    %2100 = vmatpush2.bf16.msra.mxu0 %v1422
    %2101 = vmatprep.subr.bf16.mxu0 %v1415
    %2102 = vmatpush2.bf16.msra.mxu0 %v1414
    %2103 = vmatprep.subr.bf16.mxu0 %v1407
    %2104 = vmatpush2.bf16.msra.mxu0 %v1406
    %2105 = vmatprep.subr.bf16.mxu0 %v1399
    %2106 = vmatpush2.bf16.msra.mxu0 %v1398
    %2107 = vmatprep.subr.bf16.mxu0 %v1391
    %2108 = vmatpush2.bf16.msra.mxu0 %v1390
    %2109 = vmatprep.subr.bf16.mxu0 %v1383
    %2110 = vmatpush2.bf16.msra.mxu0 %v1382
    %2111 = vmatprep.subr.bf16.mxu0 %v1375
    %2112 = vmatpush2.bf16.msra.mxu0 %v1374
    %2113 = vmatprep.subr.bf16.mxu0 %v1367
    %2114 = vmatpush2.bf16.msra.mxu0 %v1366
    %2115 = vmatprep.mubr.bf16.mxu0 %v1959
    %2116 = vmatmul.mubr.bf16.gmra.mxu0 %v1958
    %v2117 = vpop.f32.mrf.mxu0
    %v2118 = vadd.f32 0.0, %v2117
    %v2119 = vpop.f32.mrf.mxu0
    %v2120 = vadd.f32 0.0, %v2119
    %v2121 = vpop.f32.mrf.mxu0
    %v2122 = vpop.f32.mrf.mxu0
    %2123 = vdwg.mxu0
    %v2124 = vadd.f32 %v581, %v1995
    %v2125 = vadd.f32 %v583, %v1997
    %v2126 = vadd.f32 %v642, %v2036
    %v2127 = vadd.f32 %v644, %v2038
    %v2128 = vadd.f32 %v703, %v2077
    %v2129 = vadd.f32 %v705, %v2079
    %v2130 = vadd.f32 %v764, %v2118
    %v2131 = vadd.f32 %v766, %v2120
    %v2132 = vtanh.pop %v2124
    %v2133 = vtanh.pop %v2125
    %v2134 = vtanh.pop %v2126
    %v2135 = vtanh.pop %v2127
    %v2136 = vtanh.pop %v2128
    %v2137 = vtanh.pop %v2129
    %v2138 = vtanh.pop %v2130
    %v2139 = vtanh.pop %v2131
    %v2140 = vmul.f32 %v2132, 0.5
    %v2141 = vmul.f32 %v2133, 0.5
    %v2142 = vmul.f32 %v2134, 0.5
    %v2143 = vmul.f32 %v2135, 0.5
    %v2144 = vmul.f32 %v2136, 0.5
    %v2145 = vmul.f32 %v2137, 0.5
    %v2146 = vadd.f32 %v2140, 0.5
    %v2147 = vadd.f32 %v2141, 0.5
    %v2148 = vadd.f32 %v2142, 0.5
    %v2149 = vadd.f32 %v2143, 0.5
    %v2150 = vadd.f32 %v2144, 0.5
    %v2151 = vadd.f32 %v2145, 0.5
    %v2152 = vmul.f32 %v2148, %v1952
    %v2153 = vmul.f32 %v2149, %v1953
    %v2154 = vmul.f32 %v2146, %v2138
    %v2155 = vmul.f32 %v2147, %v2139
    %v2156 = vadd.f32 %v2152, %v2154
    %v2157 = vadd.f32 %v2153, %v2155
    %v2158 = vtanh.pop %v2156
    %v2159 = vtanh.pop %v2157
    %v2160 = vmul.f32 %v2150, %v2158
    %v2161 = vmul.f32 %v2151, %v2159
    %v2162 = vpack.c.bf16 %v2160, %v2160
    %v2163 = vpack.c.bf16 %v2161, %v2161
    %2164 = vmatprep.subr.bf16.mxu0 %v1353
    %2165 = vmatpush1.bf16.msra.mxu0 %v1352
    %2166 = vmatprep.subr.bf16.mxu0 %v1345
    %2167 = vmatpush1.bf16.msra.mxu0 %v1344
    %2168 = vmatprep.subr.bf16.mxu0 %v1337
    %2169 = vmatpush1.bf16.msra.mxu0 %v1336
    %2170 = vmatprep.subr.bf16.mxu0 %v1329
    %2171 = vmatpush1.bf16.msra.mxu0 %v1328
    %2172 = vmatprep.subr.bf16.mxu0 %v1321
    %2173 = vmatpush1.bf16.msra.mxu0 %v1320
    %2174 = vmatprep.subr.bf16.mxu0 %v1313
    %2175 = vmatpush1.bf16.msra.mxu0 %v1312
    %2176 = vmatprep.subr.bf16.mxu0 %v1305
    %2177 = vmatpush1.bf16.msra.mxu0 %v1304
    %2178 = vmatprep.subr.bf16.mxu0 %v1297
    %2179 = vmatpush1.bf16.msra.mxu0 %v1296
    %2180 = vmatprep.subr.bf16.mxu0 %v1417
    %2181 = vmatpush2.bf16.msra.mxu0 %v1416
    %2182 = vmatprep.subr.bf16.mxu0 %v1409
    %2183 = vmatpush2.bf16.msra.mxu0 %v1408
    %2184 = vmatprep.subr.bf16.mxu0 %v1401
    %2185 = vmatpush2.bf16.msra.mxu0 %v1400
    %2186 = vmatprep.subr.bf16.mxu0 %v1393
    %2187 = vmatpush2.bf16.msra.mxu0 %v1392
    %2188 = vmatprep.subr.bf16.mxu0 %v1385
    %2189 = vmatpush2.bf16.msra.mxu0 %v1384
    %2190 = vmatprep.subr.bf16.mxu0 %v1377
    %2191 = vmatpush2.bf16.msra.mxu0 %v1376
    %2192 = vmatprep.subr.bf16.mxu0 %v1369
    %2193 = vmatpush2.bf16.msra.mxu0 %v1368
    %2194 = vmatprep.subr.bf16.mxu0 %v1361
    %2195 = vmatpush2.bf16.msra.mxu0 %v1360
    %2196 = vmatprep.mubr.bf16.mxu0 %v2163
    %2197 = vmatmul.mubr.bf16.gmra.mxu0 %v2162
    %v2198 = vpop.f32.mrf.mxu0
    %v2199 = vadd.f32 0.0, %v2198
    %v2200 = vpop.f32.mrf.mxu0
    %v2201 = vadd.f32 0.0, %v2200
    %v2202 = vpop.f32.mrf.mxu0
    %v2203 = vpop.f32.mrf.mxu0
    %2204 = vdwg.mxu0
    %2205 = vmatprep.subr.bf16.mxu0 %v1355
    %2206 = vmatpush1.bf16.msra.mxu0 %v1354
    %2207 = vmatprep.subr.bf16.mxu0 %v1347
    %2208 = vmatpush1.bf16.msra.mxu0 %v1346
    %2209 = vmatprep.subr.bf16.mxu0 %v1339
    %2210 = vmatpush1.bf16.msra.mxu0 %v1338
    %2211 = vmatprep.subr.bf16.mxu0 %v1331
    %2212 = vmatpush1.bf16.msra.mxu0 %v1330
    %2213 = vmatprep.subr.bf16.mxu0 %v1323
    %2214 = vmatpush1.bf16.msra.mxu0 %v1322
    %2215 = vmatprep.subr.bf16.mxu0 %v1315
    %2216 = vmatpush1.bf16.msra.mxu0 %v1314
    %2217 = vmatprep.subr.bf16.mxu0 %v1307
    %2218 = vmatpush1.bf16.msra.mxu0 %v1306
    %2219 = vmatprep.subr.bf16.mxu0 %v1299
    %2220 = vmatpush1.bf16.msra.mxu0 %v1298
    %2221 = vmatprep.subr.bf16.mxu0 %v1419
    %2222 = vmatpush2.bf16.msra.mxu0 %v1418
    %2223 = vmatprep.subr.bf16.mxu0 %v1411
    %2224 = vmatpush2.bf16.msra.mxu0 %v1410
    %2225 = vmatprep.subr.bf16.mxu0 %v1403
    %2226 = vmatpush2.bf16.msra.mxu0 %v1402
    %2227 = vmatprep.subr.bf16.mxu0 %v1395
    %2228 = vmatpush2.bf16.msra.mxu0 %v1394
    %2229 = vmatprep.subr.bf16.mxu0 %v1387
    %2230 = vmatpush2.bf16.msra.mxu0 %v1386
    %2231 = vmatprep.subr.bf16.mxu0 %v1379
    %2232 = vmatpush2.bf16.msra.mxu0 %v1378
    %2233 = vmatprep.subr.bf16.mxu0 %v1371
    %2234 = vmatpush2.bf16.msra.mxu0 %v1370
    %2235 = vmatprep.subr.bf16.mxu0 %v1363
    %2236 = vmatpush2.bf16.msra.mxu0 %v1362
    %2237 = vmatprep.mubr.bf16.mxu0 %v2163
    %2238 = vmatmul.mubr.bf16.gmra.mxu0 %v2162
    %v2239 = vpop.f32.mrf.mxu0
    %v2240 = vadd.f32 0.0, %v2239
    %v2241 = vpop.f32.mrf.mxu0
    %v2242 = vadd.f32 0.0, %v2241
    %v2243 = vpop.f32.mrf.mxu0
    %v2244 = vpop.f32.mrf.mxu0
    %2245 = vdwg.mxu0
    %2246 = vmatprep.subr.bf16.mxu0 %v1357
    %2247 = vmatpush1.bf16.msra.mxu0 %v1356
    %2248 = vmatprep.subr.bf16.mxu0 %v1349
    %2249 = vmatpush1.bf16.msra.mxu0 %v1348
    %2250 = vmatprep.subr.bf16.mxu0 %v1341
    %2251 = vmatpush1.bf16.msra.mxu0 %v1340
    %2252 = vmatprep.subr.bf16.mxu0 %v1333
    %2253 = vmatpush1.bf16.msra.mxu0 %v1332
    %2254 = vmatprep.subr.bf16.mxu0 %v1325
    %2255 = vmatpush1.bf16.msra.mxu0 %v1324
    %2256 = vmatprep.subr.bf16.mxu0 %v1317
    %2257 = vmatpush1.bf16.msra.mxu0 %v1316
    %2258 = vmatprep.subr.bf16.mxu0 %v1309
    %2259 = vmatpush1.bf16.msra.mxu0 %v1308
    %2260 = vmatprep.subr.bf16.mxu0 %v1301
    %2261 = vmatpush1.bf16.msra.mxu0 %v1300
    %2262 = vmatprep.subr.bf16.mxu0 %v1421
    %2263 = vmatpush2.bf16.msra.mxu0 %v1420
    %2264 = vmatprep.subr.bf16.mxu0 %v1413
    %2265 = vmatpush2.bf16.msra.mxu0 %v1412
    %2266 = vmatprep.subr.bf16.mxu0 %v1405
    %2267 = vmatpush2.bf16.msra.mxu0 %v1404
    %2268 = vmatprep.subr.bf16.mxu0 %v1397
    %2269 = vmatpush2.bf16.msra.mxu0 %v1396
    %2270 = vmatprep.subr.bf16.mxu0 %v1389
    %2271 = vmatpush2.bf16.msra.mxu0 %v1388
    %2272 = vmatprep.subr.bf16.mxu0 %v1381
    %2273 = vmatpush2.bf16.msra.mxu0 %v1380
    %2274 = vmatprep.subr.bf16.mxu0 %v1373
    %2275 = vmatpush2.bf16.msra.mxu0 %v1372
    %2276 = vmatprep.subr.bf16.mxu0 %v1365
    %2277 = vmatpush2.bf16.msra.mxu0 %v1364
    %2278 = vmatprep.mubr.bf16.mxu0 %v2163
    %2279 = vmatmul.mubr.bf16.gmra.mxu0 %v2162
    %v2280 = vpop.f32.mrf.mxu0
    %v2281 = vadd.f32 0.0, %v2280
    %v2282 = vpop.f32.mrf.mxu0
    %v2283 = vadd.f32 0.0, %v2282
    %v2284 = vpop.f32.mrf.mxu0
    %v2285 = vpop.f32.mrf.mxu0
    %2286 = vdwg.mxu0
    %2287 = vmatprep.subr.bf16.mxu0 %v1359
    %2288 = vmatpush1.bf16.msra.mxu0 %v1358
    %2289 = vmatprep.subr.bf16.mxu0 %v1351
    %2290 = vmatpush1.bf16.msra.mxu0 %v1350
    %2291 = vmatprep.subr.bf16.mxu0 %v1343
    %2292 = vmatpush1.bf16.msra.mxu0 %v1342
    %2293 = vmatprep.subr.bf16.mxu0 %v1335
    %2294 = vmatpush1.bf16.msra.mxu0 %v1334
    %2295 = vmatprep.subr.bf16.mxu0 %v1327
    %2296 = vmatpush1.bf16.msra.mxu0 %v1326
    %2297 = vmatprep.subr.bf16.mxu0 %v1319
    %2298 = vmatpush1.bf16.msra.mxu0 %v1318
    %2299 = vmatprep.subr.bf16.mxu0 %v1311
    %2300 = vmatpush1.bf16.msra.mxu0 %v1310
    %2301 = vmatprep.subr.bf16.mxu0 %v1303
    %2302 = vmatpush1.bf16.msra.mxu0 %v1302
    %2303 = vmatprep.subr.bf16.mxu0 %v1423
    %2304 = vmatpush2.bf16.msra.mxu0 %v1422
    %2305 = vmatprep.subr.bf16.mxu0 %v1415
    %2306 = vmatpush2.bf16.msra.mxu0 %v1414
    %2307 = vmatprep.subr.bf16.mxu0 %v1407
    %2308 = vmatpush2.bf16.msra.mxu0 %v1406
    %2309 = vmatprep.subr.bf16.mxu0 %v1399
    %2310 = vmatpush2.bf16.msra.mxu0 %v1398
    %2311 = vmatprep.subr.bf16.mxu0 %v1391
    %2312 = vmatpush2.bf16.msra.mxu0 %v1390
    %2313 = vmatprep.subr.bf16.mxu0 %v1383
    %2314 = vmatpush2.bf16.msra.mxu0 %v1382
    %2315 = vmatprep.subr.bf16.mxu0 %v1375
    %2316 = vmatpush2.bf16.msra.mxu0 %v1374
    %2317 = vmatprep.subr.bf16.mxu0 %v1367
    %2318 = vmatpush2.bf16.msra.mxu0 %v1366
    %2319 = vmatprep.mubr.bf16.mxu0 %v2163
    %2320 = vmatmul.mubr.bf16.gmra.mxu0 %v2162
    %v2321 = vpop.f32.mrf.mxu0
    %v2322 = vadd.f32 0.0, %v2321
    %v2323 = vpop.f32.mrf.mxu0
    %v2324 = vadd.f32 0.0, %v2323
    %v2325 = vpop.f32.mrf.mxu0
    %v2326 = vpop.f32.mrf.mxu0
    %2327 = vdwg.mxu0
    %v2328 = vadd.f32 %v585, %v2199
    %v2329 = vadd.f32 %v587, %v2201
    %v2330 = vadd.f32 %v646, %v2240
    %v2331 = vadd.f32 %v648, %v2242
    %v2332 = vadd.f32 %v707, %v2281
    %v2333 = vadd.f32 %v709, %v2283
    %v2334 = vadd.f32 %v768, %v2322
    %v2335 = vadd.f32 %v770, %v2324
    %v2336 = vtanh.pop %v2328
    %v2337 = vtanh.pop %v2329
    %v2338 = vtanh.pop %v2330
    %v2339 = vtanh.pop %v2331
    %v2340 = vtanh.pop %v2332
    %v2341 = vtanh.pop %v2333
    %v2342 = vtanh.pop %v2334
    %v2343 = vtanh.pop %v2335
    %v2344 = vmul.f32 %v2336, 0.5
    %v2345 = vmul.f32 %v2337, 0.5
    %v2346 = vmul.f32 %v2338, 0.5
    %v2347 = vmul.f32 %v2339, 0.5
    %v2348 = vmul.f32 %v2340, 0.5
    %v2349 = vmul.f32 %v2341, 0.5
    %v2350 = vadd.f32 %v2344, 0.5
    %v2351 = vadd.f32 %v2345, 0.5
    %v2352 = vadd.f32 %v2346, 0.5
    %v2353 = vadd.f32 %v2347, 0.5
    %v2354 = vadd.f32 %v2348, 0.5
    %v2355 = vadd.f32 %v2349, 0.5
    %v2356 = vmul.f32 %v2352, %v2156
    %v2357 = vmul.f32 %v2353, %v2157
    %v2358 = vmul.f32 %v2350, %v2342
    %v2359 = vmul.f32 %v2351, %v2343
    %v2360 = vadd.f32 %v2356, %v2358
    %v2361 = vadd.f32 %v2357, %v2359
    %v2362 = vtanh.pop %v2360
    %v2363 = vtanh.pop %v2361
    %v2364 = vmul.f32 %v2354, %v2362
    %v2365 = vmul.f32 %v2355, %v2363
    %v2366 = vpack.c.bf16 %v2364, %v2364
    %v2367 = vpack.c.bf16 %v2365, %v2365
    %2368 = vmatprep.subr.bf16.mxu0 %v1353
    %2369 = vmatpush1.bf16.msra.mxu0 %v1352
    %2370 = vmatprep.subr.bf16.mxu0 %v1345
    %2371 = vmatpush1.bf16.msra.mxu0 %v1344
    %2372 = vmatprep.subr.bf16.mxu0 %v1337
    %2373 = vmatpush1.bf16.msra.mxu0 %v1336
    %2374 = vmatprep.subr.bf16.mxu0 %v1329
    %2375 = vmatpush1.bf16.msra.mxu0 %v1328
    %2376 = vmatprep.subr.bf16.mxu0 %v1321
    %2377 = vmatpush1.bf16.msra.mxu0 %v1320
    %2378 = vmatprep.subr.bf16.mxu0 %v1313
    %2379 = vmatpush1.bf16.msra.mxu0 %v1312
    %2380 = vmatprep.subr.bf16.mxu0 %v1305
    %2381 = vmatpush1.bf16.msra.mxu0 %v1304
    %2382 = vmatprep.subr.bf16.mxu0 %v1297
    %2383 = vmatpush1.bf16.msra.mxu0 %v1296
    %2384 = vmatprep.subr.bf16.mxu0 %v1417
    %2385 = vmatpush2.bf16.msra.mxu0 %v1416
    %2386 = vmatprep.subr.bf16.mxu0 %v1409
    %2387 = vmatpush2.bf16.msra.mxu0 %v1408
    %2388 = vmatprep.subr.bf16.mxu0 %v1401
    %2389 = vmatpush2.bf16.msra.mxu0 %v1400
    %2390 = vmatprep.subr.bf16.mxu0 %v1393
    %2391 = vmatpush2.bf16.msra.mxu0 %v1392
    %2392 = vmatprep.subr.bf16.mxu0 %v1385
    %2393 = vmatpush2.bf16.msra.mxu0 %v1384
    %2394 = vmatprep.subr.bf16.mxu0 %v1377
    %2395 = vmatpush2.bf16.msra.mxu0 %v1376
    %2396 = vmatprep.subr.bf16.mxu0 %v1369
    %2397 = vmatpush2.bf16.msra.mxu0 %v1368
    %2398 = vmatprep.subr.bf16.mxu0 %v1361
    %2399 = vmatpush2.bf16.msra.mxu0 %v1360
    %2400 = vmatprep.mubr.bf16.mxu0 %v2367
    %2401 = vmatmul.mubr.bf16.gmra.mxu0 %v2366
    %v2402 = vpop.f32.mrf.mxu0
    %v2403 = vadd.f32 0.0, %v2402
    %v2404 = vpop.f32.mrf.mxu0
    %v2405 = vadd.f32 0.0, %v2404
    %v2406 = vpop.f32.mrf.mxu0
    %v2407 = vpop.f32.mrf.mxu0
    %2408 = vdwg.mxu0
    %2409 = vmatprep.subr.bf16.mxu0 %v1355
    %2410 = vmatpush1.bf16.msra.mxu0 %v1354
    %2411 = vmatprep.subr.bf16.mxu0 %v1347
    %2412 = vmatpush1.bf16.msra.mxu0 %v1346
    %2413 = vmatprep.subr.bf16.mxu0 %v1339
    %2414 = vmatpush1.bf16.msra.mxu0 %v1338
    %2415 = vmatprep.subr.bf16.mxu0 %v1331
    %2416 = vmatpush1.bf16.msra.mxu0 %v1330
    %2417 = vmatprep.subr.bf16.mxu0 %v1323
    %2418 = vmatpush1.bf16.msra.mxu0 %v1322
    %2419 = vmatprep.subr.bf16.mxu0 %v1315
    %2420 = vmatpush1.bf16.msra.mxu0 %v1314
    %2421 = vmatprep.subr.bf16.mxu0 %v1307
    %2422 = vmatpush1.bf16.msra.mxu0 %v1306
    %2423 = vmatprep.subr.bf16.mxu0 %v1299
    %2424 = vmatpush1.bf16.msra.mxu0 %v1298
    %2425 = vmatprep.subr.bf16.mxu0 %v1419
    %2426 = vmatpush2.bf16.msra.mxu0 %v1418
    %2427 = vmatprep.subr.bf16.mxu0 %v1411
    %2428 = vmatpush2.bf16.msra.mxu0 %v1410
    %2429 = vmatprep.subr.bf16.mxu0 %v1403
    %2430 = vmatpush2.bf16.msra.mxu0 %v1402
    %2431 = vmatprep.subr.bf16.mxu0 %v1395
    %2432 = vmatpush2.bf16.msra.mxu0 %v1394
    %2433 = vmatprep.subr.bf16.mxu0 %v1387
    %2434 = vmatpush2.bf16.msra.mxu0 %v1386
    %2435 = vmatprep.subr.bf16.mxu0 %v1379
    %2436 = vmatpush2.bf16.msra.mxu0 %v1378
    %2437 = vmatprep.subr.bf16.mxu0 %v1371
    %2438 = vmatpush2.bf16.msra.mxu0 %v1370
    %2439 = vmatprep.subr.bf16.mxu0 %v1363
    %2440 = vmatpush2.bf16.msra.mxu0 %v1362
    %2441 = vmatprep.mubr.bf16.mxu0 %v2367
    %2442 = vmatmul.mubr.bf16.gmra.mxu0 %v2366
    %v2443 = vpop.f32.mrf.mxu0
    %v2444 = vadd.f32 0.0, %v2443
    %v2445 = vpop.f32.mrf.mxu0
    %v2446 = vadd.f32 0.0, %v2445
    %v2447 = vpop.f32.mrf.mxu0
    %v2448 = vpop.f32.mrf.mxu0
    %2449 = vdwg.mxu0
    %2450 = vmatprep.subr.bf16.mxu0 %v1357
    %2451 = vmatpush1.bf16.msra.mxu0 %v1356
    %2452 = vmatprep.subr.bf16.mxu0 %v1349
    %2453 = vmatpush1.bf16.msra.mxu0 %v1348
    %2454 = vmatprep.subr.bf16.mxu0 %v1341
    %2455 = vmatpush1.bf16.msra.mxu0 %v1340
    %2456 = vmatprep.subr.bf16.mxu0 %v1333
    %2457 = vmatpush1.bf16.msra.mxu0 %v1332
    %2458 = vmatprep.subr.bf16.mxu0 %v1325
    %2459 = vmatpush1.bf16.msra.mxu0 %v1324
    %2460 = vmatprep.subr.bf16.mxu0 %v1317
    %2461 = vmatpush1.bf16.msra.mxu0 %v1316
    %2462 = vmatprep.subr.bf16.mxu0 %v1309
    %2463 = vmatpush1.bf16.msra.mxu0 %v1308
    %2464 = vmatprep.subr.bf16.mxu0 %v1301
    %2465 = vmatpush1.bf16.msra.mxu0 %v1300
    %2466 = vmatprep.subr.bf16.mxu0 %v1421
    %2467 = vmatpush2.bf16.msra.mxu0 %v1420
    %2468 = vmatprep.subr.bf16.mxu0 %v1413
    %2469 = vmatpush2.bf16.msra.mxu0 %v1412
    %2470 = vmatprep.subr.bf16.mxu0 %v1405
    %2471 = vmatpush2.bf16.msra.mxu0 %v1404
    %2472 = vmatprep.subr.bf16.mxu0 %v1397
    %2473 = vmatpush2.bf16.msra.mxu0 %v1396
    %2474 = vmatprep.subr.bf16.mxu0 %v1389
    %2475 = vmatpush2.bf16.msra.mxu0 %v1388
    %2476 = vmatprep.subr.bf16.mxu0 %v1381
    %2477 = vmatpush2.bf16.msra.mxu0 %v1380
    %2478 = vmatprep.subr.bf16.mxu0 %v1373
    %2479 = vmatpush2.bf16.msra.mxu0 %v1372
    %2480 = vmatprep.subr.bf16.mxu0 %v1365
    %2481 = vmatpush2.bf16.msra.mxu0 %v1364
    %2482 = vmatprep.mubr.bf16.mxu0 %v2367
    %2483 = vmatmul.mubr.bf16.gmra.mxu0 %v2366
    %v2484 = vpop.f32.mrf.mxu0
    %v2485 = vadd.f32 0.0, %v2484
    %v2486 = vpop.f32.mrf.mxu0
    %v2487 = vadd.f32 0.0, %v2486
    %v2488 = vpop.f32.mrf.mxu0
    %v2489 = vpop.f32.mrf.mxu0
    %2490 = vdwg.mxu0
    %2491 = vmatprep.subr.bf16.mxu0 %v1359
    %2492 = vmatpush1.bf16.msra.mxu0 %v1358
    %2493 = vmatprep.subr.bf16.mxu0 %v1351
    %2494 = vmatpush1.bf16.msra.mxu0 %v1350
    %2495 = vmatprep.subr.bf16.mxu0 %v1343
    %2496 = vmatpush1.bf16.msra.mxu0 %v1342
    %2497 = vmatprep.subr.bf16.mxu0 %v1335
    %2498 = vmatpush1.bf16.msra.mxu0 %v1334
    %2499 = vmatprep.subr.bf16.mxu0 %v1327
    %2500 = vmatpush1.bf16.msra.mxu0 %v1326
    %2501 = vmatprep.subr.bf16.mxu0 %v1319
    %2502 = vmatpush1.bf16.msra.mxu0 %v1318
    %2503 = vmatprep.subr.bf16.mxu0 %v1311
    %2504 = vmatpush1.bf16.msra.mxu0 %v1310
    %2505 = vmatprep.subr.bf16.mxu0 %v1303
    %2506 = vmatpush1.bf16.msra.mxu0 %v1302
    %2507 = vmatprep.subr.bf16.mxu0 %v1423
    %2508 = vmatpush2.bf16.msra.mxu0 %v1422
    %2509 = vmatprep.subr.bf16.mxu0 %v1415
    %2510 = vmatpush2.bf16.msra.mxu0 %v1414
    %2511 = vmatprep.subr.bf16.mxu0 %v1407
    %2512 = vmatpush2.bf16.msra.mxu0 %v1406
    %2513 = vmatprep.subr.bf16.mxu0 %v1399
    %2514 = vmatpush2.bf16.msra.mxu0 %v1398
    %2515 = vmatprep.subr.bf16.mxu0 %v1391
    %2516 = vmatpush2.bf16.msra.mxu0 %v1390
    %2517 = vmatprep.subr.bf16.mxu0 %v1383
    %2518 = vmatpush2.bf16.msra.mxu0 %v1382
    %2519 = vmatprep.subr.bf16.mxu0 %v1375
    %2520 = vmatpush2.bf16.msra.mxu0 %v1374
    %2521 = vmatprep.subr.bf16.mxu0 %v1367
    %2522 = vmatpush2.bf16.msra.mxu0 %v1366
    %2523 = vmatprep.mubr.bf16.mxu0 %v2367
    %2524 = vmatmul.mubr.bf16.gmra.mxu0 %v2366
    %v2525 = vpop.f32.mrf.mxu0
    %v2526 = vadd.f32 0.0, %v2525
    %v2527 = vpop.f32.mrf.mxu0
    %v2528 = vadd.f32 0.0, %v2527
    %v2529 = vpop.f32.mrf.mxu0
    %v2530 = vpop.f32.mrf.mxu0
    %2531 = vdwg.mxu0
    %v2532 = vadd.f32 %v591, %v2403
    %v2533 = vadd.f32 %v593, %v2405
    %v2534 = vadd.f32 %v652, %v2444
    %v2535 = vadd.f32 %v654, %v2446
    %v2536 = vadd.f32 %v713, %v2485
    %v2537 = vadd.f32 %v715, %v2487
    %v2538 = vadd.f32 %v774, %v2526
    %v2539 = vadd.f32 %v776, %v2528
    %v2540 = vtanh.pop %v2532
    %v2541 = vtanh.pop %v2533
    %v2542 = vtanh.pop %v2534
    %v2543 = vtanh.pop %v2535
    %v2544 = vtanh.pop %v2536
    %v2545 = vtanh.pop %v2537
    %v2546 = vtanh.pop %v2538
    %v2547 = vtanh.pop %v2539
    %v2548 = vmul.f32 %v2540, 0.5
    %v2549 = vmul.f32 %v2541, 0.5
    %v2550 = vmul.f32 %v2542, 0.5
    %v2551 = vmul.f32 %v2543, 0.5
    %v2552 = vmul.f32 %v2544, 0.5
    %v2553 = vmul.f32 %v2545, 0.5
    %v2554 = vadd.f32 %v2548, 0.5
    %v2555 = vadd.f32 %v2549, 0.5
    %v2556 = vadd.f32 %v2550, 0.5
    %v2557 = vadd.f32 %v2551, 0.5
    %v2558 = vadd.f32 %v2552, 0.5
    %v2559 = vadd.f32 %v2553, 0.5
    %v2560 = vmul.f32 %v2556, %v2360
    %v2561 = vmul.f32 %v2557, %v2361
    %v2562 = vmul.f32 %v2554, %v2546
    %v2563 = vmul.f32 %v2555, %v2547
    %v2564 = vadd.f32 %v2560, %v2562
    %v2565 = vadd.f32 %v2561, %v2563
    %v2566 = vtanh.pop %v2564
    %v2567 = vtanh.pop %v2565
    %v2568 = vmul.f32 %v2558, %v2566
    %v2569 = vmul.f32 %v2559, %v2567
    %s2570 = smul.u32 256, 1
    %s2571 = sshll.u32 %s2570, 4
    %2572 = dma.done %s101, %s2571
    %v2573 = vld [vmem:[#allocation3] sm:$0xff]
    %v2574 = vld [vmem:[#allocation3 + $0x8] sm:$0xff]
    %v2575 = vld [vmem:[#allocation3 + $0x10] sm:$0xff]
    %v2576 = vld [vmem:[#allocation3 + $0x18] sm:$0xff]
    %v2577 = vld [vmem:[#allocation3 + $0x20] sm:$0xff]
    %v2578 = vld [vmem:[#allocation3 + $0x28] sm:$0xff]
    %v2579 = vld [vmem:[#allocation3 + $0x30] sm:$0xff]
    %v2580 = vld [vmem:[#allocation3 + $0x38] sm:$0xff]
    %v2581 = vld [vmem:[#allocation3 + $0x40] sm:$0xff]
    %v2582 = vld [vmem:[#allocation3 + $0x48] sm:$0xff]
    %v2583 = vld [vmem:[#allocation3 + $0x50] sm:$0xff]
    %v2584 = vld [vmem:[#allocation3 + $0x58] sm:$0xff]
    %v2585 = vld [vmem:[#allocation3 + $0x60] sm:$0xff]
    %v2586 = vld [vmem:[#allocation3 + $0x68] sm:$0xff]
    %v2587 = vld [vmem:[#allocation3 + $0x70] sm:$0xff]
    %v2588 = vld [vmem:[#allocation3 + $0x78] sm:$0xff]
    %v2589 = vld [vmem:[#allocation3 + $0x80] sm:$0xff]
    %v2590 = vld [vmem:[#allocation3 + $0x88] sm:$0xff]
    %v2591 = vld [vmem:[#allocation3 + $0x90] sm:$0xff]
    %v2592 = vld [vmem:[#allocation3 + $0x98] sm:$0xff]
    %v2593 = vld [vmem:[#allocation3 + $0xa0] sm:$0xff]
    %v2594 = vld [vmem:[#allocation3 + $0xa8] sm:$0xff]
    %v2595 = vld [vmem:[#allocation3 + $0xb0] sm:$0xff]
    %v2596 = vld [vmem:[#allocation3 + $0xb8] sm:$0xff]
    %v2597 = vld [vmem:[#allocation3 + $0xc0] sm:$0xff]
    %v2598 = vld [vmem:[#allocation3 + $0xc8] sm:$0xff]
    %v2599 = vld [vmem:[#allocation3 + $0xd0] sm:$0xff]
    %v2600 = vld [vmem:[#allocation3 + $0xd8] sm:$0xff]
    %v2601 = vld [vmem:[#allocation3 + $0xe0] sm:$0xff]
    %v2602 = vld [vmem:[#allocation3 + $0xe8] sm:$0xff]
    %v2603 = vld [vmem:[#allocation3 + $0xf0] sm:$0xff]
    %v2604 = vld [vmem:[#allocation3 + $0xf8] sm:$0xff]
    %v2605 = vld [vmem:[#allocation13] sm:$0x1]
    %v2607 = vlaneseq
    %v2608 = vshrl.u32 %v2607, 7
    %v2609 = vsub.s32 0, %v2608
    %v2610 = vrot.slane %v2605, %v2609
    %2612 = vmatprep.subr.mxu0 0.0
    %2613 = vmatpush1.msra.mxu0 %v2588
    %2614 = vmatprep.subr.mxu0 0.0
    %2615 = vmatpush1.msra.mxu0 %v2587
    %2616 = vmatprep.subr.mxu0 0.0
    %2617 = vmatpush1.msra.mxu0 %v2586
    %2618 = vmatprep.subr.mxu0 0.0
    %2619 = vmatpush1.msra.mxu0 %v2585
    %2620 = vmatprep.subr.mxu0 0.0
    %2621 = vmatpush1.msra.mxu0 %v2584
    %2622 = vmatprep.subr.mxu0 0.0
    %2623 = vmatpush1.msra.mxu0 %v2583
    %2624 = vmatprep.subr.mxu0 0.0
    %2625 = vmatpush1.msra.mxu0 %v2582
    %2626 = vmatprep.subr.mxu0 0.0
    %2627 = vmatpush1.msra.mxu0 %v2581
    %2628 = vmatprep.subr.mxu0 0.0
    %2629 = vmatpush1.msra.mxu0 %v2580
    %2630 = vmatprep.subr.mxu0 0.0
    %2631 = vmatpush1.msra.mxu0 %v2579
    %2632 = vmatprep.subr.mxu0 0.0
    %2633 = vmatpush1.msra.mxu0 %v2578
    %2634 = vmatprep.subr.mxu0 0.0
    %2635 = vmatpush1.msra.mxu0 %v2577
    %2636 = vmatprep.subr.mxu0 0.0
    %2637 = vmatpush1.msra.mxu0 %v2576
    %2638 = vmatprep.subr.mxu0 0.0
    %2639 = vmatpush1.msra.mxu0 %v2575
    %2640 = vmatprep.subr.mxu0 0.0
    %2641 = vmatpush1.msra.mxu0 %v2574
    %2642 = vmatprep.subr.mxu0 0.0
    %2643 = vmatpush1.msra.mxu0 %v2573
    %2644 = vmatprep.subr.mxu0 0.0
    %2645 = vmatpush2.msra.mxu0 %v2604
    %2646 = vmatprep.subr.mxu0 0.0
    %2647 = vmatpush2.msra.mxu0 %v2603
    %2648 = vmatprep.subr.mxu0 0.0
    %2649 = vmatpush2.msra.mxu0 %v2602
    %2650 = vmatprep.subr.mxu0 0.0
    %2651 = vmatpush2.msra.mxu0 %v2601
    %2652 = vmatprep.subr.mxu0 0.0
    %2653 = vmatpush2.msra.mxu0 %v2600
    %2654 = vmatprep.subr.mxu0 0.0
    %2655 = vmatpush2.msra.mxu0 %v2599
    %2656 = vmatprep.subr.mxu0 0.0
    %2657 = vmatpush2.msra.mxu0 %v2598
    %2658 = vmatprep.subr.mxu0 0.0
    %2659 = vmatpush2.msra.mxu0 %v2597
    %2660 = vmatprep.subr.mxu0 0.0
    %2661 = vmatpush2.msra.mxu0 %v2596
    %2662 = vmatprep.subr.mxu0 0.0
    %2663 = vmatpush2.msra.mxu0 %v2595
    %2664 = vmatprep.subr.mxu0 0.0
    %2665 = vmatpush2.msra.mxu0 %v2594
    %2666 = vmatprep.subr.mxu0 0.0
    %2667 = vmatpush2.msra.mxu0 %v2593
    %2668 = vmatprep.subr.mxu0 0.0
    %2669 = vmatpush2.msra.mxu0 %v2592
    %2670 = vmatprep.subr.mxu0 0.0
    %2671 = vmatpush2.msra.mxu0 %v2591
    %2672 = vmatprep.subr.mxu0 0.0
    %2673 = vmatpush2.msra.mxu0 %v2590
    %2674 = vmatprep.subr.mxu0 0.0
    %2675 = vmatpush2.msra.mxu0 %v2589
    %2676 = vmatprep.mubr.f32.mxu0 %v2569
    %2677 = vmatmul.mubr.f32.gmra.mxu0 %v2568
    %v2678 = vpop.f32.mrf.mxu0
    %v2679 = vadd.f32 %v2610, %v2678
    %v2680 = vpop.f32.mrf.mxu0
    %2681 = vdwg.mxu0
    %vm2682 = vcmp.gt.f32.partialorder %v2679, 0.0
    %v2683 = vmul.f32 %v2679, 0.01
    %v2684 = vsel %vm2682, %v2679, %v2683
    %s2685 = sshll.u32 %s2570, 4
    %2686 = dma.done %s113, %s2685
    %s2687 = smul.u32 128, 1
    %s2688 = sshll.u32 %s2687, 4
    %2689 = dma.done %s125, %s2688
    %v2690 = vld [vmem:[#allocation4] sm:$0xff]
    %v2691 = vld [vmem:[#allocation4 + $0x8] sm:$0xff]
    %v2692 = vld [vmem:[#allocation4 + $0x10] sm:$0xff]
    %v2693 = vld [vmem:[#allocation4 + $0x18] sm:$0xff]
    %v2694 = vld [vmem:[#allocation4 + $0x20] sm:$0xff]
    %v2695 = vld [vmem:[#allocation4 + $0x28] sm:$0xff]
    %v2696 = vld [vmem:[#allocation4 + $0x30] sm:$0xff]
    %v2697 = vld [vmem:[#allocation4 + $0x38] sm:$0xff]
    %v2698 = vld [vmem:[#allocation4 + $0x40] sm:$0xff]
    %v2699 = vld [vmem:[#allocation4 + $0x48] sm:$0xff]
    %v2700 = vld [vmem:[#allocation4 + $0x50] sm:$0xff]
    %v2701 = vld [vmem:[#allocation4 + $0x58] sm:$0xff]
    %v2702 = vld [vmem:[#allocation4 + $0x60] sm:$0xff]
    %v2703 = vld [vmem:[#allocation4 + $0x68] sm:$0xff]
    %v2704 = vld [vmem:[#allocation4 + $0x70] sm:$0xff]
    %v2705 = vld [vmem:[#allocation4 + $0x78] sm:$0xff]
    %v2706 = vld [vmem:[#allocation4 + $0x80] sm:$0xff]
    %v2707 = vld [vmem:[#allocation4 + $0x88] sm:$0xff]
    %v2708 = vld [vmem:[#allocation4 + $0x90] sm:$0xff]
    %v2709 = vld [vmem:[#allocation4 + $0x98] sm:$0xff]
    %v2710 = vld [vmem:[#allocation4 + $0xa0] sm:$0xff]
    %v2711 = vld [vmem:[#allocation4 + $0xa8] sm:$0xff]
    %v2712 = vld [vmem:[#allocation4 + $0xb0] sm:$0xff]
    %v2713 = vld [vmem:[#allocation4 + $0xb8] sm:$0xff]
    %v2714 = vld [vmem:[#allocation4 + $0xc0] sm:$0xff]
    %v2715 = vld [vmem:[#allocation4 + $0xc8] sm:$0xff]
    %v2716 = vld [vmem:[#allocation4 + $0xd0] sm:$0xff]
    %v2717 = vld [vmem:[#allocation4 + $0xd8] sm:$0xff]
    %v2718 = vld [vmem:[#allocation4 + $0xe0] sm:$0xff]
    %v2719 = vld [vmem:[#allocation4 + $0xe8] sm:$0xff]
    %v2720 = vld [vmem:[#allocation4 + $0xf0] sm:$0xff]
    %v2721 = vld [vmem:[#allocation4 + $0xf8] sm:$0xff]
    %v2722 = vld [vmem:[#allocation5] sm:$0xff]
    %v2723 = vld [vmem:[#allocation5 + $0x8] sm:$0xff]
    %v2724 = vld [vmem:[#allocation5 + $0x10] sm:$0xff]
    %v2725 = vld [vmem:[#allocation5 + $0x18] sm:$0xff]
    %v2726 = vld [vmem:[#allocation5 + $0x20] sm:$0xff]
    %v2727 = vld [vmem:[#allocation5 + $0x28] sm:$0xff]
    %v2728 = vld [vmem:[#allocation5 + $0x30] sm:$0xff]
    %v2729 = vld [vmem:[#allocation5 + $0x38] sm:$0xff]
    %v2730 = vld [vmem:[#allocation5 + $0x40] sm:$0xff]
    %v2731 = vld [vmem:[#allocation5 + $0x48] sm:$0xff]
    %v2732 = vld [vmem:[#allocation5 + $0x50] sm:$0xff]
    %v2733 = vld [vmem:[#allocation5 + $0x58] sm:$0xff]
    %v2734 = vld [vmem:[#allocation5 + $0x60] sm:$0xff]
    %v2735 = vld [vmem:[#allocation5 + $0x68] sm:$0xff]
    %v2736 = vld [vmem:[#allocation5 + $0x70] sm:$0xff]
    %v2737 = vld [vmem:[#allocation5 + $0x78] sm:$0xff]
    %2738 = vmatprep.subr.mxu0 0.0
    %2739 = vmatpush1.msra.mxu0 %v2737
    %2740 = vmatprep.subr.mxu0 0.0
    %2741 = vmatpush1.msra.mxu0 %v2736
    %2742 = vmatprep.subr.mxu0 0.0
    %2743 = vmatpush1.msra.mxu0 %v2735
    %2744 = vmatprep.subr.mxu0 0.0
    %2745 = vmatpush1.msra.mxu0 %v2734
    %2746 = vmatprep.subr.mxu0 0.0
    %2747 = vmatpush1.msra.mxu0 %v2733
    %2748 = vmatprep.subr.mxu0 0.0
    %2749 = vmatpush1.msra.mxu0 %v2732
    %2750 = vmatprep.subr.mxu0 0.0
    %2751 = vmatpush1.msra.mxu0 %v2731
    %2752 = vmatprep.subr.mxu0 0.0
    %2753 = vmatpush1.msra.mxu0 %v2730
    %2754 = vmatprep.subr.mxu0 0.0
    %2755 = vmatpush1.msra.mxu0 %v2729
    %2756 = vmatprep.subr.mxu0 0.0
    %2757 = vmatpush1.msra.mxu0 %v2728
    %2758 = vmatprep.subr.mxu0 0.0
    %2759 = vmatpush1.msra.mxu0 %v2727
    %2760 = vmatprep.subr.mxu0 0.0
    %2761 = vmatpush1.msra.mxu0 %v2726
    %2762 = vmatprep.subr.mxu0 0.0
    %2763 = vmatpush1.msra.mxu0 %v2725
    %2764 = vmatprep.subr.mxu0 0.0
    %2765 = vmatpush1.msra.mxu0 %v2724
    %2766 = vmatprep.subr.mxu0 0.0
    %2767 = vmatpush1.msra.mxu0 %v2723
    %2768 = vmatprep.subr.mxu0 0.0
    %2769 = vmatpush1.msra.mxu0 %v2722
    %2770 = vmatprep.subr.mxu0 0.0
    %2771 = vmatpush2.msra.mxu0 0.0
    %2772 = vmatprep.subr.mxu0 0.0
    %2773 = vmatpush2.msra.mxu0 0.0
    %2774 = vmatprep.subr.mxu0 0.0
    %2775 = vmatpush2.msra.mxu0 0.0
    %2776 = vmatprep.subr.mxu0 0.0
    %2777 = vmatpush2.msra.mxu0 0.0
    %2778 = vmatprep.subr.mxu0 0.0
    %2779 = vmatpush2.msra.mxu0 0.0
    %2780 = vmatprep.subr.mxu0 0.0
    %2781 = vmatpush2.msra.mxu0 0.0
    %2782 = vmatprep.subr.mxu0 0.0
    %2783 = vmatpush2.msra.mxu0 0.0
    %2784 = vmatprep.subr.mxu0 0.0
    %2785 = vmatpush2.msra.mxu0 0.0
    %2786 = vmatprep.subr.mxu0 0.0
    %2787 = vmatpush2.msra.mxu0 0.0
    %2788 = vmatprep.subr.mxu0 0.0
    %2789 = vmatpush2.msra.mxu0 0.0
    %2790 = vmatprep.subr.mxu0 0.0
    %2791 = vmatpush2.msra.mxu0 0.0
    %2792 = vmatprep.subr.mxu0 0.0
    %2793 = vmatpush2.msra.mxu0 0.0
    %2794 = vmatprep.subr.mxu0 0.0
    %2795 = vmatpush2.msra.mxu0 0.0
    %2796 = vmatprep.subr.mxu0 0.0
    %2797 = vmatpush2.msra.mxu0 0.0
    %2798 = vmatprep.subr.mxu0 0.0
    %2799 = vmatpush2.msra.mxu0 0.0
    %2800 = vmatprep.subr.mxu0 0.0
    %2801 = vmatpush2.msra.mxu0 0.0
    %2802 = vmatprep.mubr.f32.mxu0 0.0
    %2803 = vmatmul.mubr.f32.gmra.mxu0 %v2684
    %v2804 = vpop.f32.mrf.mxu0
    %v2805 = vadd.f32 0.0, %v2804
    %v2806 = vpop.f32.mrf.mxu0
    %2807 = vdwg.mxu0
    %2808 = vmatprep.subr.mxu0 0.0
    %2809 = vmatpush1.msra.mxu0 %v2705
    %2810 = vmatprep.subr.mxu0 0.0
    %2811 = vmatpush1.msra.mxu0 %v2704
    %2812 = vmatprep.subr.mxu0 0.0
    %2813 = vmatpush1.msra.mxu0 %v2703
    %2814 = vmatprep.subr.mxu0 0.0
    %2815 = vmatpush1.msra.mxu0 %v2702
    %2816 = vmatprep.subr.mxu0 0.0
    %2817 = vmatpush1.msra.mxu0 %v2701
    %2818 = vmatprep.subr.mxu0 0.0
    %2819 = vmatpush1.msra.mxu0 %v2700
    %2820 = vmatprep.subr.mxu0 0.0
    %2821 = vmatpush1.msra.mxu0 %v2699
    %2822 = vmatprep.subr.mxu0 0.0
    %2823 = vmatpush1.msra.mxu0 %v2698
    %2824 = vmatprep.subr.mxu0 0.0
    %2825 = vmatpush1.msra.mxu0 %v2697
    %2826 = vmatprep.subr.mxu0 0.0
    %2827 = vmatpush1.msra.mxu0 %v2696
    %2828 = vmatprep.subr.mxu0 0.0
    %2829 = vmatpush1.msra.mxu0 %v2695
    %2830 = vmatprep.subr.mxu0 0.0
    %2831 = vmatpush1.msra.mxu0 %v2694
    %2832 = vmatprep.subr.mxu0 0.0
    %2833 = vmatpush1.msra.mxu0 %v2693
    %2834 = vmatprep.subr.mxu0 0.0
    %2835 = vmatpush1.msra.mxu0 %v2692
    %2836 = vmatprep.subr.mxu0 0.0
    %2837 = vmatpush1.msra.mxu0 %v2691
    %2838 = vmatprep.subr.mxu0 0.0
    %2839 = vmatpush1.msra.mxu0 %v2690
    %2840 = vmatprep.subr.mxu0 0.0
    %2841 = vmatpush2.msra.mxu0 %v2721
    %2842 = vmatprep.subr.mxu0 0.0
    %2843 = vmatpush2.msra.mxu0 %v2720
    %2844 = vmatprep.subr.mxu0 0.0
    %2845 = vmatpush2.msra.mxu0 %v2719
    %2846 = vmatprep.subr.mxu0 0.0
    %2847 = vmatpush2.msra.mxu0 %v2718
    %2848 = vmatprep.subr.mxu0 0.0
    %2849 = vmatpush2.msra.mxu0 %v2717
    %2850 = vmatprep.subr.mxu0 0.0
    %2851 = vmatpush2.msra.mxu0 %v2716
    %2852 = vmatprep.subr.mxu0 0.0
    %2853 = vmatpush2.msra.mxu0 %v2715
    %2854 = vmatprep.subr.mxu0 0.0
    %2855 = vmatpush2.msra.mxu0 %v2714
    %2856 = vmatprep.subr.mxu0 0.0
    %2857 = vmatpush2.msra.mxu0 %v2713
    %2858 = vmatprep.subr.mxu0 0.0
    %2859 = vmatpush2.msra.mxu0 %v2712
    %2860 = vmatprep.subr.mxu0 0.0
    %2861 = vmatpush2.msra.mxu0 %v2711
    %2862 = vmatprep.subr.mxu0 0.0
    %2863 = vmatpush2.msra.mxu0 %v2710
    %2864 = vmatprep.subr.mxu0 0.0
    %2865 = vmatpush2.msra.mxu0 %v2709
    %2866 = vmatprep.subr.mxu0 0.0
    %2867 = vmatpush2.msra.mxu0 %v2708
    %2868 = vmatprep.subr.mxu0 0.0
    %2869 = vmatpush2.msra.mxu0 %v2707
    %2870 = vmatprep.subr.mxu0 0.0
    %2871 = vmatpush2.msra.mxu0 %v2706
    %2872 = vmatprep.mubr.f32.mxu0 %v338
    %2873 = vmatmul.mubr.f32.gmra.mxu0 %v337
    %v2874 = vpop.f32.mrf.mxu0
    %v2875 = vadd.f32 %v2805, %v2874
    %v2876 = vpop.f32.mrf.mxu0
    %2877 = vdwg.mxu0
    %v2878 = vld [vmem:[%s10] sm:$0x1]
    %v2880 = vlaneseq
    %v2881 = vshrl.u32 %v2880, 7
    %v2882 = vsub.s32 0, %v2881
    %v2883 = vrot.slane %v2878, %v2882
    %v2885 = vadd.f32 %v2875, %v2883
    %vm2886 = vcmp.gt.f32.partialorder %v2885, 0.0
    %v2887 = vmul.f32 %v2885, 0.01
    %v2888 = vsel %vm2886, %v2885, %v2887
    %v2889 = vld [vmem:[%s11] sm:$0x1]
    %v2891 = vlaneseq
    %v2892 = vshrl.u32 %v2891, 7
    %v2893 = vsub.s32 0, %v2892
    %v2894 = vrot.slane %v2889, %v2893
    %v2896 = vmul.f32 %v2888, %v2894
    %2897 = vadd.xlane.f32.xlu0 %v2896
    %v2898 = vpop.xlane.xlu0 %2897
    %v2899 = vld [vmem:[#allocation7] sm:$0x1]
    %v2901 = vlaneseq
    %v2902 = vshrl.u32 %v2901, 7
    %v2903 = vsub.s32 0, %v2902
    %v2904 = vrot.slane %v2899, %v2903
    %v2906 = vadd.f32 %v2898, %v2904
    %v2907 = vxor.u32 %v2906, 2147483648
    %v2908 = vmul.f32 %v2907, 1.442695
    %v2909 = vpow.pop %v2908
    %v2910 = vadd.f32 %v2909, 1.0
    %v2911 = vrcp.pop %v2910
    %v2912 = vmul.f32 1.0, %v2911
    %vm2913 = vcmask 7168
    %2914 = vst.msk [vmem:[%s13] sm:$0xff] %vm2913, %v2912
    // Predicated region
    $region100: #{tpu_custom_call.1} parent=1 // pred_check
      _
    $region101: #{tpu_custom_call.1} parent=1 // pred_check_branch
      %2916 = sbr.rel (0) target = $region103
    $region102: #{tpu_custom_call.1} parent=1 // pred_region
      _
    $region103: #{tpu_custom_call.1} parent=1 // pred_fallthru
      _
    // Predicated region
    $region104: #{tpu_custom_call.1} parent=1 // pred_check
      _
    $region105: #{tpu_custom_call.1} parent=1 // pred_check_branch
      %2918 = sbr.rel (0) target = $region107
    $region106: #{tpu_custom_call.1} parent=1 // pred_region
      _
    $region107: #{tpu_custom_call.1} parent=1 // pred_fallthru
      _
    %2919 = vsyncpa [#allocation9], 1
    %2920 = vsyncpa [#allocation11], 1
    %2921 = vsyncpa [#allocation14], 1
  %2922 = vsyncmov [#allocation6]
  %s2923 = vpop.sfrf %2922
  %p2924 = scmp.eq.s32.totalorder %s2923, 0
  %p2925 = pneg %p2924
  %2927 = shalt.err (%p2925)
  %s2928 = scalar_lea.sflag [#allocation6], 1
  %2929 = vsyncmov %s2928
  %s2930 = vpop.sfrf %2929
  %p2931 = scmp.eq.s32.totalorder %s2930, 0
  %p2932 = pneg %p2931
  %2934 = shalt.err (%p2932)
  %s2935 = scalar_lea.sflag [#allocation6], 2
  %2936 = vsyncmov %s2935
  %s2937 = vpop.sfrf %2936
  %p2938 = scmp.eq.s32.totalorder %s2937, 0
  %p2939 = pneg %p2938
  %2941 = shalt.err (%p2939)
  %s2942 = scalar_lea.sflag [#allocation6], 3
  %2943 = vsyncmov %s2942
  %s2944 = vpop.sfrf %2943
  %p2945 = scmp.eq.s32.totalorder %s2944, 0
  %p2946 = pneg %p2945
  %2948 = shalt.err (%p2946)

</llo_original>
